<compile_context>
chip_gen: v7x
topology: tpu7x:2x2x1
jax: 0.10.0
libtpu: 0.0.40
codegen_flags: <defaults>
</compile_context>

<pallas_src>
import jax
import jax.numpy as jnp
from jax.experimental import pallas as pl
from jax.experimental.pallas import tpu as pltpu

IN_DIM = 22        # VAE input/output feature dim
H_DIM = 512        # hidden dim
Z_DIM = 8          # latent dim
IN_PAD = 128       # lane-padded input/output dim
Z_PAD = 128        # lane-padded latent dim
BATCH = 8          # example batch


def _round_up(x, m):
    return (x + m - 1) // m * m


# ----------------------------------------------------------------------------
# Pallas kernel: whole VAE forward fused (9 MXU matmuls + ReLUs + reparam).
#   x_ref     : (bm, 128) bf16   x in lanes 0..21
#   eps_ref   : (bm, 128) bf16   eps in lanes 8..15 (aligned with logvar lanes)
#   w_in_ref  : (2, 128, 512) bf16  [0]=enc1 (22 live rows)
#                                   [1]=dec1 duplicated into rows 0..7 and 8..15
#   w_hid_ref : (6, 512, 512) bf16  [0..2]=enc2..4, [3..5]=dec2..4
#   w_out_ref : (2, 512, 128) bf16  [0]=[wmu|wlv] packed, [1]=dec5 (22 live cols)
#   b_ref     : (10, 512)     f32   rows 0..3 enc, 4=[bmu|blv], 5..8 dec, 9=dec5
#   out_ref   : (bm, 256)     f32   lanes 0..127 recon, 128..255 [mu|logvar]
# ----------------------------------------------------------------------------
def vae_kernel(x_ref, eps_ref, w_in_ref, w_hid_ref, w_out_ref, b_ref, out_ref):
    def lin(h, w, b):
        # bf16 x bf16 matmul on the MXU, f32 accumulation; bias add in f32.
        return jnp.dot(h.astype(jnp.bfloat16), w,
                       preferred_element_type=jnp.float32) + b

    # ----- encoder: 4 x (Linear + ReLU) -----
    h = jnp.maximum(lin(x_ref[...], w_in_ref[0], b_ref[0:1, :]), 0.0)
    h = jnp.maximum(lin(h, w_hid_ref[0], b_ref[1:2, :]), 0.0)
    h = jnp.maximum(lin(h, w_hid_ref[1], b_ref[2:3, :]), 0.0)
    h = jnp.maximum(lin(h, w_hid_ref[2], b_ref[3:4, :]), 0.0)

    # ----- bottleneck: one matmul -> [mu | logvar | 0 ...] along the lane axis
    mlv = lin(h, w_out_ref[0], b_ref[4:5, :Z_PAD])

    # ----- reparameterize (no lane roll) -----
    # eps is pre-placed on lanes Z_DIM..2*Z_DIM-1, i.e. aligned with logvar.
    # v = [mu | exp(0.5*logvar)*eps | 0 ...]; exp() on any other lane is
    # discarded by the select, so no inf/NaN can leak in from padding lanes.
    lane = jax.lax.broadcasted_iota(jnp.int32, mlv.shape, 1)
    std_masked = jnp.where((lane >= Z_DIM) & (lane < 2 * Z_DIM),
                           jnp.exp(0.5 * mlv), 0.0)
    v = jnp.where(lane < Z_DIM, mlv, 0.0) + std_masked * eps_ref[...]

    # ----- decoder: w_in_ref[1] carries Wdec1 in rows 0..7 AND 8..15, so
    # v @ w_in_ref[1] == (mu + std*eps) @ Wdec1 == z @ Wdec1. -----
    d = jnp.maximum(lin(v, w_in_ref[1], b_ref[5:6, :]), 0.0)
    d = jnp.maximum(lin(d, w_hid_ref[3], b_ref[6:7, :]), 0.0)
    d = jnp.maximum(lin(d, w_hid_ref[4], b_ref[7:8, :]), 0.0)
    d = jnp.maximum(lin(d, w_hid_ref[5], b_ref[8:9, :]), 0.0)
    recon = lin(d, w_out_ref[1], b_ref[9:10, :IN_PAD])

    # single lane-dense output slab: [recon | mu,logvar]
    out_ref[:, :IN_PAD] = recon
    out_ref[:, IN_PAD:] = mlv


# ----------------------------------------------------------------------------
# Parameter construction (kaiming-uniform like the PyTorch module's init).
# Weights stored as (in_features, out_features) so y = x @ W + b.
# ----------------------------------------------------------------------------
def _kaiming_uniform(key, fan_in, fan_out):
    bound = jnp.sqrt(6.0 / fan_in)
    return jax.random.uniform(key, (fan_in, fan_out), jnp.float32, -bound, bound)


def _bias_default(key, fan_in, fan_out):
    bound = 1.0 / jnp.sqrt(fan_in)
    return jax.random.uniform(key, (fan_out,), jnp.float32, -bound, bound)


def make_params(key):
    dims = [
        (IN_DIM, H_DIM), (H_DIM, H_DIM), (H_DIM, H_DIM), (H_DIM, H_DIM),  # encoder
        (H_DIM, Z_DIM), (H_DIM, Z_DIM),                                   # fc1, fc2
        (Z_DIM, H_DIM), (H_DIM, H_DIM), (H_DIM, H_DIM), (H_DIM, H_DIM),   # decoder
        (H_DIM, IN_DIM),
    ]
    params = []
    for i, (fi, fo) in enumerate(dims):
        kw, kb = jax.random.split(jax.random.fold_in(key, i))
        params.append((_kaiming_uniform(kw, fi, fo), _bias_default(kb, fi, fo)))
    return params


# ----------------------------------------------------------------------------
# One-time packing: pad, quantize to bf16, stack 11 layers into 4 arrays.
# Runs ONCE (hoisted out of the per-call forward).
# ----------------------------------------------------------------------------
def pack_params(params):
    (we1, be1), (we2, be2), (we3, be3), (we4, be4), \
        (wmu, bmu), (wlv, blv), \
        (wd1, bd1), (wd2, bd2), (wd3, bd3), (wd4, bd4), (wd5, bd5) = params

    w_enc1 = jnp.zeros((IN_PAD, H_DIM), jnp.float32).at[:IN_DIM, :].set(we1)
    # decoder-1 weight duplicated: rows 0..7 hit by mu, rows 8..15 by std*eps.
    w_dec1 = (jnp.zeros((Z_PAD, H_DIM), jnp.float32)
              .at[:Z_DIM, :].set(wd1)
              .at[Z_DIM:2 * Z_DIM, :].set(wd1))
    w_in = jnp.stack([w_enc1, w_dec1]).astype(jnp.bfloat16)

    w_hid = jnp.stack([we2, we3, we4, wd2, wd3, wd4]).astype(jnp.bfloat16)

    w_mlv = (jnp.zeros((H_DIM, Z_PAD), jnp.float32)
             .at[:, :Z_DIM].set(wmu)
             .at[:, Z_DIM:2 * Z_DIM].set(wlv))
    w_dec5 = jnp.zeros((H_DIM, IN_PAD), jnp.float32).at[:, :IN_DIM].set(wd5)
    w_out = jnp.stack([w_mlv, w_dec5]).astype(jnp.bfloat16)

    b_all = jnp.zeros((10, H_DIM), jnp.float32)
    for i, bias in enumerate([be1, be2, be3, be4]):
        b_all = b_all.at[i, :].set(bias)
    b_all = b_all.at[4, :Z_DIM].set(bmu).at[4, Z_DIM:2 * Z_DIM].set(blv)
    for i, bias in enumerate([bd1, bd2, bd3, bd4]):
        b_all = b_all.at[5 + i, :].set(bias)
    b_all = b_all.at[9, :IN_DIM].set(bd5)
    return w_in, w_hid, w_out, b_all


# ----------------------------------------------------------------------------
# BlockSpec helpers / wrapper.
# ----------------------------------------------------------------------------
def _resident_spec(shape):
    """Weight BlockSpec: constant block index; single-buffered if supported."""
    idx = lambda i: (0,) * len(shape)
    try:
        return pl.BlockSpec(shape, idx, pipeline_mode=pl.Buffered(1))
    except (AttributeError, TypeError):
        return pl.BlockSpec(shape, idx)


def _batch_tile(b):
    # Large batches: big tiles for full MXU occupancy and grid >= 2;
    # small batches: pad to the bf16 sublane multiple (16 rows).
    if b >= 1024:
        return 512
    if b >= 256:
        return 256
    return _round_up(b, 16)


@jax.jit
def vae_forward(x, eps, packed):
    w_in, w_hid, w_out, b_all = packed
    b = x.shape[0]
    bm = _batch_tile(b)
    bp = _round_up(b, bm)

    # Pad + cast activations to bf16; eps goes on the logvar lanes (8..15).
    x_p = jnp.zeros((bp, IN_PAD), jnp.bfloat16).at[:b, :IN_DIM].set(
        x.astype(jnp.bfloat16))
    eps_p = jnp.zeros((bp, Z_PAD), jnp.bfloat16).at[:b, Z_DIM:2 * Z_DIM].set(
        eps.astype(jnp.bfloat16))

    slab = pl.pallas_call(
        vae_kernel,
        out_shape=jax.ShapeDtypeStruct((bp, 2 * IN_PAD), jnp.float32),
        grid_spec=pltpu.PrefetchScalarGridSpec(
            num_scalar_prefetch=0,
            grid=(bp // bm,),
            in_specs=[
                pl.BlockSpec((bm, IN_PAD), lambda i: (i, 0)),   # x tile
                pl.BlockSpec((bm, Z_PAD), lambda i: (i, 0)),    # eps tile
                # weights/biases: constant block index -> fetched once,
                # kept VMEM-resident, single-buffered.
                _resident_spec(w_in.shape),
                _resident_spec(w_hid.shape),
                _resident_spec(w_out.shape),
                _resident_spec(b_all.shape),
            ],
            out_specs=pl.BlockSpec((bm, 2 * IN_PAD), lambda i: (i, 0)),
        ),
        compiler_params=pltpu.CompilerParams(
            # TODO(synk): on v7x use CORE_PARALLEL / pl.core_map to actually
            # split the batch grid across both TensorCores.
            dimension_semantics=("parallel",),
            vmem_limit_bytes=32 << 20,
        ),
    )(x_p, eps_p, w_in, w_hid, w_out, b_all)

    out = slab[:b, :IN_DIM]
    mu = slab[:b, IN_PAD:IN_PAD + Z_DIM]
    logvar = slab[:b, IN_PAD + Z_DIM:IN_PAD + 2 * Z_DIM]
    return out, mu, logvar


# ----------------------------------------------------------------------------
# Pure-JAX reference (mirrors the kernel's bf16 weight/activation numerics,
# including the split mu / std*eps contribution into the first decoder layer).
# ----------------------------------------------------------------------------
def vae_reference(x, eps, params):
    def lin(h, w, b):
        return jnp.dot(h.astype(jnp.bfloat16), w.astype(jnp.bfloat16),
                       preferred_element_type=jnp.float32) + b

    h = x
    for i in range(4):
        w, b = params[i]
        h = jnp.maximum(lin(h, w, b), 0.0)
    mu = lin(h, *params[4])
    logvar = lin(h, *params[5])

    eps_b = eps.astype(jnp.bfloat16).astype(jnp.float32)
    std_eps = jnp.exp(0.5 * logvar) * eps_b

    wd1, bd1 = params[6]
    d = (jnp.dot(mu.astype(jnp.bfloat16), wd1.astype(jnp.bfloat16),
                 preferred_element_type=jnp.float32)
         + jnp.dot(std_eps.astype(jnp.bfloat16), wd1.astype(jnp.bfloat16),
                   preferred_element_type=jnp.float32) + bd1)
    d = jnp.maximum(d, 0.0)
    for i in range(7, 10):
        w, b = params[i]
        d = jnp.maximum(lin(d, w, b), 0.0)
    out = lin(d, *params[10])
    return out, mu, logvar


if __name__ == "__main__":
    key = jax.random.PRNGKey(0)
    k_param, k_x, k_eps = jax.random.split(key, 3)

    params = make_params(k_param)
    packed = pack_params(params)          # one-time pad / bf16-quantize / stack
    jax.block_until_ready(packed)

    x = jax.random.normal(k_x, (BATCH, IN_DIM), jnp.float32)
    # torch.randn(*mu.size()) is sampled outside the compute graph in the
    # reference module; mirrored by sampling eps host-side and feeding it in.
    eps = jax.random.normal(k_eps, (BATCH, Z_DIM), jnp.float32)

    out, mu, logvar = vae_forward(x, eps, packed)
    jax.block_until_ready((out, mu, logvar))

    ref_out, ref_mu, ref_lv = vae_reference(x, eps, params)
    assert out.shape == (BATCH, IN_DIM)
    assert mu.shape == (BATCH, Z_DIM) and logvar.shape == (BATCH, Z_DIM)
    assert jnp.allclose(mu, ref_mu, atol=1e-2, rtol=1e-2)
    assert jnp.allclose(logvar, ref_lv, atol=1e-2, rtol=1e-2)
    assert jnp.allclose(out, ref_out, atol=2e-2, rtol=2e-2)

    print("KERNEL_OK")
</pallas_src>

<mosaic_0001>
module attributes {stable_mosaic.version = 11 : i64} {
  func.func @vae_kernel(%arg0: i32, %arg1: memref<16x128xbf16, #tpu.memory_space<vmem>>, %arg2: memref<16x128xbf16, #tpu.memory_space<vmem>>, %arg3: memref<2x128x512xbf16, #tpu.memory_space<vmem>>, %arg4: memref<6x512x512xbf16, #tpu.memory_space<vmem>>, %arg5: memref<2x512x128xbf16, #tpu.memory_space<vmem>>, %arg6: memref<10x512xf32, #tpu.memory_space<vmem>>, %arg7: memref<16x256xf32, #tpu.memory_space<vmem>>) attributes {dimension_semantics = [#tpu.dimension_semantics<parallel>], iteration_bounds = array<i64: 1>, scalar_prefetch = 0 : i64, scratch_operands = 0 : i64, tpu.core_type = #tpu.core_type<tc>, window_params = [{transform_indices = @transform_0, window_bounds = array<i64: 16, 128>}, {transform_indices = @transform_1, window_bounds = array<i64: 16, 128>}, {pipeline_mode = #tpu.pipeline_mode<synchronous>, transform_indices = @transform_2, window_bounds = array<i64: 2, 128, 512>}, {pipeline_mode = #tpu.pipeline_mode<synchronous>, transform_indices = @transform_3, window_bounds = array<i64: 6, 512, 512>}, {pipeline_mode = #tpu.pipeline_mode<synchronous>, transform_indices = @transform_4, window_bounds = array<i64: 2, 512, 128>}, {pipeline_mode = #tpu.pipeline_mode<synchronous>, transform_indices = @transform_5, window_bounds = array<i64: 10, 512>}, {transform_indices = @transform_6, window_bounds = array<i64: 16, 256>}]} {
    %c0 = arith.constant 0 : index
    %c0_0 = arith.constant 0 : index
    %0 = vector.load %arg1[%c0, %c0_0] : memref<16x128xbf16, #tpu.memory_space<vmem>>, vector<16x128xbf16>
    %c0_1 = arith.constant 0 : index
    %c0_2 = arith.constant 0 : index
    %c0_3 = arith.constant 0 : index
    %1 = vector.load %arg3[%c0_1, %c0_2, %c0_3] : memref<2x128x512xbf16, #tpu.memory_space<vmem>>, vector<1x128x512xbf16>
    %2 = vector.shape_cast %1 : vector<1x128x512xbf16> to vector<128x512xbf16>
    %c0_4 = arith.constant 0 : index
    %c0_5 = arith.constant 0 : index
    %3 = vector.load %arg6[%c0_4, %c0_5] : memref<10x512xf32, #tpu.memory_space<vmem>>, vector<1x512xf32>
    %cst = arith.constant dense<0.000000e+00> : vector<16x512xf32>
    %4 = tpu.matmul %0, %2, %cst {dimension_numbers = #tpu.dot_dimension_numbers<[1], [0], [0], [1], [0, 0, 1, 1], [], []>} : vector<16x128xbf16>, vector<128x512xbf16>, vector<16x512xf32> -> vector<16x512xf32>
    %5 = vector.broadcast %3 : vector<1x512xf32> to vector<16x512xf32>
    %6 = arith.addf %4, %5 : vector<16x512xf32>
    %cst_6 = arith.constant 0.000000e+00 : f32
    %7 = vector.broadcast %cst_6 : f32 to vector<16x512xf32>
    %8 = arith.maximumf %6, %7 : vector<16x512xf32>
    %c0_7 = arith.constant 0 : index
    %c0_8 = arith.constant 0 : index
    %c0_9 = arith.constant 0 : index
    %9 = vector.load %arg4[%c0_7, %c0_8, %c0_9] : memref<6x512x512xbf16, #tpu.memory_space<vmem>>, vector<1x512x512xbf16>
    %10 = vector.shape_cast %9 : vector<1x512x512xbf16> to vector<512x512xbf16>
    %c1 = arith.constant 1 : index
    %c0_10 = arith.constant 0 : index
    %11 = vector.load %arg6[%c1, %c0_10] : memref<10x512xf32, #tpu.memory_space<vmem>>, vector<1x512xf32>
    %12 = arith.truncf %8 : vector<16x512xf32> to vector<16x512xbf16>
    %cst_11 = arith.constant dense<0.000000e+00> : vector<16x512xf32>
    %13 = tpu.matmul %12, %10, %cst_11 {dimension_numbers = #tpu.dot_dimension_numbers<[1], [0], [0], [1], [0, 0, 1, 1], [], []>} : vector<16x512xbf16>, vector<512x512xbf16>, vector<16x512xf32> -> vector<16x512xf32>
    %14 = vector.broadcast %11 : vector<1x512xf32> to vector<16x512xf32>
    %15 = arith.addf %13, %14 : vector<16x512xf32>
    %cst_12 = arith.constant 0.000000e+00 : f32
    %16 = vector.broadcast %cst_12 : f32 to vector<16x512xf32>
    %17 = arith.maximumf %15, %16 : vector<16x512xf32>
    %c1_13 = arith.constant 1 : index
    %c0_14 = arith.constant 0 : index
    %c0_15 = arith.constant 0 : index
    %18 = vector.load %arg4[%c1_13, %c0_14, %c0_15] : memref<6x512x512xbf16, #tpu.memory_space<vmem>>, vector<1x512x512xbf16>
    %19 = vector.shape_cast %18 : vector<1x512x512xbf16> to vector<512x512xbf16>
    %c2 = arith.constant 2 : index
    %c0_16 = arith.constant 0 : index
    %20 = vector.load %arg6[%c2, %c0_16] : memref<10x512xf32, #tpu.memory_space<vmem>>, vector<1x512xf32>
    %21 = arith.truncf %17 : vector<16x512xf32> to vector<16x512xbf16>
    %cst_17 = arith.constant dense<0.000000e+00> : vector<16x512xf32>
    %22 = tpu.matmul %21, %19, %cst_17 {dimension_numbers = #tpu.dot_dimension_numbers<[1], [0], [0], [1], [0, 0, 1, 1], [], []>} : vector<16x512xbf16>, vector<512x512xbf16>, vector<16x512xf32> -> vector<16x512xf32>
    %23 = vector.broadcast %20 : vector<1x512xf32> to vector<16x512xf32>
    %24 = arith.addf %22, %23 : vector<16x512xf32>
    %cst_18 = arith.constant 0.000000e+00 : f32
    %25 = vector.broadcast %cst_18 : f32 to vector<16x512xf32>
    %26 = arith.maximumf %24, %25 : vector<16x512xf32>
    %c2_19 = arith.constant 2 : index
    %c0_20 = arith.constant 0 : index
    %c0_21 = arith.constant 0 : index
    %27 = vector.load %arg4[%c2_19, %c0_20, %c0_21] : memref<6x512x512xbf16, #tpu.memory_space<vmem>>, vector<1x512x512xbf16>
    %28 = vector.shape_cast %27 : vector<1x512x512xbf16> to vector<512x512xbf16>
    %c3 = arith.constant 3 : index
    %c0_22 = arith.constant 0 : index
    %29 = vector.load %arg6[%c3, %c0_22] : memref<10x512xf32, #tpu.memory_space<vmem>>, vector<1x512xf32>
    %30 = arith.truncf %26 : vector<16x512xf32> to vector<16x512xbf16>
    %cst_23 = arith.constant dense<0.000000e+00> : vector<16x512xf32>
    %31 = tpu.matmul %30, %28, %cst_23 {dimension_numbers = #tpu.dot_dimension_numbers<[1], [0], [0], [1], [0, 0, 1, 1], [], []>} : vector<16x512xbf16>, vector<512x512xbf16>, vector<16x512xf32> -> vector<16x512xf32>
    %32 = vector.broadcast %29 : vector<1x512xf32> to vector<16x512xf32>
    %33 = arith.addf %31, %32 : vector<16x512xf32>
    %cst_24 = arith.constant 0.000000e+00 : f32
    %34 = vector.broadcast %cst_24 : f32 to vector<16x512xf32>
    %35 = arith.maximumf %33, %34 : vector<16x512xf32>
    %c0_25 = arith.constant 0 : index
    %c0_26 = arith.constant 0 : index
    %c0_27 = arith.constant 0 : index
    %36 = vector.load %arg5[%c0_25, %c0_26, %c0_27] : memref<2x512x128xbf16, #tpu.memory_space<vmem>>, vector<1x512x128xbf16>
    %37 = vector.shape_cast %36 : vector<1x512x128xbf16> to vector<512x128xbf16>
    %c4 = arith.constant 4 : index
    %c0_28 = arith.constant 0 : index
    %38 = vector.load %arg6[%c4, %c0_28] : memref<10x512xf32, #tpu.memory_space<vmem>>, vector<1x128xf32>
    %39 = arith.truncf %35 : vector<16x512xf32> to vector<16x512xbf16>
    %cst_29 = arith.constant dense<0.000000e+00> : vector<16x128xf32>
    %40 = tpu.matmul %39, %37, %cst_29 {dimension_numbers = #tpu.dot_dimension_numbers<[1], [0], [0], [1], [0, 0, 1, 1], [], []>} : vector<16x512xbf16>, vector<512x128xbf16>, vector<16x128xf32> -> vector<16x128xf32>
    %41 = vector.broadcast %38 : vector<1x128xf32> to vector<16x128xf32>
    %42 = arith.addf %40, %41 : vector<16x128xf32>
    %43 = tpu.iota {dimensions = array<i32: 1>} : vector<16x128xi32>
    %c8_i32 = arith.constant 8 : i32
    %44 = vector.broadcast %c8_i32 : i32 to vector<16x128xi32>
    %45 = arith.cmpi sge, %43, %44 : vector<16x128xi32>
    %c16_i32 = arith.constant 16 : i32
    %46 = vector.broadcast %c16_i32 : i32 to vector<16x128xi32>
    %47 = arith.cmpi slt, %43, %46 : vector<16x128xi32>
    %48 = arith.andi %45, %47 : vector<16x128xi1>
    %cst_30 = arith.constant 5.000000e-01 : f32
    %49 = vector.broadcast %cst_30 : f32 to vector<16x128xf32>
    %50 = arith.mulf %49, %42 : vector<16x128xf32>
    %51 = math.exp %50 : vector<16x128xf32>
    %cst_31 = arith.constant 0.000000e+00 : f32
    %52 = vector.broadcast %cst_31 : f32 to vector<16x128xf32>
    %53 = arith.select %48, %51, %52 : vector<16x128xi1>, vector<16x128xf32>
    %c8_i32_32 = arith.constant 8 : i32
    %54 = vector.broadcast %c8_i32_32 : i32 to vector<16x128xi32>
    %55 = arith.cmpi slt, %43, %54 : vector<16x128xi32>
    %cst_33 = arith.constant 0.000000e+00 : f32
    %56 = vector.broadcast %cst_33 : f32 to vector<16x128xf32>
    %57 = arith.select %55, %42, %56 : vector<16x128xi1>, vector<16x128xf32>
    %c0_34 = arith.constant 0 : index
    %c0_35 = arith.constant 0 : index
    %58 = vector.load %arg2[%c0_34, %c0_35] : memref<16x128xbf16, #tpu.memory_space<vmem>>, vector<16x128xbf16>
    %59 = arith.extf %58 : vector<16x128xbf16> to vector<16x128xf32>
    %60 = arith.mulf %53, %59 : vector<16x128xf32>
    %61 = arith.addf %57, %60 : vector<16x128xf32>
    %c1_36 = arith.constant 1 : index
    %c0_37 = arith.constant 0 : index
    %c0_38 = arith.constant 0 : index
    %62 = vector.load %arg3[%c1_36, %c0_37, %c0_38] : memref<2x128x512xbf16, #tpu.memory_space<vmem>>, vector<1x128x512xbf16>
    %63 = vector.shape_cast %62 : vector<1x128x512xbf16> to vector<128x512xbf16>
    %c5 = arith.constant 5 : index
    %c0_39 = arith.constant 0 : index
    %64 = vector.load %arg6[%c5, %c0_39] : memref<10x512xf32, #tpu.memory_space<vmem>>, vector<1x512xf32>
    %65 = arith.truncf %61 : vector<16x128xf32> to vector<16x128xbf16>
    %cst_40 = arith.constant dense<0.000000e+00> : vector<16x512xf32>
    %66 = tpu.matmul %65, %63, %cst_40 {dimension_numbers = #tpu.dot_dimension_numbers<[1], [0], [0], [1], [0, 0, 1, 1], [], []>} : vector<16x128xbf16>, vector<128x512xbf16>, vector<16x512xf32> -> vector<16x512xf32>
    %67 = vector.broadcast %64 : vector<1x512xf32> to vector<16x512xf32>
    %68 = arith.addf %66, %67 : vector<16x512xf32>
    %cst_41 = arith.constant 0.000000e+00 : f32
    %69 = vector.broadcast %cst_41 : f32 to vector<16x512xf32>
    %70 = arith.maximumf %68, %69 : vector<16x512xf32>
    %c3_42 = arith.constant 3 : index
    %c0_43 = arith.constant 0 : index
    %c0_44 = arith.constant 0 : index
    %71 = vector.load %arg4[%c3_42, %c0_43, %c0_44] : memref<6x512x512xbf16, #tpu.memory_space<vmem>>, vector<1x512x512xbf16>
    %72 = vector.shape_cast %71 : vector<1x512x512xbf16> to vector<512x512xbf16>
    %c6 = arith.constant 6 : index
    %c0_45 = arith.constant 0 : index
    %73 = vector.load %arg6[%c6, %c0_45] : memref<10x512xf32, #tpu.memory_space<vmem>>, vector<1x512xf32>
    %74 = arith.truncf %70 : vector<16x512xf32> to vector<16x512xbf16>
    %cst_46 = arith.constant dense<0.000000e+00> : vector<16x512xf32>
    %75 = tpu.matmul %74, %72, %cst_46 {dimension_numbers = #tpu.dot_dimension_numbers<[1], [0], [0], [1], [0, 0, 1, 1], [], []>} : vector<16x512xbf16>, vector<512x512xbf16>, vector<16x512xf32> -> vector<16x512xf32>
    %76 = vector.broadcast %73 : vector<1x512xf32> to vector<16x512xf32>
    %77 = arith.addf %75, %76 : vector<16x512xf32>
    %cst_47 = arith.constant 0.000000e+00 : f32
    %78 = vector.broadcast %cst_47 : f32 to vector<16x512xf32>
    %79 = arith.maximumf %77, %78 : vector<16x512xf32>
    %c4_48 = arith.constant 4 : index
    %c0_49 = arith.constant 0 : index
    %c0_50 = arith.constant 0 : index
    %80 = vector.load %arg4[%c4_48, %c0_49, %c0_50] : memref<6x512x512xbf16, #tpu.memory_space<vmem>>, vector<1x512x512xbf16>
    %81 = vector.shape_cast %80 : vector<1x512x512xbf16> to vector<512x512xbf16>
    %c7 = arith.constant 7 : index
    %c0_51 = arith.constant 0 : index
    %82 = vector.load %arg6[%c7, %c0_51] : memref<10x512xf32, #tpu.memory_space<vmem>>, vector<1x512xf32>
    %83 = arith.truncf %79 : vector<16x512xf32> to vector<16x512xbf16>
    %cst_52 = arith.constant dense<0.000000e+00> : vector<16x512xf32>
    %84 = tpu.matmul %83, %81, %cst_52 {dimension_numbers = #tpu.dot_dimension_numbers<[1], [0], [0], [1], [0, 0, 1, 1], [], []>} : vector<16x512xbf16>, vector<512x512xbf16>, vector<16x512xf32> -> vector<16x512xf32>
    %85 = vector.broadcast %82 : vector<1x512xf32> to vector<16x512xf32>
    %86 = arith.addf %84, %85 : vector<16x512xf32>
    %cst_53 = arith.constant 0.000000e+00 : f32
    %87 = vector.broadcast %cst_53 : f32 to vector<16x512xf32>
    %88 = arith.maximumf %86, %87 : vector<16x512xf32>
    %c5_54 = arith.constant 5 : index
    %c0_55 = arith.constant 0 : index
    %c0_56 = arith.constant 0 : index
    %89 = vector.load %arg4[%c5_54, %c0_55, %c0_56] : memref<6x512x512xbf16, #tpu.memory_space<vmem>>, vector<1x512x512xbf16>
    %90 = vector.shape_cast %89 : vector<1x512x512xbf16> to vector<512x512xbf16>
    %c8 = arith.constant 8 : index
    %c0_57 = arith.constant 0 : index
    %91 = vector.load %arg6[%c8, %c0_57] : memref<10x512xf32, #tpu.memory_space<vmem>>, vector<1x512xf32>
    %92 = arith.truncf %88 : vector<16x512xf32> to vector<16x512xbf16>
    %cst_58 = arith.constant dense<0.000000e+00> : vector<16x512xf32>
    %93 = tpu.matmul %92, %90, %cst_58 {dimension_numbers = #tpu.dot_dimension_numbers<[1], [0], [0], [1], [0, 0, 1, 1], [], []>} : vector<16x512xbf16>, vector<512x512xbf16>, vector<16x512xf32> -> vector<16x512xf32>
    %94 = vector.broadcast %91 : vector<1x512xf32> to vector<16x512xf32>
    %95 = arith.addf %93, %94 : vector<16x512xf32>
    %cst_59 = arith.constant 0.000000e+00 : f32
    %96 = vector.broadcast %cst_59 : f32 to vector<16x512xf32>
    %97 = arith.maximumf %95, %96 : vector<16x512xf32>
    %c1_60 = arith.constant 1 : index
    %c0_61 = arith.constant 0 : index
    %c0_62 = arith.constant 0 : index
    %98 = vector.load %arg5[%c1_60, %c0_61, %c0_62] : memref<2x512x128xbf16, #tpu.memory_space<vmem>>, vector<1x512x128xbf16>
    %99 = vector.shape_cast %98 : vector<1x512x128xbf16> to vector<512x128xbf16>
    %c9 = arith.constant 9 : index
    %c0_63 = arith.constant 0 : index
    %100 = vector.load %arg6[%c9, %c0_63] : memref<10x512xf32, #tpu.memory_space<vmem>>, vector<1x128xf32>
    %101 = arith.truncf %97 : vector<16x512xf32> to vector<16x512xbf16>
    %cst_64 = arith.constant dense<0.000000e+00> : vector<16x128xf32>
    %102 = tpu.matmul %101, %99, %cst_64 {dimension_numbers = #tpu.dot_dimension_numbers<[1], [0], [0], [1], [0, 0, 1, 1], [], []>} : vector<16x512xbf16>, vector<512x128xbf16>, vector<16x128xf32> -> vector<16x128xf32>
    %103 = vector.broadcast %100 : vector<1x128xf32> to vector<16x128xf32>
    %104 = arith.addf %102, %103 : vector<16x128xf32>
    %c0_65 = arith.constant 0 : index
    %c0_66 = arith.constant 0 : index
    %105 = vector.load %arg7[%c0_65, %c0_66] : memref<16x256xf32, #tpu.memory_space<vmem>>, vector<16x128xf32>
    tpu.vector_store %arg7[%c0_65, %c0_66], %104 {strides = array<i32>} : memref<16x256xf32, #tpu.memory_space<vmem>>, vector<16x128xf32>,
    %c0_67 = arith.constant 0 : index
    %c128 = arith.constant 128 : index
    %106 = vector.load %arg7[%c0_67, %c128] : memref<16x256xf32, #tpu.memory_space<vmem>>, vector<16x128xf32>
    tpu.vector_store %arg7[%c0_67, %c128], %42 {strides = array<i32>} : memref<16x256xf32, #tpu.memory_space<vmem>>, vector<16x128xf32>,
    return
  }
  func.func @transform_0(%arg0: i32) -> (i32, i32) {
    %c0_i32 = arith.constant 0 : i32
    %c0_i32_0 = arith.constant 0 : i32
    return %arg0, %c0_i32 : i32, i32
  }
  func.func @transform_1(%arg0: i32) -> (i32, i32) {
    %c0_i32 = arith.constant 0 : i32
    %c0_i32_0 = arith.constant 0 : i32
    return %arg0, %c0_i32 : i32, i32
  }
  func.func @transform_2(%arg0: i32) -> (i32, i32, i32) {
    %c0_i32 = arith.constant 0 : i32
    %c0_i32_0 = arith.constant 0 : i32
    %c0_i32_1 = arith.constant 0 : i32
    %c0_i32_2 = arith.constant 0 : i32
    return %c0_i32, %c0_i32_0, %c0_i32_1 : i32, i32, i32
  }
  func.func @transform_3(%arg0: i32) -> (i32, i32, i32) {
    %c0_i32 = arith.constant 0 : i32
    %c0_i32_0 = arith.constant 0 : i32
    %c0_i32_1 = arith.constant 0 : i32
    %c0_i32_2 = arith.constant 0 : i32
    return %c0_i32, %c0_i32_0, %c0_i32_1 : i32, i32, i32
  }
  func.func @transform_4(%arg0: i32) -> (i32, i32, i32) {
    %c0_i32 = arith.constant 0 : i32
    %c0_i32_0 = arith.constant 0 : i32
    %c0_i32_1 = arith.constant 0 : i32
    %c0_i32_2 = arith.constant 0 : i32
    return %c0_i32, %c0_i32_0, %c0_i32_1 : i32, i32, i32
  }
  func.func @transform_5(%arg0: i32) -> (i32, i32) {
    %c0_i32 = arith.constant 0 : i32
    %c0_i32_0 = arith.constant 0 : i32
    %c0_i32_1 = arith.constant 0 : i32
    return %c0_i32, %c0_i32_0 : i32, i32
  }
  func.func @transform_6(%arg0: i32) -> (i32, i32) {
    %c0_i32 = arith.constant 0 : i32
    %c0_i32_0 = arith.constant 0 : i32
    return %arg0, %c0_i32 : i32, i32
  }
}

</mosaic_0001>

<llo_original>
// kernel: vae_forward.1
$region0: #{vae_forward.1}
  #allocation0 [shape = 'u32[]', space=smem, size = 0x4, offset = 0x4, fixed_abs, tag = 'smem constant byte address 0x4 - core index']
  #allocation1 [shape = 'u32[144,128]{1,0:T(1,128)}', space=vmem, size = 0x12000, scoped, tag = 'internal scratch']
  %s0 = inlined_call_operand.vmem [shape: bf16[16,128], index: 0, kind: input, shape index: {}]
  %s1 = inlined_call_operand.vmem [shape: bf16[16,128], index: 1, kind: input, shape index: {}]
  %s2 = inlined_call_operand.hbm [shape: bf16[2,128,512], index: 2, kind: input, shape index: {}]
  %s3 = inlined_call_operand.hbm [shape: bf16[6,512,512], index: 3, kind: input, shape index: {}]
  %s4 = inlined_call_operand.hbm [shape: bf16[2,512,128], index: 4, kind: input, shape index: {}]
  %s5 = inlined_call_operand.hbm [shape: f32[10,512], index: 5, kind: input, shape index: {}]
  %s6 = inlined_call_operand.vmem [shape: f32[16,256], index: 6, kind: output, shape index: {}]
  %s7 = sld [smem:[#allocation0]]
  $region50: #{vae_forward.1} parent=0
    _
  %s9 = ssub.s32 1, %s7
  %s10 = scalar_select 0, %s9, %s7
  $region1: #{vae_forward.1} parent=0
    #allocation2 [shape = 'u8[262144]{0}', space=vmem, size = 0x40000, scoped, tag = 'input window, operand 2, single buffered']
    #allocation3 [shape = 's32[1]{0}', space=sflag, size = 0x4, scoped, tag = 'scoped memory for vae_forward.1']
    #allocation4 [shape = 'u8[3145728]{0}', space=vmem, size = 0x300000, scoped, tag = 'input window, operand 3, single buffered']
    #allocation5 [shape = 's32[1]{0}', space=sflag, size = 0x4, scoped, tag = 'scoped memory for vae_forward.1']
    #allocation6 [shape = 'u8[262144]{0}', space=vmem, size = 0x40000, scoped, tag = 'input window, operand 4, single buffered']
    #allocation7 [shape = 'u8[32768]{0}', space=vmem, size = 0x8000, scoped, tag = 'input window, operand 5, single buffered']
    #allocation8 [shape = 's32[1]{0}', space=sflag, size = 0x4, scoped, tag = 'scoped memory for vae_forward.1']
    %11 = vsyncpa [#allocation3], 0
    %12 = vsyncpa [#allocation5], 0
    %13 = vsyncpa [#allocation8], 0
    // Predicated region
    $region2: #{vae_forward.1} parent=1 // pred_check
      _
    $region3: #{vae_forward.1} parent=1 // pred_check_branch
      %15 = sbr.rel (0) target = $region5
    $region4: #{vae_forward.1} parent=1 // pred_region
      _
    $region5: #{vae_forward.1} parent=1 // pred_fallthru
      _
    // Predicated region
    $region6: #{vae_forward.1} parent=1 // pred_check
      _
    $region7: #{vae_forward.1} parent=1 // pred_check_branch
      %17 = sbr.rel (0) target = $region9
    $region8: #{vae_forward.1} parent=1 // pred_region
      _
    $region9: #{vae_forward.1} parent=1 // pred_fallthru
      _
    // Predicated region
    $region10: #{vae_forward.1} parent=1 // pred_check
      _
    $region11: #{vae_forward.1} parent=1 // pred_check_branch
      %19 = sbr.rel (0) target = $region13
    $region12: #{vae_forward.1} parent=1 // pred_region
      %s21 = ssub.s32 8192, 8192
      %22 = vsyncadd [#allocation3], %s21
      %s23 = sshll.u32 [#allocation2], 4
      %s24 = int_to_ptr.vmem [resolvable:$true] %s23
      %29 = dma.hbm_to_vmem [thread:$0]  %s2, 8192, %s24, [#allocation3], 256, 256, 16
    $region13: #{vae_forward.1} parent=1 // pred_fallthru
      _
    // Predicated region
    $region14: #{vae_forward.1} parent=1 // pred_check
      _
    $region15: #{vae_forward.1} parent=1 // pred_check_branch
      %31 = sbr.rel (0) target = $region17
    $region16: #{vae_forward.1} parent=1 // pred_region
      %s33 = ssub.s32 98304, 98304
      %34 = vsyncadd [#allocation5], %s33
      %s35 = sshll.u32 [#allocation4], 4
      %s36 = int_to_ptr.vmem [resolvable:$true] %s35
      %41 = dma.hbm_to_vmem [thread:$0]  %s3, 98304, %s36, [#allocation5], 256, 256, 16
    $region17: #{vae_forward.1} parent=1 // pred_fallthru
      _
    // Predicated region
    $region18: #{vae_forward.1} parent=1 // pred_check
      _
    $region19: #{vae_forward.1} parent=1 // pred_check_branch
      %43 = sbr.rel (0) target = $region21
    $region20: #{vae_forward.1} parent=1 // pred_region
      %s45 = ssub.s32 8192, 8192
      %46 = vsyncadd [#allocation5], %s45
      %s47 = sshll.u32 [#allocation6], 4
      %s48 = int_to_ptr.vmem [resolvable:$true] %s47
      %53 = dma.hbm_to_vmem [thread:$0]  %s4, 8192, %s48, [#allocation5], 64, 64, 4
    $region21: #{vae_forward.1} parent=1 // pred_fallthru
      _
    // Predicated region
    $region22: #{vae_forward.1} parent=1 // pred_check
      _
    $region23: #{vae_forward.1} parent=1 // pred_check_branch
      %55 = sbr.rel (0) target = $region25
    $region24: #{vae_forward.1} parent=1 // pred_region
      %s57 = ssub.s32 1024, 1024
      %58 = vsyncadd [#allocation8], %s57
      %s59 = sshll.u32 [#allocation7], 4
      %s60 = int_to_ptr.vmem [resolvable:$true] %s59
      %65 = dma.hbm_to_vmem [thread:$0]  %s5, 1024, %s60, [#allocation8], 512, 512, 32
    $region25: #{vae_forward.1} parent=1 // pred_fallthru
      _
    // Predicated region
    $region26: #{vae_forward.1} parent=1 // pred_check
      _
    $region27: #{vae_forward.1} parent=1 // pred_check_branch
      %67 = sbr.rel (0) target = $region29
    $region28: #{vae_forward.1} parent=1 // pred_region
      %68 = dma.done [#allocation3], 8192
    $region29: #{vae_forward.1} parent=1 // pred_fallthru
      _
    // Predicated region
    $region30: #{vae_forward.1} parent=1 // pred_check
      _
    $region31: #{vae_forward.1} parent=1 // pred_check_branch
      %70 = sbr.rel (0) target = $region33
    $region32: #{vae_forward.1} parent=1 // pred_region
      %71 = dma.done [#allocation5], 98304
    $region33: #{vae_forward.1} parent=1 // pred_fallthru
      _
    // Predicated region
    $region34: #{vae_forward.1} parent=1 // pred_check
      _
    $region35: #{vae_forward.1} parent=1 // pred_check_branch
      %73 = sbr.rel (0) target = $region37
    $region36: #{vae_forward.1} parent=1 // pred_region
      %74 = dma.done [#allocation5], 8192
    $region37: #{vae_forward.1} parent=1 // pred_fallthru
      _
    // Predicated region
    $region38: #{vae_forward.1} parent=1 // pred_check
      _
    $region39: #{vae_forward.1} parent=1 // pred_check_branch
      %76 = sbr.rel (0) target = $region41
    $region40: #{vae_forward.1} parent=1 // pred_region
      %77 = dma.done [#allocation8], 1024
    $region41: #{vae_forward.1} parent=1 // pred_fallthru
      _
    %v79 = vld [vmem:[%s0] sm:$0xf]
    %v80 = vld [vmem:[%s0 + $0x4] sm:$0xf]
    %v81 = vld [vmem:[#allocation2] sm:$0xff]
    %v82 = vld [vmem:[#allocation2 + $0x8] sm:$0xff]
    %v83 = vld [vmem:[#allocation2 + $0x10] sm:$0xff]
    %v84 = vld [vmem:[#allocation2 + $0x18] sm:$0xff]
    %v85 = vld [vmem:[#allocation2 + $0x20] sm:$0xff]
    %v86 = vld [vmem:[#allocation2 + $0x28] sm:$0xff]
    %v87 = vld [vmem:[#allocation2 + $0x30] sm:$0xff]
    %v88 = vld [vmem:[#allocation2 + $0x38] sm:$0xff]
    %v89 = vld [vmem:[#allocation2 + $0x40] sm:$0xff]
    %v90 = vld [vmem:[#allocation2 + $0x48] sm:$0xff]
    %v91 = vld [vmem:[#allocation2 + $0x50] sm:$0xff]
    %v92 = vld [vmem:[#allocation2 + $0x58] sm:$0xff]
    %v93 = vld [vmem:[#allocation2 + $0x60] sm:$0xff]
    %v94 = vld [vmem:[#allocation2 + $0x68] sm:$0xff]
    %v95 = vld [vmem:[#allocation2 + $0x70] sm:$0xff]
    %v96 = vld [vmem:[#allocation2 + $0x78] sm:$0xff]
    %v97 = vld [vmem:[#allocation2 + $0x80] sm:$0xff]
    %v98 = vld [vmem:[#allocation2 + $0x88] sm:$0xff]
    %v99 = vld [vmem:[#allocation2 + $0x90] sm:$0xff]
    %v100 = vld [vmem:[#allocation2 + $0x98] sm:$0xff]
    %v101 = vld [vmem:[#allocation2 + $0xa0] sm:$0xff]
    %v102 = vld [vmem:[#allocation2 + $0xa8] sm:$0xff]
    %v103 = vld [vmem:[#allocation2 + $0xb0] sm:$0xff]
    %v104 = vld [vmem:[#allocation2 + $0xb8] sm:$0xff]
    %v105 = vld [vmem:[#allocation2 + $0xc0] sm:$0xff]
    %v106 = vld [vmem:[#allocation2 + $0xc8] sm:$0xff]
    %v107 = vld [vmem:[#allocation2 + $0xd0] sm:$0xff]
    %v108 = vld [vmem:[#allocation2 + $0xd8] sm:$0xff]
    %v109 = vld [vmem:[#allocation2 + $0xe0] sm:$0xff]
    %v110 = vld [vmem:[#allocation2 + $0xe8] sm:$0xff]
    %v111 = vld [vmem:[#allocation2 + $0xf0] sm:$0xff]
    %v112 = vld [vmem:[#allocation2 + $0xf8] sm:$0xff]
    %v113 = vld [vmem:[#allocation7] ss:$8 sm:$0xf]
    %v115 = vlaneseq
    %v116 = vshrl.u32 %v115, 7
    %v117 = vsub.s32 0, %v116
    %v118 = vrot.slane %v113, %v117
    %v119 = vlaneseq
    %v120 = vshrl.u32 %v119, 7
    %v121 = vsub.s32 1, %v120
    %v122 = vrot.slane %v113, %v121
    %v123 = vlaneseq
    %v124 = vshrl.u32 %v123, 7
    %v125 = vsub.s32 2, %v124
    %v126 = vrot.slane %v113, %v125
    %v127 = vlaneseq
    %v128 = vshrl.u32 %v127, 7
    %v129 = vsub.s32 3, %v128
    %v130 = vrot.slane %v113, %v129
    %v137 = vunpack.c.l.b16 %v79
    %v138 = vunpack.c.l.b16 %v80
    %v139 = vpack.c.b16 %v138, %v137
    %v173 = vunpack.c.l.b16 %v81
    %v174 = vunpack.c.h.b16 %v81
    %v175 = vunpack.c.l.b16 %v82
    %v176 = vunpack.c.h.b16 %v82
    %v177 = vunpack.c.l.b16 %v83
    %v178 = vunpack.c.h.b16 %v83
    %v179 = vunpack.c.l.b16 %v84
    %v180 = vunpack.c.h.b16 %v84
    %v181 = vunpack.c.l.b16 %v85
    %v182 = vunpack.c.h.b16 %v85
    %v183 = vunpack.c.l.b16 %v86
    %v184 = vunpack.c.h.b16 %v86
    %v185 = vunpack.c.l.b16 %v87
    %v186 = vunpack.c.h.b16 %v87
    %v187 = vunpack.c.l.b16 %v88
    %v188 = vunpack.c.h.b16 %v88
    %v189 = vunpack.c.l.b16 %v89
    %v190 = vunpack.c.h.b16 %v89
    %v191 = vunpack.c.l.b16 %v90
    %v192 = vunpack.c.h.b16 %v90
    %v193 = vunpack.c.l.b16 %v91
    %v194 = vunpack.c.h.b16 %v91
    %v195 = vunpack.c.l.b16 %v92
    %v196 = vunpack.c.h.b16 %v92
    %v197 = vunpack.c.l.b16 %v93
    %v198 = vunpack.c.h.b16 %v93
    %v199 = vunpack.c.l.b16 %v94
    %v200 = vunpack.c.h.b16 %v94
    %v201 = vunpack.c.l.b16 %v95
    %v202 = vunpack.c.h.b16 %v95
    %v203 = vunpack.c.l.b16 %v96
    %v204 = vunpack.c.h.b16 %v96
    %v205 = vunpack.c.l.b16 %v97
    %v206 = vunpack.c.h.b16 %v97
    %v207 = vunpack.c.l.b16 %v98
    %v208 = vunpack.c.h.b16 %v98
    %v209 = vunpack.c.l.b16 %v99
    %v210 = vunpack.c.h.b16 %v99
    %v211 = vunpack.c.l.b16 %v100
    %v212 = vunpack.c.h.b16 %v100
    %v213 = vunpack.c.l.b16 %v101
    %v214 = vunpack.c.h.b16 %v101
    %v215 = vunpack.c.l.b16 %v102
    %v216 = vunpack.c.h.b16 %v102
    %v217 = vunpack.c.l.b16 %v103
    %v218 = vunpack.c.h.b16 %v103
    %v219 = vunpack.c.l.b16 %v104
    %v220 = vunpack.c.h.b16 %v104
    %v221 = vunpack.c.l.b16 %v105
    %v222 = vunpack.c.h.b16 %v105
    %v223 = vunpack.c.l.b16 %v106
    %v224 = vunpack.c.h.b16 %v106
    %v225 = vunpack.c.l.b16 %v107
    %v226 = vunpack.c.h.b16 %v107
    %v227 = vunpack.c.l.b16 %v108
    %v228 = vunpack.c.h.b16 %v108
    %v229 = vunpack.c.l.b16 %v109
    %v230 = vunpack.c.h.b16 %v109
    %v231 = vunpack.c.l.b16 %v110
    %v232 = vunpack.c.h.b16 %v110
    %v233 = vunpack.c.l.b16 %v111
    %v234 = vunpack.c.h.b16 %v111
    %v235 = vunpack.c.l.b16 %v112
    %v236 = vunpack.c.h.b16 %v112
    %v237 = vpack.c.b16 %v177, %v173
    %v238 = vpack.c.b16 %v178, %v174
    %v239 = vpack.c.b16 %v179, %v175
    %v240 = vpack.c.b16 %v180, %v176
    %v241 = vpack.c.b16 %v185, %v181
    %v242 = vpack.c.b16 %v186, %v182
    %v243 = vpack.c.b16 %v187, %v183
    %v244 = vpack.c.b16 %v188, %v184
    %v245 = vpack.c.b16 %v193, %v189
    %v246 = vpack.c.b16 %v194, %v190
    %v247 = vpack.c.b16 %v195, %v191
    %v248 = vpack.c.b16 %v196, %v192
    %v249 = vpack.c.b16 %v201, %v197
    %v250 = vpack.c.b16 %v202, %v198
    %v251 = vpack.c.b16 %v203, %v199
    %v252 = vpack.c.b16 %v204, %v200
    %v253 = vpack.c.b16 %v209, %v205
    %v254 = vpack.c.b16 %v210, %v206
    %v255 = vpack.c.b16 %v211, %v207
    %v256 = vpack.c.b16 %v212, %v208
    %v257 = vpack.c.b16 %v217, %v213
    %v258 = vpack.c.b16 %v218, %v214
    %v259 = vpack.c.b16 %v219, %v215
    %v260 = vpack.c.b16 %v220, %v216
    %v261 = vpack.c.b16 %v225, %v221
    %v262 = vpack.c.b16 %v226, %v222
    %v263 = vpack.c.b16 %v227, %v223
    %v264 = vpack.c.b16 %v228, %v224
    %v265 = vpack.c.b16 %v233, %v229
    %v266 = vpack.c.b16 %v234, %v230
    %v267 = vpack.c.b16 %v235, %v231
    %v268 = vpack.c.b16 %v236, %v232
    %301 = vmatprep.subr.bf16.mxu0 %v238
    %302 = vmatpush1.bf16.msra.mxu0 %v237
    %303 = vmatprep.subr.bf16.mxu0 %v242
    %304 = vmatpush1.bf16.msra.mxu0 %v241
    %305 = vmatprep.subr.bf16.mxu0 %v246
    %306 = vmatpush1.bf16.msra.mxu0 %v245
    %307 = vmatprep.subr.bf16.mxu0 %v250
    %308 = vmatpush1.bf16.msra.mxu0 %v249
    %309 = vmatprep.subr.bf16.mxu0 %v254
    %310 = vmatpush1.bf16.msra.mxu0 %v253
    %311 = vmatprep.subr.bf16.mxu0 %v258
    %312 = vmatpush1.bf16.msra.mxu0 %v257
    %313 = vmatprep.subr.bf16.mxu0 %v262
    %314 = vmatpush1.bf16.msra.mxu0 %v261
    %315 = vmatprep.subr.bf16.mxu0 %v266
    %316 = vmatpush1.bf16.msra.mxu0 %v265
    %317 = vmatprep.subr.bf16.mxu0 0
    %318 = vmatpush1.bf16.msra.mxu0 0
    %319 = vmatprep.subr.bf16.mxu0 0
    %320 = vmatpush1.bf16.msra.mxu0 0
    %321 = vmatprep.subr.bf16.mxu0 0
    %322 = vmatpush1.bf16.msra.mxu0 0
    %323 = vmatprep.subr.bf16.mxu0 0
    %324 = vmatpush1.bf16.msra.mxu0 0
    %325 = vmatprep.subr.bf16.mxu0 0
    %326 = vmatpush1.bf16.msra.mxu0 0
    %327 = vmatprep.subr.bf16.mxu0 0
    %328 = vmatpush1.bf16.msra.mxu0 0
    %329 = vmatprep.subr.bf16.mxu0 0
    %330 = vmatpush1.bf16.msra.mxu0 0
    %331 = vmatprep.subr.bf16.mxu0 0
    %332 = vmatpush1.bf16.msra.mxu0 0
    %333 = vmatprep.mubr.bf16.mxu0 0
    %334 = vmatmul.mubr.bf16.gmra.mrb[0].mxu0 %v139
    %v335 = vpop.f32.mrb[0].mxu0
    %v336 = vadd.f32 %v118, %v335
    %v337 = vpop.f32.mrb[0].mxu0
    %v338 = vadd.f32 %v122, %v337
    %v339 = vpop.f32.mrb[0].mxu0
    %v340 = vadd.f32 %v118, %v339
    %v341 = vpop.f32.mrb[0].mxu0
    %v342 = vadd.f32 %v122, %v341
    %343 = vdwg.mxu0
    %344 = vmatprep.subr.bf16.mxu0 %v240
    %345 = vmatpush1.bf16.msra.mxu0 %v239
    %346 = vmatprep.subr.bf16.mxu0 %v244
    %347 = vmatpush1.bf16.msra.mxu0 %v243
    %348 = vmatprep.subr.bf16.mxu0 %v248
    %349 = vmatpush1.bf16.msra.mxu0 %v247
    %350 = vmatprep.subr.bf16.mxu0 %v252
    %351 = vmatpush1.bf16.msra.mxu0 %v251
    %352 = vmatprep.subr.bf16.mxu0 %v256
    %353 = vmatpush1.bf16.msra.mxu0 %v255
    %354 = vmatprep.subr.bf16.mxu0 %v260
    %355 = vmatpush1.bf16.msra.mxu0 %v259
    %356 = vmatprep.subr.bf16.mxu0 %v264
    %357 = vmatpush1.bf16.msra.mxu0 %v263
    %358 = vmatprep.subr.bf16.mxu0 %v268
    %359 = vmatpush1.bf16.msra.mxu0 %v267
    %360 = vmatprep.subr.bf16.mxu0 0
    %361 = vmatpush1.bf16.msra.mxu0 0
    %362 = vmatprep.subr.bf16.mxu0 0
    %363 = vmatpush1.bf16.msra.mxu0 0
    %364 = vmatprep.subr.bf16.mxu0 0
    %365 = vmatpush1.bf16.msra.mxu0 0
    %366 = vmatprep.subr.bf16.mxu0 0
    %367 = vmatpush1.bf16.msra.mxu0 0
    %368 = vmatprep.subr.bf16.mxu0 0
    %369 = vmatpush1.bf16.msra.mxu0 0
    %370 = vmatprep.subr.bf16.mxu0 0
    %371 = vmatpush1.bf16.msra.mxu0 0
    %372 = vmatprep.subr.bf16.mxu0 0
    %373 = vmatpush1.bf16.msra.mxu0 0
    %374 = vmatprep.subr.bf16.mxu0 0
    %375 = vmatpush1.bf16.msra.mxu0 0
    %376 = vmatprep.mubr.bf16.mxu0 0
    %377 = vmatmul.mubr.bf16.gmra.mrb[0].mxu0 %v139
    %v378 = vpop.f32.mrb[0].mxu0
    %v379 = vadd.f32 %v126, %v378
    %v380 = vpop.f32.mrb[0].mxu0
    %v381 = vadd.f32 %v130, %v380
    %v382 = vpop.f32.mrb[0].mxu0
    %v383 = vadd.f32 %v126, %v382
    %v384 = vpop.f32.mrb[0].mxu0
    %v385 = vadd.f32 %v130, %v384
    %386 = vdwg.mxu0
    %v387 = vmax.f32 %v336, 0.0
    %v388 = vmax.f32 %v338, 0.0
    %v389 = vmax.f32 %v379, 0.0
    %v390 = vmax.f32 %v381, 0.0
    %v391 = vmax.f32 %v340, 0.0
    %v392 = vmax.f32 %v342, 0.0
    %v393 = vmax.f32 %v383, 0.0
    %v394 = vmax.f32 %v385, 0.0
    %v395 = vld [vmem:[#allocation4] sm:$0xff]
    %v396 = vld [vmem:[#allocation4 + $0x8] sm:$0xff]
    %v397 = vld [vmem:[#allocation4 + $0x10] sm:$0xff]
    %v398 = vld [vmem:[#allocation4 + $0x18] sm:$0xff]
    %v399 = vld [vmem:[#allocation4 + $0x20] sm:$0xff]
    %v400 = vld [vmem:[#allocation4 + $0x28] sm:$0xff]
    %v401 = vld [vmem:[#allocation4 + $0x30] sm:$0xff]
    %v402 = vld [vmem:[#allocation4 + $0x38] sm:$0xff]
    %v403 = vld [vmem:[#allocation4 + $0x40] sm:$0xff]
    %v404 = vld [vmem:[#allocation4 + $0x48] sm:$0xff]
    %v405 = vld [vmem:[#allocation4 + $0x50] sm:$0xff]
    %v406 = vld [vmem:[#allocation4 + $0x58] sm:$0xff]
    %v407 = vld [vmem:[#allocation4 + $0x60] sm:$0xff]
    %v408 = vld [vmem:[#allocation4 + $0x68] sm:$0xff]
    %v409 = vld [vmem:[#allocation4 + $0x70] sm:$0xff]
    %v410 = vld [vmem:[#allocation4 + $0x78] sm:$0xff]
    %v411 = vld [vmem:[#allocation4 + $0x80] sm:$0xff]
    %v412 = vld [vmem:[#allocation4 + $0x88] sm:$0xff]
    %v413 = vld [vmem:[#allocation4 + $0x90] sm:$0xff]
    %v414 = vld [vmem:[#allocation4 + $0x98] sm:$0xff]
    %v415 = vld [vmem:[#allocation4 + $0xa0] sm:$0xff]
    %v416 = vld [vmem:[#allocation4 + $0xa8] sm:$0xff]
    %v417 = vld [vmem:[#allocation4 + $0xb0] sm:$0xff]
    %v418 = vld [vmem:[#allocation4 + $0xb8] sm:$0xff]
    %v419 = vld [vmem:[#allocation4 + $0xc0] sm:$0xff]
    %v420 = vld [vmem:[#allocation4 + $0xc8] sm:$0xff]
    %v421 = vld [vmem:[#allocation4 + $0xd0] sm:$0xff]
    %v422 = vld [vmem:[#allocation4 + $0xd8] sm:$0xff]
    %v423 = vld [vmem:[#allocation4 + $0xe0] sm:$0xff]
    %v424 = vld [vmem:[#allocation4 + $0xe8] sm:$0xff]
    %v425 = vld [vmem:[#allocation4 + $0xf0] sm:$0xff]
    %v426 = vld [vmem:[#allocation4 + $0xf8] sm:$0xff]
    %v427 = vld [vmem:[#allocation4 + $0x100] sm:$0xff]
    %v428 = vld [vmem:[#allocation4 + $0x108] sm:$0xff]
    %v429 = vld [vmem:[#allocation4 + $0x110] sm:$0xff]
    %v430 = vld [vmem:[#allocation4 + $0x118] sm:$0xff]
    %v431 = vld [vmem:[#allocation4 + $0x120] sm:$0xff]
    %v432 = vld [vmem:[#allocation4 + $0x128] sm:$0xff]
    %v433 = vld [vmem:[#allocation4 + $0x130] sm:$0xff]
    %v434 = vld [vmem:[#allocation4 + $0x138] sm:$0xff]
    %v435 = vld [vmem:[#allocation4 + $0x140] sm:$0xff]
    %v436 = vld [vmem:[#allocation4 + $0x148] sm:$0xff]
    %v437 = vld [vmem:[#allocation4 + $0x150] sm:$0xff]
    %v438 = vld [vmem:[#allocation4 + $0x158] sm:$0xff]
    %v439 = vld [vmem:[#allocation4 + $0x160] sm:$0xff]
    %v440 = vld [vmem:[#allocation4 + $0x168] sm:$0xff]
    %v441 = vld [vmem:[#allocation4 + $0x170] sm:$0xff]
    %v442 = vld [vmem:[#allocation4 + $0x178] sm:$0xff]
    %v443 = vld [vmem:[#allocation4 + $0x180] sm:$0xff]
    %v444 = vld [vmem:[#allocation4 + $0x188] sm:$0xff]
    %v445 = vld [vmem:[#allocation4 + $0x190] sm:$0xff]
    %v446 = vld [vmem:[#allocation4 + $0x198] sm:$0xff]
    %v447 = vld [vmem:[#allocation4 + $0x1a0] sm:$0xff]
    %v448 = vld [vmem:[#allocation4 + $0x1a8] sm:$0xff]
    %v449 = vld [vmem:[#allocation4 + $0x1b0] sm:$0xff]
    %v450 = vld [vmem:[#allocation4 + $0x1b8] sm:$0xff]
    %v451 = vld [vmem:[#allocation4 + $0x1c0] sm:$0xff]
    %v452 = vld [vmem:[#allocation4 + $0x1c8] sm:$0xff]
    %v453 = vld [vmem:[#allocation4 + $0x1d0] sm:$0xff]
    %v454 = vld [vmem:[#allocation4 + $0x1d8] sm:$0xff]
    %v455 = vld [vmem:[#allocation4 + $0x1e0] sm:$0xff]
    %v456 = vld [vmem:[#allocation4 + $0x1e8] sm:$0xff]
    %v457 = vld [vmem:[#allocation4 + $0x1f0] sm:$0xff]
    %v458 = vld [vmem:[#allocation4 + $0x1f8] sm:$0xff]
    %v459 = vld [vmem:[#allocation4 + $0x200] sm:$0xff]
    %v460 = vld [vmem:[#allocation4 + $0x208] sm:$0xff]
    %v461 = vld [vmem:[#allocation4 + $0x210] sm:$0xff]
    %v462 = vld [vmem:[#allocation4 + $0x218] sm:$0xff]
    %v463 = vld [vmem:[#allocation4 + $0x220] sm:$0xff]
    %v464 = vld [vmem:[#allocation4 + $0x228] sm:$0xff]
    %v465 = vld [vmem:[#allocation4 + $0x230] sm:$0xff]
    %v466 = vld [vmem:[#allocation4 + $0x238] sm:$0xff]
    %v467 = vld [vmem:[#allocation4 + $0x240] sm:$0xff]
    %v468 = vld [vmem:[#allocation4 + $0x248] sm:$0xff]
    %v469 = vld [vmem:[#allocation4 + $0x250] sm:$0xff]
    %v470 = vld [vmem:[#allocation4 + $0x258] sm:$0xff]
    %v471 = vld [vmem:[#allocation4 + $0x260] sm:$0xff]
    %v472 = vld [vmem:[#allocation4 + $0x268] sm:$0xff]
    %v473 = vld [vmem:[#allocation4 + $0x270] sm:$0xff]
    %v474 = vld [vmem:[#allocation4 + $0x278] sm:$0xff]
    %v475 = vld [vmem:[#allocation4 + $0x280] sm:$0xff]
    %v476 = vld [vmem:[#allocation4 + $0x288] sm:$0xff]
    %v477 = vld [vmem:[#allocation4 + $0x290] sm:$0xff]
    %v478 = vld [vmem:[#allocation4 + $0x298] sm:$0xff]
    %v479 = vld [vmem:[#allocation4 + $0x2a0] sm:$0xff]
    %v480 = vld [vmem:[#allocation4 + $0x2a8] sm:$0xff]
    %v481 = vld [vmem:[#allocation4 + $0x2b0] sm:$0xff]
    %v482 = vld [vmem:[#allocation4 + $0x2b8] sm:$0xff]
    %v483 = vld [vmem:[#allocation4 + $0x2c0] sm:$0xff]
    %v484 = vld [vmem:[#allocation4 + $0x2c8] sm:$0xff]
    %v485 = vld [vmem:[#allocation4 + $0x2d0] sm:$0xff]
    %v486 = vld [vmem:[#allocation4 + $0x2d8] sm:$0xff]
    %v487 = vld [vmem:[#allocation4 + $0x2e0] sm:$0xff]
    %v488 = vld [vmem:[#allocation4 + $0x2e8] sm:$0xff]
    %v489 = vld [vmem:[#allocation4 + $0x2f0] sm:$0xff]
    %v490 = vld [vmem:[#allocation4 + $0x2f8] sm:$0xff]
    %v491 = vld [vmem:[#allocation4 + $0x300] sm:$0xff]
    %v492 = vld [vmem:[#allocation4 + $0x308] sm:$0xff]
    %v493 = vld [vmem:[#allocation4 + $0x310] sm:$0xff]
    %v494 = vld [vmem:[#allocation4 + $0x318] sm:$0xff]
    %v495 = vld [vmem:[#allocation4 + $0x320] sm:$0xff]
    %v496 = vld [vmem:[#allocation4 + $0x328] sm:$0xff]
    %v497 = vld [vmem:[#allocation4 + $0x330] sm:$0xff]
    %v498 = vld [vmem:[#allocation4 + $0x338] sm:$0xff]
    %v499 = vld [vmem:[#allocation4 + $0x340] sm:$0xff]
    %v500 = vld [vmem:[#allocation4 + $0x348] sm:$0xff]
    %v501 = vld [vmem:[#allocation4 + $0x350] sm:$0xff]
    %v502 = vld [vmem:[#allocation4 + $0x358] sm:$0xff]
    %v503 = vld [vmem:[#allocation4 + $0x360] sm:$0xff]
    %v504 = vld [vmem:[#allocation4 + $0x368] sm:$0xff]
    %v505 = vld [vmem:[#allocation4 + $0x370] sm:$0xff]
    %v506 = vld [vmem:[#allocation4 + $0x378] sm:$0xff]
    %v507 = vld [vmem:[#allocation4 + $0x380] sm:$0xff]
    %v508 = vld [vmem:[#allocation4 + $0x388] sm:$0xff]
    %v509 = vld [vmem:[#allocation4 + $0x390] sm:$0xff]
    %v510 = vld [vmem:[#allocation4 + $0x398] sm:$0xff]
    %v511 = vld [vmem:[#allocation4 + $0x3a0] sm:$0xff]
    %v512 = vld [vmem:[#allocation4 + $0x3a8] sm:$0xff]
    %v513 = vld [vmem:[#allocation4 + $0x3b0] sm:$0xff]
    %v514 = vld [vmem:[#allocation4 + $0x3b8] sm:$0xff]
    %v515 = vld [vmem:[#allocation4 + $0x3c0] sm:$0xff]
    %v516 = vld [vmem:[#allocation4 + $0x3c8] sm:$0xff]
    %v517 = vld [vmem:[#allocation4 + $0x3d0] sm:$0xff]
    %v518 = vld [vmem:[#allocation4 + $0x3d8] sm:$0xff]
    %v519 = vld [vmem:[#allocation4 + $0x3e0] sm:$0xff]
    %v520 = vld [vmem:[#allocation4 + $0x3e8] sm:$0xff]
    %v521 = vld [vmem:[#allocation4 + $0x3f0] sm:$0xff]
    %v522 = vld [vmem:[#allocation4 + $0x3f8] sm:$0xff]
    %s523 = scalar_lea.vmem [#allocation7], 1
    %v524 = vld [vmem:[%s523] ss:$8 sm:$0xf]
    %v525 = vpack.c.bf16 %v391, %v387
    %v526 = vpack.c.bf16 %v392, %v388
    %v527 = vpack.c.bf16 %v393, %v389
    %v528 = vpack.c.bf16 %v394, %v390
    %v530 = vlaneseq
    %v531 = vshrl.u32 %v530, 7
    %v532 = vsub.s32 0, %v531
    %v533 = vrot.slane %v524, %v532
    %v534 = vlaneseq
    %v535 = vshrl.u32 %v534, 7
    %v536 = vsub.s32 1, %v535
    %v537 = vrot.slane %v524, %v536
    %v538 = vlaneseq
    %v539 = vshrl.u32 %v538, 7
    %v540 = vsub.s32 2, %v539
    %v541 = vrot.slane %v524, %v540
    %v542 = vlaneseq
    %v543 = vshrl.u32 %v542, 7
    %v544 = vsub.s32 3, %v543
    %v545 = vrot.slane %v524, %v544
    %v678 = vunpack.c.l.b16 %v395
    %v679 = vunpack.c.h.b16 %v395
    %v680 = vunpack.c.l.b16 %v396
    %v681 = vunpack.c.h.b16 %v396
    %v682 = vunpack.c.l.b16 %v397
    %v683 = vunpack.c.h.b16 %v397
    %v684 = vunpack.c.l.b16 %v398
    %v685 = vunpack.c.h.b16 %v398
    %v686 = vunpack.c.l.b16 %v399
    %v687 = vunpack.c.h.b16 %v399
    %v688 = vunpack.c.l.b16 %v400
    %v689 = vunpack.c.h.b16 %v400
    %v690 = vunpack.c.l.b16 %v401
    %v691 = vunpack.c.h.b16 %v401
    %v692 = vunpack.c.l.b16 %v402
    %v693 = vunpack.c.h.b16 %v402
    %v694 = vunpack.c.l.b16 %v403
    %v695 = vunpack.c.h.b16 %v403
    %v696 = vunpack.c.l.b16 %v404
    %v697 = vunpack.c.h.b16 %v404
    %v698 = vunpack.c.l.b16 %v405
    %v699 = vunpack.c.h.b16 %v405
    %v700 = vunpack.c.l.b16 %v406
    %v701 = vunpack.c.h.b16 %v406
    %v702 = vunpack.c.l.b16 %v407
    %v703 = vunpack.c.h.b16 %v407
    %v704 = vunpack.c.l.b16 %v408
    %v705 = vunpack.c.h.b16 %v408
    %v706 = vunpack.c.l.b16 %v409
    %v707 = vunpack.c.h.b16 %v409
    %v708 = vunpack.c.l.b16 %v410
    %v709 = vunpack.c.h.b16 %v410
    %v710 = vunpack.c.l.b16 %v411
    %v711 = vunpack.c.h.b16 %v411
    %v712 = vunpack.c.l.b16 %v412
    %v713 = vunpack.c.h.b16 %v412
    %v714 = vunpack.c.l.b16 %v413
    %v715 = vunpack.c.h.b16 %v413
    %v716 = vunpack.c.l.b16 %v414
    %v717 = vunpack.c.h.b16 %v414
    %v718 = vunpack.c.l.b16 %v415
    %v719 = vunpack.c.h.b16 %v415
    %v720 = vunpack.c.l.b16 %v416
    %v721 = vunpack.c.h.b16 %v416
    %v722 = vunpack.c.l.b16 %v417
    %v723 = vunpack.c.h.b16 %v417
    %v724 = vunpack.c.l.b16 %v418
    %v725 = vunpack.c.h.b16 %v418
    %v726 = vunpack.c.l.b16 %v419
    %v727 = vunpack.c.h.b16 %v419
    %v728 = vunpack.c.l.b16 %v420
    %v729 = vunpack.c.h.b16 %v420
    %v730 = vunpack.c.l.b16 %v421
    %v731 = vunpack.c.h.b16 %v421
    %v732 = vunpack.c.l.b16 %v422
    %v733 = vunpack.c.h.b16 %v422
    %v734 = vunpack.c.l.b16 %v423
    %v735 = vunpack.c.h.b16 %v423
    %v736 = vunpack.c.l.b16 %v424
    %v737 = vunpack.c.h.b16 %v424
    %v738 = vunpack.c.l.b16 %v425
    %v739 = vunpack.c.h.b16 %v425
    %v740 = vunpack.c.l.b16 %v426
    %v741 = vunpack.c.h.b16 %v426
    %v742 = vunpack.c.l.b16 %v427
    %v743 = vunpack.c.h.b16 %v427
    %v744 = vunpack.c.l.b16 %v428
    %v745 = vunpack.c.h.b16 %v428
    %v746 = vunpack.c.l.b16 %v429
    %v747 = vunpack.c.h.b16 %v429
    %v748 = vunpack.c.l.b16 %v430
    %v749 = vunpack.c.h.b16 %v430
    %v750 = vunpack.c.l.b16 %v431
    %v751 = vunpack.c.h.b16 %v431
    %v752 = vunpack.c.l.b16 %v432
    %v753 = vunpack.c.h.b16 %v432
    %v754 = vunpack.c.l.b16 %v433
    %v755 = vunpack.c.h.b16 %v433
    %v756 = vunpack.c.l.b16 %v434
    %v757 = vunpack.c.h.b16 %v434
    %v758 = vunpack.c.l.b16 %v435
    %v759 = vunpack.c.h.b16 %v435
    %v760 = vunpack.c.l.b16 %v436
    %v761 = vunpack.c.h.b16 %v436
    %v762 = vunpack.c.l.b16 %v437
    %v763 = vunpack.c.h.b16 %v437
    %v764 = vunpack.c.l.b16 %v438
    %v765 = vunpack.c.h.b16 %v438
    %v766 = vunpack.c.l.b16 %v439
    %v767 = vunpack.c.h.b16 %v439
    %v768 = vunpack.c.l.b16 %v440
    %v769 = vunpack.c.h.b16 %v440
    %v770 = vunpack.c.l.b16 %v441
    %v771 = vunpack.c.h.b16 %v441
    %v772 = vunpack.c.l.b16 %v442
    %v773 = vunpack.c.h.b16 %v442
    %v774 = vunpack.c.l.b16 %v443
    %v775 = vunpack.c.h.b16 %v443
    %v776 = vunpack.c.l.b16 %v444
    %v777 = vunpack.c.h.b16 %v444
    %v778 = vunpack.c.l.b16 %v445
    %v779 = vunpack.c.h.b16 %v445
    %v780 = vunpack.c.l.b16 %v446
    %v781 = vunpack.c.h.b16 %v446
    %v782 = vunpack.c.l.b16 %v447
    %v783 = vunpack.c.h.b16 %v447
    %v784 = vunpack.c.l.b16 %v448
    %v785 = vunpack.c.h.b16 %v448
    %v786 = vunpack.c.l.b16 %v449
    %v787 = vunpack.c.h.b16 %v449
    %v788 = vunpack.c.l.b16 %v450
    %v789 = vunpack.c.h.b16 %v450
    %v790 = vunpack.c.l.b16 %v451
    %v791 = vunpack.c.h.b16 %v451
    %v792 = vunpack.c.l.b16 %v452
    %v793 = vunpack.c.h.b16 %v452
    %v794 = vunpack.c.l.b16 %v453
    %v795 = vunpack.c.h.b16 %v453
    %v796 = vunpack.c.l.b16 %v454
    %v797 = vunpack.c.h.b16 %v454
    %v798 = vunpack.c.l.b16 %v455
    %v799 = vunpack.c.h.b16 %v455
    %v800 = vunpack.c.l.b16 %v456
    %v801 = vunpack.c.h.b16 %v456
    %v802 = vunpack.c.l.b16 %v457
    %v803 = vunpack.c.h.b16 %v457
    %v804 = vunpack.c.l.b16 %v458
    %v805 = vunpack.c.h.b16 %v458
    %v806 = vunpack.c.l.b16 %v459
    %v807 = vunpack.c.h.b16 %v459
    %v808 = vunpack.c.l.b16 %v460
    %v809 = vunpack.c.h.b16 %v460
    %v810 = vunpack.c.l.b16 %v461
    %v811 = vunpack.c.h.b16 %v461
    %v812 = vunpack.c.l.b16 %v462
    %v813 = vunpack.c.h.b16 %v462
    %v814 = vunpack.c.l.b16 %v463
    %v815 = vunpack.c.h.b16 %v463
    %v816 = vunpack.c.l.b16 %v464
    %v817 = vunpack.c.h.b16 %v464
    %v818 = vunpack.c.l.b16 %v465
    %v819 = vunpack.c.h.b16 %v465
    %v820 = vunpack.c.l.b16 %v466
    %v821 = vunpack.c.h.b16 %v466
    %v822 = vunpack.c.l.b16 %v467
    %v823 = vunpack.c.h.b16 %v467
    %v824 = vunpack.c.l.b16 %v468
    %v825 = vunpack.c.h.b16 %v468
    %v826 = vunpack.c.l.b16 %v469
    %v827 = vunpack.c.h.b16 %v469
    %v828 = vunpack.c.l.b16 %v470
    %v829 = vunpack.c.h.b16 %v470
    %v830 = vunpack.c.l.b16 %v471
    %v831 = vunpack.c.h.b16 %v471
    %v832 = vunpack.c.l.b16 %v472
    %v833 = vunpack.c.h.b16 %v472
    %v834 = vunpack.c.l.b16 %v473
    %v835 = vunpack.c.h.b16 %v473
    %v836 = vunpack.c.l.b16 %v474
    %v837 = vunpack.c.h.b16 %v474
    %v838 = vunpack.c.l.b16 %v475
    %v839 = vunpack.c.h.b16 %v475
    %v840 = vunpack.c.l.b16 %v476
    %v841 = vunpack.c.h.b16 %v476
    %v842 = vunpack.c.l.b16 %v477
    %v843 = vunpack.c.h.b16 %v477
    %v844 = vunpack.c.l.b16 %v478
    %v845 = vunpack.c.h.b16 %v478
    %v846 = vunpack.c.l.b16 %v479
    %v847 = vunpack.c.h.b16 %v479
    %v848 = vunpack.c.l.b16 %v480
    %v849 = vunpack.c.h.b16 %v480
    %v850 = vunpack.c.l.b16 %v481
    %v851 = vunpack.c.h.b16 %v481
    %v852 = vunpack.c.l.b16 %v482
    %v853 = vunpack.c.h.b16 %v482
    %v854 = vunpack.c.l.b16 %v483
    %v855 = vunpack.c.h.b16 %v483
    %v856 = vunpack.c.l.b16 %v484
    %v857 = vunpack.c.h.b16 %v484
    %v858 = vunpack.c.l.b16 %v485
    %v859 = vunpack.c.h.b16 %v485
    %v860 = vunpack.c.l.b16 %v486
    %v861 = vunpack.c.h.b16 %v486
    %v862 = vunpack.c.l.b16 %v487
    %v863 = vunpack.c.h.b16 %v487
    %v864 = vunpack.c.l.b16 %v488
    %v865 = vunpack.c.h.b16 %v488
    %v866 = vunpack.c.l.b16 %v489
    %v867 = vunpack.c.h.b16 %v489
    %v868 = vunpack.c.l.b16 %v490
    %v869 = vunpack.c.h.b16 %v490
    %v870 = vunpack.c.l.b16 %v491
    %v871 = vunpack.c.h.b16 %v491
    %v872 = vunpack.c.l.b16 %v492
    %v873 = vunpack.c.h.b16 %v492
    %v874 = vunpack.c.l.b16 %v493
    %v875 = vunpack.c.h.b16 %v493
    %v876 = vunpack.c.l.b16 %v494
    %v877 = vunpack.c.h.b16 %v494
    %v878 = vunpack.c.l.b16 %v495
    %v879 = vunpack.c.h.b16 %v495
    %v880 = vunpack.c.l.b16 %v496
    %v881 = vunpack.c.h.b16 %v496
    %v882 = vunpack.c.l.b16 %v497
    %v883 = vunpack.c.h.b16 %v497
    %v884 = vunpack.c.l.b16 %v498
    %v885 = vunpack.c.h.b16 %v498
    %v886 = vunpack.c.l.b16 %v499
    %v887 = vunpack.c.h.b16 %v499
    %v888 = vunpack.c.l.b16 %v500
    %v889 = vunpack.c.h.b16 %v500
    %v890 = vunpack.c.l.b16 %v501
    %v891 = vunpack.c.h.b16 %v501
    %v892 = vunpack.c.l.b16 %v502
    %v893 = vunpack.c.h.b16 %v502
    %v894 = vunpack.c.l.b16 %v503
    %v895 = vunpack.c.h.b16 %v503
    %v896 = vunpack.c.l.b16 %v504
    %v897 = vunpack.c.h.b16 %v504
    %v898 = vunpack.c.l.b16 %v505
    %v899 = vunpack.c.h.b16 %v505
    %v900 = vunpack.c.l.b16 %v506
    %v901 = vunpack.c.h.b16 %v506
    %v902 = vunpack.c.l.b16 %v507
    %v903 = vunpack.c.h.b16 %v507
    %v904 = vunpack.c.l.b16 %v508
    %v905 = vunpack.c.h.b16 %v508
    %v906 = vunpack.c.l.b16 %v509
    %v907 = vunpack.c.h.b16 %v509
    %v908 = vunpack.c.l.b16 %v510
    %v909 = vunpack.c.h.b16 %v510
    %v910 = vunpack.c.l.b16 %v511
    %v911 = vunpack.c.h.b16 %v511
    %v912 = vunpack.c.l.b16 %v512
    %v913 = vunpack.c.h.b16 %v512
    %v914 = vunpack.c.l.b16 %v513
    %v915 = vunpack.c.h.b16 %v513
    %v916 = vunpack.c.l.b16 %v514
    %v917 = vunpack.c.h.b16 %v514
    %v918 = vunpack.c.l.b16 %v515
    %v919 = vunpack.c.h.b16 %v515
    %v920 = vunpack.c.l.b16 %v516
    %v921 = vunpack.c.h.b16 %v516
    %v922 = vunpack.c.l.b16 %v517
    %v923 = vunpack.c.h.b16 %v517
    %v924 = vunpack.c.l.b16 %v518
    %v925 = vunpack.c.h.b16 %v518
    %v926 = vunpack.c.l.b16 %v519
    %v927 = vunpack.c.h.b16 %v519
    %v928 = vunpack.c.l.b16 %v520
    %v929 = vunpack.c.h.b16 %v520
    %v930 = vunpack.c.l.b16 %v521
    %v931 = vunpack.c.h.b16 %v521
    %v932 = vunpack.c.l.b16 %v522
    %v933 = vunpack.c.h.b16 %v522
    %v934 = vpack.c.b16 %v682, %v678
    %v935 = vpack.c.b16 %v683, %v679
    %v936 = vpack.c.b16 %v684, %v680
    %v937 = vpack.c.b16 %v685, %v681
    %v938 = vpack.c.b16 %v690, %v686
    %v939 = vpack.c.b16 %v691, %v687
    %v940 = vpack.c.b16 %v692, %v688
    %v941 = vpack.c.b16 %v693, %v689
    %v942 = vpack.c.b16 %v698, %v694
    %v943 = vpack.c.b16 %v699, %v695
    %v944 = vpack.c.b16 %v700, %v696
    %v945 = vpack.c.b16 %v701, %v697
    %v946 = vpack.c.b16 %v706, %v702
    %v947 = vpack.c.b16 %v707, %v703
    %v948 = vpack.c.b16 %v708, %v704
    %v949 = vpack.c.b16 %v709, %v705
    %v950 = vpack.c.b16 %v714, %v710
    %v951 = vpack.c.b16 %v715, %v711
    %v952 = vpack.c.b16 %v716, %v712
    %v953 = vpack.c.b16 %v717, %v713
    %v954 = vpack.c.b16 %v722, %v718
    %v955 = vpack.c.b16 %v723, %v719
    %v956 = vpack.c.b16 %v724, %v720
    %v957 = vpack.c.b16 %v725, %v721
    %v958 = vpack.c.b16 %v730, %v726
    %v959 = vpack.c.b16 %v731, %v727
    %v960 = vpack.c.b16 %v732, %v728
    %v961 = vpack.c.b16 %v733, %v729
    %v962 = vpack.c.b16 %v738, %v734
    %v963 = vpack.c.b16 %v739, %v735
    %v964 = vpack.c.b16 %v740, %v736
    %v965 = vpack.c.b16 %v741, %v737
    %v966 = vpack.c.b16 %v746, %v742
    %v967 = vpack.c.b16 %v747, %v743
    %v968 = vpack.c.b16 %v748, %v744
    %v969 = vpack.c.b16 %v749, %v745
    %v970 = vpack.c.b16 %v754, %v750
    %v971 = vpack.c.b16 %v755, %v751
    %v972 = vpack.c.b16 %v756, %v752
    %v973 = vpack.c.b16 %v757, %v753
    %v974 = vpack.c.b16 %v762, %v758
    %v975 = vpack.c.b16 %v763, %v759
    %v976 = vpack.c.b16 %v764, %v760
    %v977 = vpack.c.b16 %v765, %v761
    %v978 = vpack.c.b16 %v770, %v766
    %v979 = vpack.c.b16 %v771, %v767
    %v980 = vpack.c.b16 %v772, %v768
    %v981 = vpack.c.b16 %v773, %v769
    %v982 = vpack.c.b16 %v778, %v774
    %v983 = vpack.c.b16 %v779, %v775
    %v984 = vpack.c.b16 %v780, %v776
    %v985 = vpack.c.b16 %v781, %v777
    %v986 = vpack.c.b16 %v786, %v782
    %v987 = vpack.c.b16 %v787, %v783
    %v988 = vpack.c.b16 %v788, %v784
    %v989 = vpack.c.b16 %v789, %v785
    %v990 = vpack.c.b16 %v794, %v790
    %v991 = vpack.c.b16 %v795, %v791
    %v992 = vpack.c.b16 %v796, %v792
    %v993 = vpack.c.b16 %v797, %v793
    %v994 = vpack.c.b16 %v802, %v798
    %v995 = vpack.c.b16 %v803, %v799
    %v996 = vpack.c.b16 %v804, %v800
    %v997 = vpack.c.b16 %v805, %v801
    %v998 = vpack.c.b16 %v810, %v806
    %v999 = vpack.c.b16 %v811, %v807
    %v1000 = vpack.c.b16 %v812, %v808
    %v1001 = vpack.c.b16 %v813, %v809
    %v1002 = vpack.c.b16 %v818, %v814
    %v1003 = vpack.c.b16 %v819, %v815
    %v1004 = vpack.c.b16 %v820, %v816
    %v1005 = vpack.c.b16 %v821, %v817
    %v1006 = vpack.c.b16 %v826, %v822
    %v1007 = vpack.c.b16 %v827, %v823
    %v1008 = vpack.c.b16 %v828, %v824
    %v1009 = vpack.c.b16 %v829, %v825
    %v1010 = vpack.c.b16 %v834, %v830
    %v1011 = vpack.c.b16 %v835, %v831
    %v1012 = vpack.c.b16 %v836, %v832
    %v1013 = vpack.c.b16 %v837, %v833
    %v1014 = vpack.c.b16 %v842, %v838
    %v1015 = vpack.c.b16 %v843, %v839
    %v1016 = vpack.c.b16 %v844, %v840
    %v1017 = vpack.c.b16 %v845, %v841
    %v1018 = vpack.c.b16 %v850, %v846
    %v1019 = vpack.c.b16 %v851, %v847
    %v1020 = vpack.c.b16 %v852, %v848
    %v1021 = vpack.c.b16 %v853, %v849
    %v1022 = vpack.c.b16 %v858, %v854
    %v1023 = vpack.c.b16 %v859, %v855
    %v1024 = vpack.c.b16 %v860, %v856
    %v1025 = vpack.c.b16 %v861, %v857
    %v1026 = vpack.c.b16 %v866, %v862
    %v1027 = vpack.c.b16 %v867, %v863
    %v1028 = vpack.c.b16 %v868, %v864
    %v1029 = vpack.c.b16 %v869, %v865
    %v1030 = vpack.c.b16 %v874, %v870
    %v1031 = vpack.c.b16 %v875, %v871
    %v1032 = vpack.c.b16 %v876, %v872
    %v1033 = vpack.c.b16 %v877, %v873
    %v1034 = vpack.c.b16 %v882, %v878
    %v1035 = vpack.c.b16 %v883, %v879
    %v1036 = vpack.c.b16 %v884, %v880
    %v1037 = vpack.c.b16 %v885, %v881
    %v1038 = vpack.c.b16 %v890, %v886
    %v1039 = vpack.c.b16 %v891, %v887
    %v1040 = vpack.c.b16 %v892, %v888
    %v1041 = vpack.c.b16 %v893, %v889
    %v1042 = vpack.c.b16 %v898, %v894
    %v1043 = vpack.c.b16 %v899, %v895
    %v1044 = vpack.c.b16 %v900, %v896
    %v1045 = vpack.c.b16 %v901, %v897
    %v1046 = vpack.c.b16 %v906, %v902
    %v1047 = vpack.c.b16 %v907, %v903
    %v1048 = vpack.c.b16 %v908, %v904
    %v1049 = vpack.c.b16 %v909, %v905
    %v1050 = vpack.c.b16 %v914, %v910
    %v1051 = vpack.c.b16 %v915, %v911
    %v1052 = vpack.c.b16 %v916, %v912
    %v1053 = vpack.c.b16 %v917, %v913
    %v1054 = vpack.c.b16 %v922, %v918
    %v1055 = vpack.c.b16 %v923, %v919
    %v1056 = vpack.c.b16 %v924, %v920
    %v1057 = vpack.c.b16 %v925, %v921
    %v1058 = vpack.c.b16 %v930, %v926
    %v1059 = vpack.c.b16 %v931, %v927
    %v1060 = vpack.c.b16 %v932, %v928
    %v1061 = vpack.c.b16 %v933, %v929
    %1190 = vmatprep.subr.bf16.mxu0 %v935
    %1191 = vmatpush1.bf16.msra.mxu0 %v934
    %1192 = vmatprep.subr.bf16.mxu0 %v939
    %1193 = vmatpush1.bf16.msra.mxu0 %v938
    %1194 = vmatprep.subr.bf16.mxu0 %v943
    %1195 = vmatpush1.bf16.msra.mxu0 %v942
    %1196 = vmatprep.subr.bf16.mxu0 %v947
    %1197 = vmatpush1.bf16.msra.mxu0 %v946
    %1198 = vmatprep.subr.bf16.mxu0 %v951
    %1199 = vmatpush1.bf16.msra.mxu0 %v950
    %1200 = vmatprep.subr.bf16.mxu0 %v955
    %1201 = vmatpush1.bf16.msra.mxu0 %v954
    %1202 = vmatprep.subr.bf16.mxu0 %v959
    %1203 = vmatpush1.bf16.msra.mxu0 %v958
    %1204 = vmatprep.subr.bf16.mxu0 %v963
    %1205 = vmatpush1.bf16.msra.mxu0 %v962
    %1206 = vmatprep.subr.bf16.mxu0 %v967
    %1207 = vmatpush1.bf16.msra.mxu0 %v966
    %1208 = vmatprep.subr.bf16.mxu0 %v971
    %1209 = vmatpush1.bf16.msra.mxu0 %v970
    %1210 = vmatprep.subr.bf16.mxu0 %v975
    %1211 = vmatpush1.bf16.msra.mxu0 %v974
    %1212 = vmatprep.subr.bf16.mxu0 %v979
    %1213 = vmatpush1.bf16.msra.mxu0 %v978
    %1214 = vmatprep.subr.bf16.mxu0 %v983
    %1215 = vmatpush1.bf16.msra.mxu0 %v982
    %1216 = vmatprep.subr.bf16.mxu0 %v987
    %1217 = vmatpush1.bf16.msra.mxu0 %v986
    %1218 = vmatprep.subr.bf16.mxu0 %v991
    %1219 = vmatpush1.bf16.msra.mxu0 %v990
    %1220 = vmatprep.subr.bf16.mxu0 %v995
    %1221 = vmatpush1.bf16.msra.mxu0 %v994
    %1222 = vmatprep.mubr.bf16.mxu0 %v526
    %1223 = vmatmul.mubr.bf16.gmra.mrb[0].mxu0 %v525
    %v1224 = vpop.f32.mrb[0].mxu0
    %v1225 = vadd.f32 %v533, %v1224
    %v1226 = vpop.f32.mrb[0].mxu0
    %v1227 = vadd.f32 %v537, %v1226
    %v1228 = vpop.f32.mrb[0].mxu0
    %v1229 = vadd.f32 %v533, %v1228
    %v1230 = vpop.f32.mrb[0].mxu0
    %v1231 = vadd.f32 %v537, %v1230
    %1232 = vdwg.mxu0
    %1233 = vmatprep.subr.bf16.mxu0 %v999
    %1234 = vmatpush1.bf16.msra.mxu0 %v998
    %1235 = vmatprep.subr.bf16.mxu0 %v1003
    %1236 = vmatpush1.bf16.msra.mxu0 %v1002
    %1237 = vmatprep.subr.bf16.mxu0 %v1007
    %1238 = vmatpush1.bf16.msra.mxu0 %v1006
    %1239 = vmatprep.subr.bf16.mxu0 %v1011
    %1240 = vmatpush1.bf16.msra.mxu0 %v1010
    %1241 = vmatprep.subr.bf16.mxu0 %v1015
    %1242 = vmatpush1.bf16.msra.mxu0 %v1014
    %1243 = vmatprep.subr.bf16.mxu0 %v1019
    %1244 = vmatpush1.bf16.msra.mxu0 %v1018
    %1245 = vmatprep.subr.bf16.mxu0 %v1023
    %1246 = vmatpush1.bf16.msra.mxu0 %v1022
    %1247 = vmatprep.subr.bf16.mxu0 %v1027
    %1248 = vmatpush1.bf16.msra.mxu0 %v1026
    %1249 = vmatprep.subr.bf16.mxu0 %v1031
    %1250 = vmatpush1.bf16.msra.mxu0 %v1030
    %1251 = vmatprep.subr.bf16.mxu0 %v1035
    %1252 = vmatpush1.bf16.msra.mxu0 %v1034
    %1253 = vmatprep.subr.bf16.mxu0 %v1039
    %1254 = vmatpush1.bf16.msra.mxu0 %v1038
    %1255 = vmatprep.subr.bf16.mxu0 %v1043
    %1256 = vmatpush1.bf16.msra.mxu0 %v1042
    %1257 = vmatprep.subr.bf16.mxu0 %v1047
    %1258 = vmatpush1.bf16.msra.mxu0 %v1046
    %1259 = vmatprep.subr.bf16.mxu0 %v1051
    %1260 = vmatpush1.bf16.msra.mxu0 %v1050
    %1261 = vmatprep.subr.bf16.mxu0 %v1055
    %1262 = vmatpush1.bf16.msra.mxu0 %v1054
    %1263 = vmatprep.subr.bf16.mxu0 %v1059
    %1264 = vmatpush1.bf16.msra.mxu0 %v1058
    %1265 = vmatprep.mubr.bf16.mxu0 %v528
    %1266 = vmatmul.mubr.bf16.gmra.mrb[0].mxu0 %v527
    %v1267 = vpop.f32.mrb[0].mxu0
    %v1268 = vadd.f32 %v1225, %v1267
    %v1269 = vpop.f32.mrb[0].mxu0
    %v1270 = vadd.f32 %v1227, %v1269
    %v1271 = vpop.f32.mrb[0].mxu0
    %v1272 = vadd.f32 %v1229, %v1271
    %v1273 = vpop.f32.mrb[0].mxu0
    %v1274 = vadd.f32 %v1231, %v1273
    %1275 = vdwg.mxu0
    %1276 = vmatprep.subr.bf16.mxu0 %v937
    %1277 = vmatpush1.bf16.msra.mxu0 %v936
    %1278 = vmatprep.subr.bf16.mxu0 %v941
    %1279 = vmatpush1.bf16.msra.mxu0 %v940
    %1280 = vmatprep.subr.bf16.mxu0 %v945
    %1281 = vmatpush1.bf16.msra.mxu0 %v944
    %1282 = vmatprep.subr.bf16.mxu0 %v949
    %1283 = vmatpush1.bf16.msra.mxu0 %v948
    %1284 = vmatprep.subr.bf16.mxu0 %v953
    %1285 = vmatpush1.bf16.msra.mxu0 %v952
    %1286 = vmatprep.subr.bf16.mxu0 %v957
    %1287 = vmatpush1.bf16.msra.mxu0 %v956
    %1288 = vmatprep.subr.bf16.mxu0 %v961
    %1289 = vmatpush1.bf16.msra.mxu0 %v960
    %1290 = vmatprep.subr.bf16.mxu0 %v965
    %1291 = vmatpush1.bf16.msra.mxu0 %v964
    %1292 = vmatprep.subr.bf16.mxu0 %v969
    %1293 = vmatpush1.bf16.msra.mxu0 %v968
    %1294 = vmatprep.subr.bf16.mxu0 %v973
    %1295 = vmatpush1.bf16.msra.mxu0 %v972
    %1296 = vmatprep.subr.bf16.mxu0 %v977
    %1297 = vmatpush1.bf16.msra.mxu0 %v976
    %1298 = vmatprep.subr.bf16.mxu0 %v981
    %1299 = vmatpush1.bf16.msra.mxu0 %v980
    %1300 = vmatprep.subr.bf16.mxu0 %v985
    %1301 = vmatpush1.bf16.msra.mxu0 %v984
    %1302 = vmatprep.subr.bf16.mxu0 %v989
    %1303 = vmatpush1.bf16.msra.mxu0 %v988
    %1304 = vmatprep.subr.bf16.mxu0 %v993
    %1305 = vmatpush1.bf16.msra.mxu0 %v992
    %1306 = vmatprep.subr.bf16.mxu0 %v997
    %1307 = vmatpush1.bf16.msra.mxu0 %v996
    %1308 = vmatprep.mubr.bf16.mxu0 %v526
    %1309 = vmatmul.mubr.bf16.gmra.mrb[0].mxu0 %v525
    %v1310 = vpop.f32.mrb[0].mxu0
    %v1311 = vadd.f32 %v541, %v1310
    %v1312 = vpop.f32.mrb[0].mxu0
    %v1313 = vadd.f32 %v545, %v1312
    %v1314 = vpop.f32.mrb[0].mxu0
    %v1315 = vadd.f32 %v541, %v1314
    %v1316 = vpop.f32.mrb[0].mxu0
    %v1317 = vadd.f32 %v545, %v1316
    %1318 = vdwg.mxu0
    %1319 = vmatprep.subr.bf16.mxu0 %v1001
    %1320 = vmatpush1.bf16.msra.mxu0 %v1000
    %1321 = vmatprep.subr.bf16.mxu0 %v1005
    %1322 = vmatpush1.bf16.msra.mxu0 %v1004
    %1323 = vmatprep.subr.bf16.mxu0 %v1009
    %1324 = vmatpush1.bf16.msra.mxu0 %v1008
    %1325 = vmatprep.subr.bf16.mxu0 %v1013
    %1326 = vmatpush1.bf16.msra.mxu0 %v1012
    %1327 = vmatprep.subr.bf16.mxu0 %v1017
    %1328 = vmatpush1.bf16.msra.mxu0 %v1016
    %1329 = vmatprep.subr.bf16.mxu0 %v1021
    %1330 = vmatpush1.bf16.msra.mxu0 %v1020
    %1331 = vmatprep.subr.bf16.mxu0 %v1025
    %1332 = vmatpush1.bf16.msra.mxu0 %v1024
    %1333 = vmatprep.subr.bf16.mxu0 %v1029
    %1334 = vmatpush1.bf16.msra.mxu0 %v1028
    %1335 = vmatprep.subr.bf16.mxu0 %v1033
    %1336 = vmatpush1.bf16.msra.mxu0 %v1032
    %1337 = vmatprep.subr.bf16.mxu0 %v1037
    %1338 = vmatpush1.bf16.msra.mxu0 %v1036
    %1339 = vmatprep.subr.bf16.mxu0 %v1041
    %1340 = vmatpush1.bf16.msra.mxu0 %v1040
    %1341 = vmatprep.subr.bf16.mxu0 %v1045
    %1342 = vmatpush1.bf16.msra.mxu0 %v1044
    %1343 = vmatprep.subr.bf16.mxu0 %v1049
    %1344 = vmatpush1.bf16.msra.mxu0 %v1048
    %1345 = vmatprep.subr.bf16.mxu0 %v1053
    %1346 = vmatpush1.bf16.msra.mxu0 %v1052
    %1347 = vmatprep.subr.bf16.mxu0 %v1057
    %1348 = vmatpush1.bf16.msra.mxu0 %v1056
    %1349 = vmatprep.subr.bf16.mxu0 %v1061
    %1350 = vmatpush1.bf16.msra.mxu0 %v1060
    %1351 = vmatprep.mubr.bf16.mxu0 %v528
    %1352 = vmatmul.mubr.bf16.gmra.mrb[0].mxu0 %v527
    %v1353 = vpop.f32.mrb[0].mxu0
    %v1354 = vadd.f32 %v1311, %v1353
    %v1355 = vpop.f32.mrb[0].mxu0
    %v1356 = vadd.f32 %v1313, %v1355
    %v1357 = vpop.f32.mrb[0].mxu0
    %v1358 = vadd.f32 %v1315, %v1357
    %v1359 = vpop.f32.mrb[0].mxu0
    %v1360 = vadd.f32 %v1317, %v1359
    %1361 = vdwg.mxu0
    %v1362 = vmax.f32 %v1268, 0.0
    %v1363 = vmax.f32 %v1270, 0.0
    %v1364 = vmax.f32 %v1354, 0.0
    %v1365 = vmax.f32 %v1356, 0.0
    %v1366 = vmax.f32 %v1272, 0.0
    %v1367 = vmax.f32 %v1274, 0.0
    %v1368 = vmax.f32 %v1358, 0.0
    %v1369 = vmax.f32 %v1360, 0.0
    %s1370 = scalar_lea.vmem [#allocation4], 1024
    %v1371 = vld [vmem:[%s1370] sm:$0xff]
    %v1372 = vld [vmem:[%s1370 + $0x8] sm:$0xff]
    %v1373 = vld [vmem:[%s1370 + $0x10] sm:$0xff]
    %v1374 = vld [vmem:[%s1370 + $0x18] sm:$0xff]
    %v1375 = vld [vmem:[%s1370 + $0x20] sm:$0xff]
    %v1376 = vld [vmem:[%s1370 + $0x28] sm:$0xff]
    %v1377 = vld [vmem:[%s1370 + $0x30] sm:$0xff]
    %v1378 = vld [vmem:[%s1370 + $0x38] sm:$0xff]
    %v1379 = vld [vmem:[%s1370 + $0x40] sm:$0xff]
    %v1380 = vld [vmem:[%s1370 + $0x48] sm:$0xff]
    %v1381 = vld [vmem:[%s1370 + $0x50] sm:$0xff]
    %v1382 = vld [vmem:[%s1370 + $0x58] sm:$0xff]
    %v1383 = vld [vmem:[%s1370 + $0x60] sm:$0xff]
    %v1384 = vld [vmem:[%s1370 + $0x68] sm:$0xff]
    %v1385 = vld [vmem:[%s1370 + $0x70] sm:$0xff]
    %v1386 = vld [vmem:[%s1370 + $0x78] sm:$0xff]
    %v1387 = vld [vmem:[%s1370 + $0x80] sm:$0xff]
    %v1388 = vld [vmem:[%s1370 + $0x88] sm:$0xff]
    %v1389 = vld [vmem:[%s1370 + $0x90] sm:$0xff]
    %v1390 = vld [vmem:[%s1370 + $0x98] sm:$0xff]
    %v1391 = vld [vmem:[%s1370 + $0xa0] sm:$0xff]
    %v1392 = vld [vmem:[%s1370 + $0xa8] sm:$0xff]
    %v1393 = vld [vmem:[%s1370 + $0xb0] sm:$0xff]
    %v1394 = vld [vmem:[%s1370 + $0xb8] sm:$0xff]
    %v1395 = vld [vmem:[%s1370 + $0xc0] sm:$0xff]
    %v1396 = vld [vmem:[%s1370 + $0xc8] sm:$0xff]
    %v1397 = vld [vmem:[%s1370 + $0xd0] sm:$0xff]
    %v1398 = vld [vmem:[%s1370 + $0xd8] sm:$0xff]
    %v1399 = vld [vmem:[%s1370 + $0xe0] sm:$0xff]
    %v1400 = vld [vmem:[%s1370 + $0xe8] sm:$0xff]
    %v1401 = vld [vmem:[%s1370 + $0xf0] sm:$0xff]
    %v1402 = vld [vmem:[%s1370 + $0xf8] sm:$0xff]
    %v1403 = vld [vmem:[%s1370 + $0x100] sm:$0xff]
    %v1404 = vld [vmem:[%s1370 + $0x108] sm:$0xff]
    %v1405 = vld [vmem:[%s1370 + $0x110] sm:$0xff]
    %v1406 = vld [vmem:[%s1370 + $0x118] sm:$0xff]
    %v1407 = vld [vmem:[%s1370 + $0x120] sm:$0xff]
    %v1408 = vld [vmem:[%s1370 + $0x128] sm:$0xff]
    %v1409 = vld [vmem:[%s1370 + $0x130] sm:$0xff]
    %v1410 = vld [vmem:[%s1370 + $0x138] sm:$0xff]
    %v1411 = vld [vmem:[%s1370 + $0x140] sm:$0xff]
    %v1412 = vld [vmem:[%s1370 + $0x148] sm:$0xff]
    %v1413 = vld [vmem:[%s1370 + $0x150] sm:$0xff]
    %v1414 = vld [vmem:[%s1370 + $0x158] sm:$0xff]
    %v1415 = vld [vmem:[%s1370 + $0x160] sm:$0xff]
    %v1416 = vld [vmem:[%s1370 + $0x168] sm:$0xff]
    %v1417 = vld [vmem:[%s1370 + $0x170] sm:$0xff]
    %v1418 = vld [vmem:[%s1370 + $0x178] sm:$0xff]
    %v1419 = vld [vmem:[%s1370 + $0x180] sm:$0xff]
    %v1420 = vld [vmem:[%s1370 + $0x188] sm:$0xff]
    %v1421 = vld [vmem:[%s1370 + $0x190] sm:$0xff]
    %v1422 = vld [vmem:[%s1370 + $0x198] sm:$0xff]
    %v1423 = vld [vmem:[%s1370 + $0x1a0] sm:$0xff]
    %v1424 = vld [vmem:[%s1370 + $0x1a8] sm:$0xff]
    %v1425 = vld [vmem:[%s1370 + $0x1b0] sm:$0xff]
    %v1426 = vld [vmem:[%s1370 + $0x1b8] sm:$0xff]
    %v1427 = vld [vmem:[%s1370 + $0x1c0] sm:$0xff]
    %v1428 = vld [vmem:[%s1370 + $0x1c8] sm:$0xff]
    %v1429 = vld [vmem:[%s1370 + $0x1d0] sm:$0xff]
    %v1430 = vld [vmem:[%s1370 + $0x1d8] sm:$0xff]
    %v1431 = vld [vmem:[%s1370 + $0x1e0] sm:$0xff]
    %v1432 = vld [vmem:[%s1370 + $0x1e8] sm:$0xff]
    %v1433 = vld [vmem:[%s1370 + $0x1f0] sm:$0xff]
    %v1434 = vld [vmem:[%s1370 + $0x1f8] sm:$0xff]
    %v1435 = vld [vmem:[%s1370 + $0x200] sm:$0xff]
    %v1436 = vld [vmem:[%s1370 + $0x208] sm:$0xff]
    %v1437 = vld [vmem:[%s1370 + $0x210] sm:$0xff]
    %v1438 = vld [vmem:[%s1370 + $0x218] sm:$0xff]
    %v1439 = vld [vmem:[%s1370 + $0x220] sm:$0xff]
    %v1440 = vld [vmem:[%s1370 + $0x228] sm:$0xff]
    %v1441 = vld [vmem:[%s1370 + $0x230] sm:$0xff]
    %v1442 = vld [vmem:[%s1370 + $0x238] sm:$0xff]
    %v1443 = vld [vmem:[%s1370 + $0x240] sm:$0xff]
    %v1444 = vld [vmem:[%s1370 + $0x248] sm:$0xff]
    %v1445 = vld [vmem:[%s1370 + $0x250] sm:$0xff]
    %v1446 = vld [vmem:[%s1370 + $0x258] sm:$0xff]
    %v1447 = vld [vmem:[%s1370 + $0x260] sm:$0xff]
    %v1448 = vld [vmem:[%s1370 + $0x268] sm:$0xff]
    %v1449 = vld [vmem:[%s1370 + $0x270] sm:$0xff]
    %v1450 = vld [vmem:[%s1370 + $0x278] sm:$0xff]
    %v1451 = vld [vmem:[%s1370 + $0x280] sm:$0xff]
    %v1452 = vld [vmem:[%s1370 + $0x288] sm:$0xff]
    %v1453 = vld [vmem:[%s1370 + $0x290] sm:$0xff]
    %v1454 = vld [vmem:[%s1370 + $0x298] sm:$0xff]
    %v1455 = vld [vmem:[%s1370 + $0x2a0] sm:$0xff]
    %v1456 = vld [vmem:[%s1370 + $0x2a8] sm:$0xff]
    %v1457 = vld [vmem:[%s1370 + $0x2b0] sm:$0xff]
    %v1458 = vld [vmem:[%s1370 + $0x2b8] sm:$0xff]
    %v1459 = vld [vmem:[%s1370 + $0x2c0] sm:$0xff]
    %v1460 = vld [vmem:[%s1370 + $0x2c8] sm:$0xff]
    %v1461 = vld [vmem:[%s1370 + $0x2d0] sm:$0xff]
    %v1462 = vld [vmem:[%s1370 + $0x2d8] sm:$0xff]
    %v1463 = vld [vmem:[%s1370 + $0x2e0] sm:$0xff]
    %v1464 = vld [vmem:[%s1370 + $0x2e8] sm:$0xff]
    %v1465 = vld [vmem:[%s1370 + $0x2f0] sm:$0xff]
    %v1466 = vld [vmem:[%s1370 + $0x2f8] sm:$0xff]
    %v1467 = vld [vmem:[%s1370 + $0x300] sm:$0xff]
    %v1468 = vld [vmem:[%s1370 + $0x308] sm:$0xff]
    %v1469 = vld [vmem:[%s1370 + $0x310] sm:$0xff]
    %v1470 = vld [vmem:[%s1370 + $0x318] sm:$0xff]
    %v1471 = vld [vmem:[%s1370 + $0x320] sm:$0xff]
    %v1472 = vld [vmem:[%s1370 + $0x328] sm:$0xff]
    %v1473 = vld [vmem:[%s1370 + $0x330] sm:$0xff]
    %v1474 = vld [vmem:[%s1370 + $0x338] sm:$0xff]
    %v1475 = vld [vmem:[%s1370 + $0x340] sm:$0xff]
    %v1476 = vld [vmem:[%s1370 + $0x348] sm:$0xff]
    %v1477 = vld [vmem:[%s1370 + $0x350] sm:$0xff]
    %v1478 = vld [vmem:[%s1370 + $0x358] sm:$0xff]
    %v1479 = vld [vmem:[%s1370 + $0x360] sm:$0xff]
    %v1480 = vld [vmem:[%s1370 + $0x368] sm:$0xff]
    %v1481 = vld [vmem:[%s1370 + $0x370] sm:$0xff]
    %v1482 = vld [vmem:[%s1370 + $0x378] sm:$0xff]
    %v1483 = vld [vmem:[%s1370 + $0x380] sm:$0xff]
    %v1484 = vld [vmem:[%s1370 + $0x388] sm:$0xff]
    %v1485 = vld [vmem:[%s1370 + $0x390] sm:$0xff]
    %v1486 = vld [vmem:[%s1370 + $0x398] sm:$0xff]
    %v1487 = vld [vmem:[%s1370 + $0x3a0] sm:$0xff]
    %v1488 = vld [vmem:[%s1370 + $0x3a8] sm:$0xff]
    %v1489 = vld [vmem:[%s1370 + $0x3b0] sm:$0xff]
    %v1490 = vld [vmem:[%s1370 + $0x3b8] sm:$0xff]
    %v1491 = vld [vmem:[%s1370 + $0x3c0] sm:$0xff]
    %v1492 = vld [vmem:[%s1370 + $0x3c8] sm:$0xff]
    %v1493 = vld [vmem:[%s1370 + $0x3d0] sm:$0xff]
    %v1494 = vld [vmem:[%s1370 + $0x3d8] sm:$0xff]
    %v1495 = vld [vmem:[%s1370 + $0x3e0] sm:$0xff]
    %v1496 = vld [vmem:[%s1370 + $0x3e8] sm:$0xff]
    %v1497 = vld [vmem:[%s1370 + $0x3f0] sm:$0xff]
    %v1498 = vld [vmem:[%s1370 + $0x3f8] sm:$0xff]
    %s1499 = scalar_lea.vmem [#allocation7], 2
    %v1500 = vld [vmem:[%s1499] ss:$8 sm:$0xf]
    %v1501 = vpack.c.bf16 %v1366, %v1362
    %v1502 = vpack.c.bf16 %v1367, %v1363
    %v1503 = vpack.c.bf16 %v1368, %v1364
    %v1504 = vpack.c.bf16 %v1369, %v1365
    %v1506 = vlaneseq
    %v1507 = vshrl.u32 %v1506, 7
    %v1508 = vsub.s32 0, %v1507
    %v1509 = vrot.slane %v1500, %v1508
    %v1510 = vlaneseq
    %v1511 = vshrl.u32 %v1510, 7
    %v1512 = vsub.s32 1, %v1511
    %v1513 = vrot.slane %v1500, %v1512
    %v1514 = vlaneseq
    %v1515 = vshrl.u32 %v1514, 7
    %v1516 = vsub.s32 2, %v1515
    %v1517 = vrot.slane %v1500, %v1516
    %v1518 = vlaneseq
    %v1519 = vshrl.u32 %v1518, 7
    %v1520 = vsub.s32 3, %v1519
    %v1521 = vrot.slane %v1500, %v1520
    %v1654 = vunpack.c.l.b16 %v1371
    %v1655 = vunpack.c.h.b16 %v1371
    %v1656 = vunpack.c.l.b16 %v1372
    %v1657 = vunpack.c.h.b16 %v1372
    %v1658 = vunpack.c.l.b16 %v1373
    %v1659 = vunpack.c.h.b16 %v1373
    %v1660 = vunpack.c.l.b16 %v1374
    %v1661 = vunpack.c.h.b16 %v1374
    %v1662 = vunpack.c.l.b16 %v1375
    %v1663 = vunpack.c.h.b16 %v1375
    %v1664 = vunpack.c.l.b16 %v1376
    %v1665 = vunpack.c.h.b16 %v1376
    %v1666 = vunpack.c.l.b16 %v1377
    %v1667 = vunpack.c.h.b16 %v1377
    %v1668 = vunpack.c.l.b16 %v1378
    %v1669 = vunpack.c.h.b16 %v1378
    %v1670 = vunpack.c.l.b16 %v1379
    %v1671 = vunpack.c.h.b16 %v1379
    %v1672 = vunpack.c.l.b16 %v1380
    %v1673 = vunpack.c.h.b16 %v1380
    %v1674 = vunpack.c.l.b16 %v1381
    %v1675 = vunpack.c.h.b16 %v1381
    %v1676 = vunpack.c.l.b16 %v1382
    %v1677 = vunpack.c.h.b16 %v1382
    %v1678 = vunpack.c.l.b16 %v1383
    %v1679 = vunpack.c.h.b16 %v1383
    %v1680 = vunpack.c.l.b16 %v1384
    %v1681 = vunpack.c.h.b16 %v1384
    %v1682 = vunpack.c.l.b16 %v1385
    %v1683 = vunpack.c.h.b16 %v1385
    %v1684 = vunpack.c.l.b16 %v1386
    %v1685 = vunpack.c.h.b16 %v1386
    %v1686 = vunpack.c.l.b16 %v1387
    %v1687 = vunpack.c.h.b16 %v1387
    %v1688 = vunpack.c.l.b16 %v1388
    %v1689 = vunpack.c.h.b16 %v1388
    %v1690 = vunpack.c.l.b16 %v1389
    %v1691 = vunpack.c.h.b16 %v1389
    %v1692 = vunpack.c.l.b16 %v1390
    %v1693 = vunpack.c.h.b16 %v1390
    %v1694 = vunpack.c.l.b16 %v1391
    %v1695 = vunpack.c.h.b16 %v1391
    %v1696 = vunpack.c.l.b16 %v1392
    %v1697 = vunpack.c.h.b16 %v1392
    %v1698 = vunpack.c.l.b16 %v1393
    %v1699 = vunpack.c.h.b16 %v1393
    %v1700 = vunpack.c.l.b16 %v1394
    %v1701 = vunpack.c.h.b16 %v1394
    %v1702 = vunpack.c.l.b16 %v1395
    %v1703 = vunpack.c.h.b16 %v1395
    %v1704 = vunpack.c.l.b16 %v1396
    %v1705 = vunpack.c.h.b16 %v1396
    %v1706 = vunpack.c.l.b16 %v1397
    %v1707 = vunpack.c.h.b16 %v1397
    %v1708 = vunpack.c.l.b16 %v1398
    %v1709 = vunpack.c.h.b16 %v1398
    %v1710 = vunpack.c.l.b16 %v1399
    %v1711 = vunpack.c.h.b16 %v1399
    %v1712 = vunpack.c.l.b16 %v1400
    %v1713 = vunpack.c.h.b16 %v1400
    %v1714 = vunpack.c.l.b16 %v1401
    %v1715 = vunpack.c.h.b16 %v1401
    %v1716 = vunpack.c.l.b16 %v1402
    %v1717 = vunpack.c.h.b16 %v1402
    %v1718 = vunpack.c.l.b16 %v1403
    %v1719 = vunpack.c.h.b16 %v1403
    %v1720 = vunpack.c.l.b16 %v1404
    %v1721 = vunpack.c.h.b16 %v1404
    %v1722 = vunpack.c.l.b16 %v1405
    %v1723 = vunpack.c.h.b16 %v1405
    %v1724 = vunpack.c.l.b16 %v1406
    %v1725 = vunpack.c.h.b16 %v1406
    %v1726 = vunpack.c.l.b16 %v1407
    %v1727 = vunpack.c.h.b16 %v1407
    %v1728 = vunpack.c.l.b16 %v1408
    %v1729 = vunpack.c.h.b16 %v1408
    %v1730 = vunpack.c.l.b16 %v1409
    %v1731 = vunpack.c.h.b16 %v1409
    %v1732 = vunpack.c.l.b16 %v1410
    %v1733 = vunpack.c.h.b16 %v1410
    %v1734 = vunpack.c.l.b16 %v1411
    %v1735 = vunpack.c.h.b16 %v1411
    %v1736 = vunpack.c.l.b16 %v1412
    %v1737 = vunpack.c.h.b16 %v1412
    %v1738 = vunpack.c.l.b16 %v1413
    %v1739 = vunpack.c.h.b16 %v1413
    %v1740 = vunpack.c.l.b16 %v1414
    %v1741 = vunpack.c.h.b16 %v1414
    %v1742 = vunpack.c.l.b16 %v1415
    %v1743 = vunpack.c.h.b16 %v1415
    %v1744 = vunpack.c.l.b16 %v1416
    %v1745 = vunpack.c.h.b16 %v1416
    %v1746 = vunpack.c.l.b16 %v1417
    %v1747 = vunpack.c.h.b16 %v1417
    %v1748 = vunpack.c.l.b16 %v1418
    %v1749 = vunpack.c.h.b16 %v1418
    %v1750 = vunpack.c.l.b16 %v1419
    %v1751 = vunpack.c.h.b16 %v1419
    %v1752 = vunpack.c.l.b16 %v1420
    %v1753 = vunpack.c.h.b16 %v1420
    %v1754 = vunpack.c.l.b16 %v1421
    %v1755 = vunpack.c.h.b16 %v1421
    %v1756 = vunpack.c.l.b16 %v1422
    %v1757 = vunpack.c.h.b16 %v1422
    %v1758 = vunpack.c.l.b16 %v1423
    %v1759 = vunpack.c.h.b16 %v1423
    %v1760 = vunpack.c.l.b16 %v1424
    %v1761 = vunpack.c.h.b16 %v1424
    %v1762 = vunpack.c.l.b16 %v1425
    %v1763 = vunpack.c.h.b16 %v1425
    %v1764 = vunpack.c.l.b16 %v1426
    %v1765 = vunpack.c.h.b16 %v1426
    %v1766 = vunpack.c.l.b16 %v1427
    %v1767 = vunpack.c.h.b16 %v1427
    %v1768 = vunpack.c.l.b16 %v1428
    %v1769 = vunpack.c.h.b16 %v1428
    %v1770 = vunpack.c.l.b16 %v1429
    %v1771 = vunpack.c.h.b16 %v1429
    %v1772 = vunpack.c.l.b16 %v1430
    %v1773 = vunpack.c.h.b16 %v1430
    %v1774 = vunpack.c.l.b16 %v1431
    %v1775 = vunpack.c.h.b16 %v1431
    %v1776 = vunpack.c.l.b16 %v1432
    %v1777 = vunpack.c.h.b16 %v1432
    %v1778 = vunpack.c.l.b16 %v1433
    %v1779 = vunpack.c.h.b16 %v1433
    %v1780 = vunpack.c.l.b16 %v1434
    %v1781 = vunpack.c.h.b16 %v1434
    %v1782 = vunpack.c.l.b16 %v1435
    %v1783 = vunpack.c.h.b16 %v1435
    %v1784 = vunpack.c.l.b16 %v1436
    %v1785 = vunpack.c.h.b16 %v1436
    %v1786 = vunpack.c.l.b16 %v1437
    %v1787 = vunpack.c.h.b16 %v1437
    %v1788 = vunpack.c.l.b16 %v1438
    %v1789 = vunpack.c.h.b16 %v1438
    %v1790 = vunpack.c.l.b16 %v1439
    %v1791 = vunpack.c.h.b16 %v1439
    %v1792 = vunpack.c.l.b16 %v1440
    %v1793 = vunpack.c.h.b16 %v1440
    %v1794 = vunpack.c.l.b16 %v1441
    %v1795 = vunpack.c.h.b16 %v1441
    %v1796 = vunpack.c.l.b16 %v1442
    %v1797 = vunpack.c.h.b16 %v1442
    %v1798 = vunpack.c.l.b16 %v1443
    %v1799 = vunpack.c.h.b16 %v1443
    %v1800 = vunpack.c.l.b16 %v1444
    %v1801 = vunpack.c.h.b16 %v1444
    %v1802 = vunpack.c.l.b16 %v1445
    %v1803 = vunpack.c.h.b16 %v1445
    %v1804 = vunpack.c.l.b16 %v1446
    %v1805 = vunpack.c.h.b16 %v1446
    %v1806 = vunpack.c.l.b16 %v1447
    %v1807 = vunpack.c.h.b16 %v1447
    %v1808 = vunpack.c.l.b16 %v1448
    %v1809 = vunpack.c.h.b16 %v1448
    %v1810 = vunpack.c.l.b16 %v1449
    %v1811 = vunpack.c.h.b16 %v1449
    %v1812 = vunpack.c.l.b16 %v1450
    %v1813 = vunpack.c.h.b16 %v1450
    %v1814 = vunpack.c.l.b16 %v1451
    %v1815 = vunpack.c.h.b16 %v1451
    %v1816 = vunpack.c.l.b16 %v1452
    %v1817 = vunpack.c.h.b16 %v1452
    %v1818 = vunpack.c.l.b16 %v1453
    %v1819 = vunpack.c.h.b16 %v1453
    %v1820 = vunpack.c.l.b16 %v1454
    %v1821 = vunpack.c.h.b16 %v1454
    %v1822 = vunpack.c.l.b16 %v1455
    %v1823 = vunpack.c.h.b16 %v1455
    %v1824 = vunpack.c.l.b16 %v1456
    %v1825 = vunpack.c.h.b16 %v1456
    %v1826 = vunpack.c.l.b16 %v1457
    %v1827 = vunpack.c.h.b16 %v1457
    %v1828 = vunpack.c.l.b16 %v1458
    %v1829 = vunpack.c.h.b16 %v1458
    %v1830 = vunpack.c.l.b16 %v1459
    %v1831 = vunpack.c.h.b16 %v1459
    %v1832 = vunpack.c.l.b16 %v1460
    %v1833 = vunpack.c.h.b16 %v1460
    %v1834 = vunpack.c.l.b16 %v1461
    %v1835 = vunpack.c.h.b16 %v1461
    %v1836 = vunpack.c.l.b16 %v1462
    %v1837 = vunpack.c.h.b16 %v1462
    %v1838 = vunpack.c.l.b16 %v1463
    %v1839 = vunpack.c.h.b16 %v1463
    %v1840 = vunpack.c.l.b16 %v1464
    %v1841 = vunpack.c.h.b16 %v1464
    %v1842 = vunpack.c.l.b16 %v1465
    %v1843 = vunpack.c.h.b16 %v1465
    %v1844 = vunpack.c.l.b16 %v1466
    %v1845 = vunpack.c.h.b16 %v1466
    %v1846 = vunpack.c.l.b16 %v1467
    %v1847 = vunpack.c.h.b16 %v1467
    %v1848 = vunpack.c.l.b16 %v1468
    %v1849 = vunpack.c.h.b16 %v1468
    %v1850 = vunpack.c.l.b16 %v1469
    %v1851 = vunpack.c.h.b16 %v1469
    %v1852 = vunpack.c.l.b16 %v1470
    %v1853 = vunpack.c.h.b16 %v1470
    %v1854 = vunpack.c.l.b16 %v1471
    %v1855 = vunpack.c.h.b16 %v1471
    %v1856 = vunpack.c.l.b16 %v1472
    %v1857 = vunpack.c.h.b16 %v1472
    %v1858 = vunpack.c.l.b16 %v1473
    %v1859 = vunpack.c.h.b16 %v1473
    %v1860 = vunpack.c.l.b16 %v1474
    %v1861 = vunpack.c.h.b16 %v1474
    %v1862 = vunpack.c.l.b16 %v1475
    %v1863 = vunpack.c.h.b16 %v1475
    %v1864 = vunpack.c.l.b16 %v1476
    %v1865 = vunpack.c.h.b16 %v1476
    %v1866 = vunpack.c.l.b16 %v1477
    %v1867 = vunpack.c.h.b16 %v1477
    %v1868 = vunpack.c.l.b16 %v1478
    %v1869 = vunpack.c.h.b16 %v1478
    %v1870 = vunpack.c.l.b16 %v1479
    %v1871 = vunpack.c.h.b16 %v1479
    %v1872 = vunpack.c.l.b16 %v1480
    %v1873 = vunpack.c.h.b16 %v1480
    %v1874 = vunpack.c.l.b16 %v1481
    %v1875 = vunpack.c.h.b16 %v1481
    %v1876 = vunpack.c.l.b16 %v1482
    %v1877 = vunpack.c.h.b16 %v1482
    %v1878 = vunpack.c.l.b16 %v1483
    %v1879 = vunpack.c.h.b16 %v1483
    %v1880 = vunpack.c.l.b16 %v1484
    %v1881 = vunpack.c.h.b16 %v1484
    %v1882 = vunpack.c.l.b16 %v1485
    %v1883 = vunpack.c.h.b16 %v1485
    %v1884 = vunpack.c.l.b16 %v1486
    %v1885 = vunpack.c.h.b16 %v1486
    %v1886 = vunpack.c.l.b16 %v1487
    %v1887 = vunpack.c.h.b16 %v1487
    %v1888 = vunpack.c.l.b16 %v1488
    %v1889 = vunpack.c.h.b16 %v1488
    %v1890 = vunpack.c.l.b16 %v1489
    %v1891 = vunpack.c.h.b16 %v1489
    %v1892 = vunpack.c.l.b16 %v1490
    %v1893 = vunpack.c.h.b16 %v1490
    %v1894 = vunpack.c.l.b16 %v1491
    %v1895 = vunpack.c.h.b16 %v1491
    %v1896 = vunpack.c.l.b16 %v1492
    %v1897 = vunpack.c.h.b16 %v1492
    %v1898 = vunpack.c.l.b16 %v1493
    %v1899 = vunpack.c.h.b16 %v1493
    %v1900 = vunpack.c.l.b16 %v1494
    %v1901 = vunpack.c.h.b16 %v1494
    %v1902 = vunpack.c.l.b16 %v1495
    %v1903 = vunpack.c.h.b16 %v1495
    %v1904 = vunpack.c.l.b16 %v1496
    %v1905 = vunpack.c.h.b16 %v1496
    %v1906 = vunpack.c.l.b16 %v1497
    %v1907 = vunpack.c.h.b16 %v1497
    %v1908 = vunpack.c.l.b16 %v1498
    %v1909 = vunpack.c.h.b16 %v1498
    %v1910 = vpack.c.b16 %v1658, %v1654
    %v1911 = vpack.c.b16 %v1659, %v1655
    %v1912 = vpack.c.b16 %v1660, %v1656
    %v1913 = vpack.c.b16 %v1661, %v1657
    %v1914 = vpack.c.b16 %v1666, %v1662
    %v1915 = vpack.c.b16 %v1667, %v1663
    %v1916 = vpack.c.b16 %v1668, %v1664
    %v1917 = vpack.c.b16 %v1669, %v1665
    %v1918 = vpack.c.b16 %v1674, %v1670
    %v1919 = vpack.c.b16 %v1675, %v1671
    %v1920 = vpack.c.b16 %v1676, %v1672
    %v1921 = vpack.c.b16 %v1677, %v1673
    %v1922 = vpack.c.b16 %v1682, %v1678
    %v1923 = vpack.c.b16 %v1683, %v1679
    %v1924 = vpack.c.b16 %v1684, %v1680
    %v1925 = vpack.c.b16 %v1685, %v1681
    %v1926 = vpack.c.b16 %v1690, %v1686
    %v1927 = vpack.c.b16 %v1691, %v1687
    %v1928 = vpack.c.b16 %v1692, %v1688
    %v1929 = vpack.c.b16 %v1693, %v1689
    %v1930 = vpack.c.b16 %v1698, %v1694
    %v1931 = vpack.c.b16 %v1699, %v1695
    %v1932 = vpack.c.b16 %v1700, %v1696
    %v1933 = vpack.c.b16 %v1701, %v1697
    %v1934 = vpack.c.b16 %v1706, %v1702
    %v1935 = vpack.c.b16 %v1707, %v1703
    %v1936 = vpack.c.b16 %v1708, %v1704
    %v1937 = vpack.c.b16 %v1709, %v1705
    %v1938 = vpack.c.b16 %v1714, %v1710
    %v1939 = vpack.c.b16 %v1715, %v1711
    %v1940 = vpack.c.b16 %v1716, %v1712
    %v1941 = vpack.c.b16 %v1717, %v1713
    %v1942 = vpack.c.b16 %v1722, %v1718
    %v1943 = vpack.c.b16 %v1723, %v1719
    %v1944 = vpack.c.b16 %v1724, %v1720
    %v1945 = vpack.c.b16 %v1725, %v1721
    %v1946 = vpack.c.b16 %v1730, %v1726
    %v1947 = vpack.c.b16 %v1731, %v1727
    %v1948 = vpack.c.b16 %v1732, %v1728
    %v1949 = vpack.c.b16 %v1733, %v1729
    %v1950 = vpack.c.b16 %v1738, %v1734
    %v1951 = vpack.c.b16 %v1739, %v1735
    %v1952 = vpack.c.b16 %v1740, %v1736
    %v1953 = vpack.c.b16 %v1741, %v1737
    %v1954 = vpack.c.b16 %v1746, %v1742
    %v1955 = vpack.c.b16 %v1747, %v1743
    %v1956 = vpack.c.b16 %v1748, %v1744
    %v1957 = vpack.c.b16 %v1749, %v1745
    %v1958 = vpack.c.b16 %v1754, %v1750
    %v1959 = vpack.c.b16 %v1755, %v1751
    %v1960 = vpack.c.b16 %v1756, %v1752
    %v1961 = vpack.c.b16 %v1757, %v1753
    %v1962 = vpack.c.b16 %v1762, %v1758
    %v1963 = vpack.c.b16 %v1763, %v1759
    %v1964 = vpack.c.b16 %v1764, %v1760
    %v1965 = vpack.c.b16 %v1765, %v1761
    %v1966 = vpack.c.b16 %v1770, %v1766
    %v1967 = vpack.c.b16 %v1771, %v1767
    %v1968 = vpack.c.b16 %v1772, %v1768
    %v1969 = vpack.c.b16 %v1773, %v1769
    %v1970 = vpack.c.b16 %v1778, %v1774
    %v1971 = vpack.c.b16 %v1779, %v1775
    %v1972 = vpack.c.b16 %v1780, %v1776
    %v1973 = vpack.c.b16 %v1781, %v1777
    %v1974 = vpack.c.b16 %v1786, %v1782
    %v1975 = vpack.c.b16 %v1787, %v1783
    %v1976 = vpack.c.b16 %v1788, %v1784
    %v1977 = vpack.c.b16 %v1789, %v1785
    %v1978 = vpack.c.b16 %v1794, %v1790
    %v1979 = vpack.c.b16 %v1795, %v1791
    %v1980 = vpack.c.b16 %v1796, %v1792
    %v1981 = vpack.c.b16 %v1797, %v1793
    %v1982 = vpack.c.b16 %v1802, %v1798
    %v1983 = vpack.c.b16 %v1803, %v1799
    %v1984 = vpack.c.b16 %v1804, %v1800
    %v1985 = vpack.c.b16 %v1805, %v1801
    %v1986 = vpack.c.b16 %v1810, %v1806
    %v1987 = vpack.c.b16 %v1811, %v1807
    %v1988 = vpack.c.b16 %v1812, %v1808
    %v1989 = vpack.c.b16 %v1813, %v1809
    %v1990 = vpack.c.b16 %v1818, %v1814
    %v1991 = vpack.c.b16 %v1819, %v1815
    %v1992 = vpack.c.b16 %v1820, %v1816
    %v1993 = vpack.c.b16 %v1821, %v1817
    %v1994 = vpack.c.b16 %v1826, %v1822
    %v1995 = vpack.c.b16 %v1827, %v1823
    %v1996 = vpack.c.b16 %v1828, %v1824
    %v1997 = vpack.c.b16 %v1829, %v1825
    %v1998 = vpack.c.b16 %v1834, %v1830
    %v1999 = vpack.c.b16 %v1835, %v1831
    %v2000 = vpack.c.b16 %v1836, %v1832
    %v2001 = vpack.c.b16 %v1837, %v1833
    %v2002 = vpack.c.b16 %v1842, %v1838
    %v2003 = vpack.c.b16 %v1843, %v1839
    %v2004 = vpack.c.b16 %v1844, %v1840
    %v2005 = vpack.c.b16 %v1845, %v1841
    %v2006 = vpack.c.b16 %v1850, %v1846
    %v2007 = vpack.c.b16 %v1851, %v1847
    %v2008 = vpack.c.b16 %v1852, %v1848
    %v2009 = vpack.c.b16 %v1853, %v1849
    %v2010 = vpack.c.b16 %v1858, %v1854
    %v2011 = vpack.c.b16 %v1859, %v1855
    %v2012 = vpack.c.b16 %v1860, %v1856
    %v2013 = vpack.c.b16 %v1861, %v1857
    %v2014 = vpack.c.b16 %v1866, %v1862
    %v2015 = vpack.c.b16 %v1867, %v1863
    %v2016 = vpack.c.b16 %v1868, %v1864
    %v2017 = vpack.c.b16 %v1869, %v1865
    %v2018 = vpack.c.b16 %v1874, %v1870
    %v2019 = vpack.c.b16 %v1875, %v1871
    %v2020 = vpack.c.b16 %v1876, %v1872
    %v2021 = vpack.c.b16 %v1877, %v1873
    %v2022 = vpack.c.b16 %v1882, %v1878
    %v2023 = vpack.c.b16 %v1883, %v1879
    %v2024 = vpack.c.b16 %v1884, %v1880
    %v2025 = vpack.c.b16 %v1885, %v1881
    %v2026 = vpack.c.b16 %v1890, %v1886
    %v2027 = vpack.c.b16 %v1891, %v1887
    %v2028 = vpack.c.b16 %v1892, %v1888
    %v2029 = vpack.c.b16 %v1893, %v1889
    %v2030 = vpack.c.b16 %v1898, %v1894
    %v2031 = vpack.c.b16 %v1899, %v1895
    %v2032 = vpack.c.b16 %v1900, %v1896
    %v2033 = vpack.c.b16 %v1901, %v1897
    %v2034 = vpack.c.b16 %v1906, %v1902
    %v2035 = vpack.c.b16 %v1907, %v1903
    %v2036 = vpack.c.b16 %v1908, %v1904
    %v2037 = vpack.c.b16 %v1909, %v1905
    %2166 = vmatprep.subr.bf16.mxu0 %v1911
    %2167 = vmatpush1.bf16.msra.mxu0 %v1910
    %2168 = vmatprep.subr.bf16.mxu0 %v1915
    %2169 = vmatpush1.bf16.msra.mxu0 %v1914
    %2170 = vmatprep.subr.bf16.mxu0 %v1919
    %2171 = vmatpush1.bf16.msra.mxu0 %v1918
    %2172 = vmatprep.subr.bf16.mxu0 %v1923
    %2173 = vmatpush1.bf16.msra.mxu0 %v1922
    %2174 = vmatprep.subr.bf16.mxu0 %v1927
    %2175 = vmatpush1.bf16.msra.mxu0 %v1926
    %2176 = vmatprep.subr.bf16.mxu0 %v1931
    %2177 = vmatpush1.bf16.msra.mxu0 %v1930
    %2178 = vmatprep.subr.bf16.mxu0 %v1935
    %2179 = vmatpush1.bf16.msra.mxu0 %v1934
    %2180 = vmatprep.subr.bf16.mxu0 %v1939
    %2181 = vmatpush1.bf16.msra.mxu0 %v1938
    %2182 = vmatprep.subr.bf16.mxu0 %v1943
    %2183 = vmatpush1.bf16.msra.mxu0 %v1942
    %2184 = vmatprep.subr.bf16.mxu0 %v1947
    %2185 = vmatpush1.bf16.msra.mxu0 %v1946
    %2186 = vmatprep.subr.bf16.mxu0 %v1951
    %2187 = vmatpush1.bf16.msra.mxu0 %v1950
    %2188 = vmatprep.subr.bf16.mxu0 %v1955
    %2189 = vmatpush1.bf16.msra.mxu0 %v1954
    %2190 = vmatprep.subr.bf16.mxu0 %v1959
    %2191 = vmatpush1.bf16.msra.mxu0 %v1958
    %2192 = vmatprep.subr.bf16.mxu0 %v1963
    %2193 = vmatpush1.bf16.msra.mxu0 %v1962
    %2194 = vmatprep.subr.bf16.mxu0 %v1967
    %2195 = vmatpush1.bf16.msra.mxu0 %v1966
    %2196 = vmatprep.subr.bf16.mxu0 %v1971
    %2197 = vmatpush1.bf16.msra.mxu0 %v1970
    %2198 = vmatprep.mubr.bf16.mxu0 %v1502
    %2199 = vmatmul.mubr.bf16.gmra.mrb[0].mxu0 %v1501
    %v2200 = vpop.f32.mrb[0].mxu0
    %v2201 = vadd.f32 %v1509, %v2200
    %v2202 = vpop.f32.mrb[0].mxu0
    %v2203 = vadd.f32 %v1513, %v2202
    %v2204 = vpop.f32.mrb[0].mxu0
    %v2205 = vadd.f32 %v1509, %v2204
    %v2206 = vpop.f32.mrb[0].mxu0
    %v2207 = vadd.f32 %v1513, %v2206
    %2208 = vdwg.mxu0
    %2209 = vmatprep.subr.bf16.mxu0 %v1975
    %2210 = vmatpush1.bf16.msra.mxu0 %v1974
    %2211 = vmatprep.subr.bf16.mxu0 %v1979
    %2212 = vmatpush1.bf16.msra.mxu0 %v1978
    %2213 = vmatprep.subr.bf16.mxu0 %v1983
    %2214 = vmatpush1.bf16.msra.mxu0 %v1982
    %2215 = vmatprep.subr.bf16.mxu0 %v1987
    %2216 = vmatpush1.bf16.msra.mxu0 %v1986
    %2217 = vmatprep.subr.bf16.mxu0 %v1991
    %2218 = vmatpush1.bf16.msra.mxu0 %v1990
    %2219 = vmatprep.subr.bf16.mxu0 %v1995
    %2220 = vmatpush1.bf16.msra.mxu0 %v1994
    %2221 = vmatprep.subr.bf16.mxu0 %v1999
    %2222 = vmatpush1.bf16.msra.mxu0 %v1998
    %2223 = vmatprep.subr.bf16.mxu0 %v2003
    %2224 = vmatpush1.bf16.msra.mxu0 %v2002
    %2225 = vmatprep.subr.bf16.mxu0 %v2007
    %2226 = vmatpush1.bf16.msra.mxu0 %v2006
    %2227 = vmatprep.subr.bf16.mxu0 %v2011
    %2228 = vmatpush1.bf16.msra.mxu0 %v2010
    %2229 = vmatprep.subr.bf16.mxu0 %v2015
    %2230 = vmatpush1.bf16.msra.mxu0 %v2014
    %2231 = vmatprep.subr.bf16.mxu0 %v2019
    %2232 = vmatpush1.bf16.msra.mxu0 %v2018
    %2233 = vmatprep.subr.bf16.mxu0 %v2023
    %2234 = vmatpush1.bf16.msra.mxu0 %v2022
    %2235 = vmatprep.subr.bf16.mxu0 %v2027
    %2236 = vmatpush1.bf16.msra.mxu0 %v2026
    %2237 = vmatprep.subr.bf16.mxu0 %v2031
    %2238 = vmatpush1.bf16.msra.mxu0 %v2030
    %2239 = vmatprep.subr.bf16.mxu0 %v2035
    %2240 = vmatpush1.bf16.msra.mxu0 %v2034
    %2241 = vmatprep.mubr.bf16.mxu0 %v1504
    %2242 = vmatmul.mubr.bf16.gmra.mrb[0].mxu0 %v1503
    %v2243 = vpop.f32.mrb[0].mxu0
    %v2244 = vadd.f32 %v2201, %v2243
    %v2245 = vpop.f32.mrb[0].mxu0
    %v2246 = vadd.f32 %v2203, %v2245
    %v2247 = vpop.f32.mrb[0].mxu0
    %v2248 = vadd.f32 %v2205, %v2247
    %v2249 = vpop.f32.mrb[0].mxu0
    %v2250 = vadd.f32 %v2207, %v2249
    %2251 = vdwg.mxu0
    %2252 = vmatprep.subr.bf16.mxu0 %v1913
    %2253 = vmatpush1.bf16.msra.mxu0 %v1912
    %2254 = vmatprep.subr.bf16.mxu0 %v1917
    %2255 = vmatpush1.bf16.msra.mxu0 %v1916
    %2256 = vmatprep.subr.bf16.mxu0 %v1921
    %2257 = vmatpush1.bf16.msra.mxu0 %v1920
    %2258 = vmatprep.subr.bf16.mxu0 %v1925
    %2259 = vmatpush1.bf16.msra.mxu0 %v1924
    %2260 = vmatprep.subr.bf16.mxu0 %v1929
    %2261 = vmatpush1.bf16.msra.mxu0 %v1928
    %2262 = vmatprep.subr.bf16.mxu0 %v1933
    %2263 = vmatpush1.bf16.msra.mxu0 %v1932
    %2264 = vmatprep.subr.bf16.mxu0 %v1937
    %2265 = vmatpush1.bf16.msra.mxu0 %v1936
    %2266 = vmatprep.subr.bf16.mxu0 %v1941
    %2267 = vmatpush1.bf16.msra.mxu0 %v1940
    %2268 = vmatprep.subr.bf16.mxu0 %v1945
    %2269 = vmatpush1.bf16.msra.mxu0 %v1944
    %2270 = vmatprep.subr.bf16.mxu0 %v1949
    %2271 = vmatpush1.bf16.msra.mxu0 %v1948
    %2272 = vmatprep.subr.bf16.mxu0 %v1953
    %2273 = vmatpush1.bf16.msra.mxu0 %v1952
    %2274 = vmatprep.subr.bf16.mxu0 %v1957
    %2275 = vmatpush1.bf16.msra.mxu0 %v1956
    %2276 = vmatprep.subr.bf16.mxu0 %v1961
    %2277 = vmatpush1.bf16.msra.mxu0 %v1960
    %2278 = vmatprep.subr.bf16.mxu0 %v1965
    %2279 = vmatpush1.bf16.msra.mxu0 %v1964
    %2280 = vmatprep.subr.bf16.mxu0 %v1969
    %2281 = vmatpush1.bf16.msra.mxu0 %v1968
    %2282 = vmatprep.subr.bf16.mxu0 %v1973
    %2283 = vmatpush1.bf16.msra.mxu0 %v1972
    %2284 = vmatprep.mubr.bf16.mxu0 %v1502
    %2285 = vmatmul.mubr.bf16.gmra.mrb[0].mxu0 %v1501
    %v2286 = vpop.f32.mrb[0].mxu0
    %v2287 = vadd.f32 %v1517, %v2286
    %v2288 = vpop.f32.mrb[0].mxu0
    %v2289 = vadd.f32 %v1521, %v2288
    %v2290 = vpop.f32.mrb[0].mxu0
    %v2291 = vadd.f32 %v1517, %v2290
    %v2292 = vpop.f32.mrb[0].mxu0
    %v2293 = vadd.f32 %v1521, %v2292
    %2294 = vdwg.mxu0
    %2295 = vmatprep.subr.bf16.mxu0 %v1977
    %2296 = vmatpush1.bf16.msra.mxu0 %v1976
    %2297 = vmatprep.subr.bf16.mxu0 %v1981
    %2298 = vmatpush1.bf16.msra.mxu0 %v1980
    %2299 = vmatprep.subr.bf16.mxu0 %v1985
    %2300 = vmatpush1.bf16.msra.mxu0 %v1984
    %2301 = vmatprep.subr.bf16.mxu0 %v1989
    %2302 = vmatpush1.bf16.msra.mxu0 %v1988
    %2303 = vmatprep.subr.bf16.mxu0 %v1993
    %2304 = vmatpush1.bf16.msra.mxu0 %v1992
    %2305 = vmatprep.subr.bf16.mxu0 %v1997
    %2306 = vmatpush1.bf16.msra.mxu0 %v1996
    %2307 = vmatprep.subr.bf16.mxu0 %v2001
    %2308 = vmatpush1.bf16.msra.mxu0 %v2000
    %2309 = vmatprep.subr.bf16.mxu0 %v2005
    %2310 = vmatpush1.bf16.msra.mxu0 %v2004
    %2311 = vmatprep.subr.bf16.mxu0 %v2009
    %2312 = vmatpush1.bf16.msra.mxu0 %v2008
    %2313 = vmatprep.subr.bf16.mxu0 %v2013
    %2314 = vmatpush1.bf16.msra.mxu0 %v2012
    %2315 = vmatprep.subr.bf16.mxu0 %v2017
    %2316 = vmatpush1.bf16.msra.mxu0 %v2016
    %2317 = vmatprep.subr.bf16.mxu0 %v2021
    %2318 = vmatpush1.bf16.msra.mxu0 %v2020
    %2319 = vmatprep.subr.bf16.mxu0 %v2025
    %2320 = vmatpush1.bf16.msra.mxu0 %v2024
    %2321 = vmatprep.subr.bf16.mxu0 %v2029
    %2322 = vmatpush1.bf16.msra.mxu0 %v2028
    %2323 = vmatprep.subr.bf16.mxu0 %v2033
    %2324 = vmatpush1.bf16.msra.mxu0 %v2032
    %2325 = vmatprep.subr.bf16.mxu0 %v2037
    %2326 = vmatpush1.bf16.msra.mxu0 %v2036
    %2327 = vmatprep.mubr.bf16.mxu0 %v1504
    %2328 = vmatmul.mubr.bf16.gmra.mrb[0].mxu0 %v1503
    %v2329 = vpop.f32.mrb[0].mxu0
    %v2330 = vadd.f32 %v2287, %v2329
    %v2331 = vpop.f32.mrb[0].mxu0
    %v2332 = vadd.f32 %v2289, %v2331
    %v2333 = vpop.f32.mrb[0].mxu0
    %v2334 = vadd.f32 %v2291, %v2333
    %v2335 = vpop.f32.mrb[0].mxu0
    %v2336 = vadd.f32 %v2293, %v2335
    %2337 = vdwg.mxu0
    %v2338 = vmax.f32 %v2244, 0.0
    %v2339 = vmax.f32 %v2246, 0.0
    %v2340 = vmax.f32 %v2330, 0.0
    %v2341 = vmax.f32 %v2332, 0.0
    %v2342 = vmax.f32 %v2248, 0.0
    %v2343 = vmax.f32 %v2250, 0.0
    %v2344 = vmax.f32 %v2334, 0.0
    %v2345 = vmax.f32 %v2336, 0.0
    %s2346 = scalar_lea.vmem [#allocation4], 2048
    %v2347 = vld [vmem:[%s2346] sm:$0xff]
    %v2348 = vld [vmem:[%s2346 + $0x8] sm:$0xff]
    %v2349 = vld [vmem:[%s2346 + $0x10] sm:$0xff]
    %v2350 = vld [vmem:[%s2346 + $0x18] sm:$0xff]
    %v2351 = vld [vmem:[%s2346 + $0x20] sm:$0xff]
    %v2352 = vld [vmem:[%s2346 + $0x28] sm:$0xff]
    %v2353 = vld [vmem:[%s2346 + $0x30] sm:$0xff]
    %v2354 = vld [vmem:[%s2346 + $0x38] sm:$0xff]
    %v2355 = vld [vmem:[%s2346 + $0x40] sm:$0xff]
    %v2356 = vld [vmem:[%s2346 + $0x48] sm:$0xff]
    %v2357 = vld [vmem:[%s2346 + $0x50] sm:$0xff]
    %v2358 = vld [vmem:[%s2346 + $0x58] sm:$0xff]
    %v2359 = vld [vmem:[%s2346 + $0x60] sm:$0xff]
    %v2360 = vld [vmem:[%s2346 + $0x68] sm:$0xff]
    %v2361 = vld [vmem:[%s2346 + $0x70] sm:$0xff]
    %v2362 = vld [vmem:[%s2346 + $0x78] sm:$0xff]
    %v2363 = vld [vmem:[%s2346 + $0x80] sm:$0xff]
    %v2364 = vld [vmem:[%s2346 + $0x88] sm:$0xff]
    %v2365 = vld [vmem:[%s2346 + $0x90] sm:$0xff]
    %v2366 = vld [vmem:[%s2346 + $0x98] sm:$0xff]
    %v2367 = vld [vmem:[%s2346 + $0xa0] sm:$0xff]
    %v2368 = vld [vmem:[%s2346 + $0xa8] sm:$0xff]
    %v2369 = vld [vmem:[%s2346 + $0xb0] sm:$0xff]
    %v2370 = vld [vmem:[%s2346 + $0xb8] sm:$0xff]
    %v2371 = vld [vmem:[%s2346 + $0xc0] sm:$0xff]
    %v2372 = vld [vmem:[%s2346 + $0xc8] sm:$0xff]
    %v2373 = vld [vmem:[%s2346 + $0xd0] sm:$0xff]
    %v2374 = vld [vmem:[%s2346 + $0xd8] sm:$0xff]
    %v2375 = vld [vmem:[%s2346 + $0xe0] sm:$0xff]
    %v2376 = vld [vmem:[%s2346 + $0xe8] sm:$0xff]
    %v2377 = vld [vmem:[%s2346 + $0xf0] sm:$0xff]
    %v2378 = vld [vmem:[%s2346 + $0xf8] sm:$0xff]
    %v2379 = vld [vmem:[%s2346 + $0x100] sm:$0xff]
    %v2380 = vld [vmem:[%s2346 + $0x108] sm:$0xff]
    %v2381 = vld [vmem:[%s2346 + $0x110] sm:$0xff]
    %v2382 = vld [vmem:[%s2346 + $0x118] sm:$0xff]
    %v2383 = vld [vmem:[%s2346 + $0x120] sm:$0xff]
    %v2384 = vld [vmem:[%s2346 + $0x128] sm:$0xff]
    %v2385 = vld [vmem:[%s2346 + $0x130] sm:$0xff]
    %v2386 = vld [vmem:[%s2346 + $0x138] sm:$0xff]
    %v2387 = vld [vmem:[%s2346 + $0x140] sm:$0xff]
    %v2388 = vld [vmem:[%s2346 + $0x148] sm:$0xff]
    %v2389 = vld [vmem:[%s2346 + $0x150] sm:$0xff]
    %v2390 = vld [vmem:[%s2346 + $0x158] sm:$0xff]
    %v2391 = vld [vmem:[%s2346 + $0x160] sm:$0xff]
    %v2392 = vld [vmem:[%s2346 + $0x168] sm:$0xff]
    %v2393 = vld [vmem:[%s2346 + $0x170] sm:$0xff]
    %v2394 = vld [vmem:[%s2346 + $0x178] sm:$0xff]
    %v2395 = vld [vmem:[%s2346 + $0x180] sm:$0xff]
    %v2396 = vld [vmem:[%s2346 + $0x188] sm:$0xff]
    %v2397 = vld [vmem:[%s2346 + $0x190] sm:$0xff]
    %v2398 = vld [vmem:[%s2346 + $0x198] sm:$0xff]
    %v2399 = vld [vmem:[%s2346 + $0x1a0] sm:$0xff]
    %v2400 = vld [vmem:[%s2346 + $0x1a8] sm:$0xff]
    %v2401 = vld [vmem:[%s2346 + $0x1b0] sm:$0xff]
    %v2402 = vld [vmem:[%s2346 + $0x1b8] sm:$0xff]
    %v2403 = vld [vmem:[%s2346 + $0x1c0] sm:$0xff]
    %v2404 = vld [vmem:[%s2346 + $0x1c8] sm:$0xff]
    %v2405 = vld [vmem:[%s2346 + $0x1d0] sm:$0xff]
    %v2406 = vld [vmem:[%s2346 + $0x1d8] sm:$0xff]
    %v2407 = vld [vmem:[%s2346 + $0x1e0] sm:$0xff]
    %v2408 = vld [vmem:[%s2346 + $0x1e8] sm:$0xff]
    %v2409 = vld [vmem:[%s2346 + $0x1f0] sm:$0xff]
    %v2410 = vld [vmem:[%s2346 + $0x1f8] sm:$0xff]
    %v2411 = vld [vmem:[%s2346 + $0x200] sm:$0xff]
    %v2412 = vld [vmem:[%s2346 + $0x208] sm:$0xff]
    %v2413 = vld [vmem:[%s2346 + $0x210] sm:$0xff]
    %v2414 = vld [vmem:[%s2346 + $0x218] sm:$0xff]
    %v2415 = vld [vmem:[%s2346 + $0x220] sm:$0xff]
    %v2416 = vld [vmem:[%s2346 + $0x228] sm:$0xff]
    %v2417 = vld [vmem:[%s2346 + $0x230] sm:$0xff]
    %v2418 = vld [vmem:[%s2346 + $0x238] sm:$0xff]
    %v2419 = vld [vmem:[%s2346 + $0x240] sm:$0xff]
    %v2420 = vld [vmem:[%s2346 + $0x248] sm:$0xff]
    %v2421 = vld [vmem:[%s2346 + $0x250] sm:$0xff]
    %v2422 = vld [vmem:[%s2346 + $0x258] sm:$0xff]
    %v2423 = vld [vmem:[%s2346 + $0x260] sm:$0xff]
    %v2424 = vld [vmem:[%s2346 + $0x268] sm:$0xff]
    %v2425 = vld [vmem:[%s2346 + $0x270] sm:$0xff]
    %v2426 = vld [vmem:[%s2346 + $0x278] sm:$0xff]
    %v2427 = vld [vmem:[%s2346 + $0x280] sm:$0xff]
    %v2428 = vld [vmem:[%s2346 + $0x288] sm:$0xff]
    %v2429 = vld [vmem:[%s2346 + $0x290] sm:$0xff]
    %v2430 = vld [vmem:[%s2346 + $0x298] sm:$0xff]
    %v2431 = vld [vmem:[%s2346 + $0x2a0] sm:$0xff]
    %v2432 = vld [vmem:[%s2346 + $0x2a8] sm:$0xff]
    %v2433 = vld [vmem:[%s2346 + $0x2b0] sm:$0xff]
    %v2434 = vld [vmem:[%s2346 + $0x2b8] sm:$0xff]
    %v2435 = vld [vmem:[%s2346 + $0x2c0] sm:$0xff]
    %v2436 = vld [vmem:[%s2346 + $0x2c8] sm:$0xff]
    %v2437 = vld [vmem:[%s2346 + $0x2d0] sm:$0xff]
    %v2438 = vld [vmem:[%s2346 + $0x2d8] sm:$0xff]
    %v2439 = vld [vmem:[%s2346 + $0x2e0] sm:$0xff]
    %v2440 = vld [vmem:[%s2346 + $0x2e8] sm:$0xff]
    %v2441 = vld [vmem:[%s2346 + $0x2f0] sm:$0xff]
    %v2442 = vld [vmem:[%s2346 + $0x2f8] sm:$0xff]
    %v2443 = vld [vmem:[%s2346 + $0x300] sm:$0xff]
    %v2444 = vld [vmem:[%s2346 + $0x308] sm:$0xff]
    %v2445 = vld [vmem:[%s2346 + $0x310] sm:$0xff]
    %v2446 = vld [vmem:[%s2346 + $0x318] sm:$0xff]
    %v2447 = vld [vmem:[%s2346 + $0x320] sm:$0xff]
    %v2448 = vld [vmem:[%s2346 + $0x328] sm:$0xff]
    %v2449 = vld [vmem:[%s2346 + $0x330] sm:$0xff]
    %v2450 = vld [vmem:[%s2346 + $0x338] sm:$0xff]
    %v2451 = vld [vmem:[%s2346 + $0x340] sm:$0xff]
    %v2452 = vld [vmem:[%s2346 + $0x348] sm:$0xff]
    %v2453 = vld [vmem:[%s2346 + $0x350] sm:$0xff]
    %v2454 = vld [vmem:[%s2346 + $0x358] sm:$0xff]
    %v2455 = vld [vmem:[%s2346 + $0x360] sm:$0xff]
    %v2456 = vld [vmem:[%s2346 + $0x368] sm:$0xff]
    %v2457 = vld [vmem:[%s2346 + $0x370] sm:$0xff]
    %v2458 = vld [vmem:[%s2346 + $0x378] sm:$0xff]
    %v2459 = vld [vmem:[%s2346 + $0x380] sm:$0xff]
    %v2460 = vld [vmem:[%s2346 + $0x388] sm:$0xff]
    %v2461 = vld [vmem:[%s2346 + $0x390] sm:$0xff]
    %v2462 = vld [vmem:[%s2346 + $0x398] sm:$0xff]
    %v2463 = vld [vmem:[%s2346 + $0x3a0] sm:$0xff]
    %v2464 = vld [vmem:[%s2346 + $0x3a8] sm:$0xff]
    %v2465 = vld [vmem:[%s2346 + $0x3b0] sm:$0xff]
    %v2466 = vld [vmem:[%s2346 + $0x3b8] sm:$0xff]
    %v2467 = vld [vmem:[%s2346 + $0x3c0] sm:$0xff]
    %v2468 = vld [vmem:[%s2346 + $0x3c8] sm:$0xff]
    %v2469 = vld [vmem:[%s2346 + $0x3d0] sm:$0xff]
    %v2470 = vld [vmem:[%s2346 + $0x3d8] sm:$0xff]
    %v2471 = vld [vmem:[%s2346 + $0x3e0] sm:$0xff]
    %v2472 = vld [vmem:[%s2346 + $0x3e8] sm:$0xff]
    %v2473 = vld [vmem:[%s2346 + $0x3f0] sm:$0xff]
    %v2474 = vld [vmem:[%s2346 + $0x3f8] sm:$0xff]
    %s2475 = scalar_lea.vmem [#allocation7], 3
    %v2476 = vld [vmem:[%s2475] ss:$8 sm:$0xf]
    %v2477 = vpack.c.bf16 %v2342, %v2338
    %v2478 = vpack.c.bf16 %v2343, %v2339
    %v2479 = vpack.c.bf16 %v2344, %v2340
    %v2480 = vpack.c.bf16 %v2345, %v2341
    %v2482 = vlaneseq
    %v2483 = vshrl.u32 %v2482, 7
    %v2484 = vsub.s32 0, %v2483
    %v2485 = vrot.slane %v2476, %v2484
    %v2486 = vlaneseq
    %v2487 = vshrl.u32 %v2486, 7
    %v2488 = vsub.s32 1, %v2487
    %v2489 = vrot.slane %v2476, %v2488
    %v2490 = vlaneseq
    %v2491 = vshrl.u32 %v2490, 7
    %v2492 = vsub.s32 2, %v2491
    %v2493 = vrot.slane %v2476, %v2492
    %v2494 = vlaneseq
    %v2495 = vshrl.u32 %v2494, 7
    %v2496 = vsub.s32 3, %v2495
    %v2497 = vrot.slane %v2476, %v2496
    %v2630 = vunpack.c.l.b16 %v2347
    %v2631 = vunpack.c.h.b16 %v2347
    %v2632 = vunpack.c.l.b16 %v2348
    %v2633 = vunpack.c.h.b16 %v2348
    %v2634 = vunpack.c.l.b16 %v2349
    %v2635 = vunpack.c.h.b16 %v2349
    %v2636 = vunpack.c.l.b16 %v2350
    %v2637 = vunpack.c.h.b16 %v2350
    %v2638 = vunpack.c.l.b16 %v2351
    %v2639 = vunpack.c.h.b16 %v2351
    %v2640 = vunpack.c.l.b16 %v2352
    %v2641 = vunpack.c.h.b16 %v2352
    %v2642 = vunpack.c.l.b16 %v2353
    %v2643 = vunpack.c.h.b16 %v2353
    %v2644 = vunpack.c.l.b16 %v2354
    %v2645 = vunpack.c.h.b16 %v2354
    %v2646 = vunpack.c.l.b16 %v2355
    %v2647 = vunpack.c.h.b16 %v2355
    %v2648 = vunpack.c.l.b16 %v2356
    %v2649 = vunpack.c.h.b16 %v2356
    %v2650 = vunpack.c.l.b16 %v2357
    %v2651 = vunpack.c.h.b16 %v2357
    %v2652 = vunpack.c.l.b16 %v2358
    %v2653 = vunpack.c.h.b16 %v2358
    %v2654 = vunpack.c.l.b16 %v2359
    %v2655 = vunpack.c.h.b16 %v2359
    %v2656 = vunpack.c.l.b16 %v2360
    %v2657 = vunpack.c.h.b16 %v2360
    %v2658 = vunpack.c.l.b16 %v2361
    %v2659 = vunpack.c.h.b16 %v2361
    %v2660 = vunpack.c.l.b16 %v2362
    %v2661 = vunpack.c.h.b16 %v2362
    %v2662 = vunpack.c.l.b16 %v2363
    %v2663 = vunpack.c.h.b16 %v2363
    %v2664 = vunpack.c.l.b16 %v2364
    %v2665 = vunpack.c.h.b16 %v2364
    %v2666 = vunpack.c.l.b16 %v2365
    %v2667 = vunpack.c.h.b16 %v2365
    %v2668 = vunpack.c.l.b16 %v2366
    %v2669 = vunpack.c.h.b16 %v2366
    %v2670 = vunpack.c.l.b16 %v2367
    %v2671 = vunpack.c.h.b16 %v2367
    %v2672 = vunpack.c.l.b16 %v2368
    %v2673 = vunpack.c.h.b16 %v2368
    %v2674 = vunpack.c.l.b16 %v2369
    %v2675 = vunpack.c.h.b16 %v2369
    %v2676 = vunpack.c.l.b16 %v2370
    %v2677 = vunpack.c.h.b16 %v2370
    %v2678 = vunpack.c.l.b16 %v2371
    %v2679 = vunpack.c.h.b16 %v2371
    %v2680 = vunpack.c.l.b16 %v2372
    %v2681 = vunpack.c.h.b16 %v2372
    %v2682 = vunpack.c.l.b16 %v2373
    %v2683 = vunpack.c.h.b16 %v2373
    %v2684 = vunpack.c.l.b16 %v2374
    %v2685 = vunpack.c.h.b16 %v2374
    %v2686 = vunpack.c.l.b16 %v2375
    %v2687 = vunpack.c.h.b16 %v2375
    %v2688 = vunpack.c.l.b16 %v2376
    %v2689 = vunpack.c.h.b16 %v2376
    %v2690 = vunpack.c.l.b16 %v2377
    %v2691 = vunpack.c.h.b16 %v2377
    %v2692 = vunpack.c.l.b16 %v2378
    %v2693 = vunpack.c.h.b16 %v2378
    %v2694 = vunpack.c.l.b16 %v2379
    %v2695 = vunpack.c.h.b16 %v2379
    %v2696 = vunpack.c.l.b16 %v2380
    %v2697 = vunpack.c.h.b16 %v2380
    %v2698 = vunpack.c.l.b16 %v2381
    %v2699 = vunpack.c.h.b16 %v2381
    %v2700 = vunpack.c.l.b16 %v2382
    %v2701 = vunpack.c.h.b16 %v2382
    %v2702 = vunpack.c.l.b16 %v2383
    %v2703 = vunpack.c.h.b16 %v2383
    %v2704 = vunpack.c.l.b16 %v2384
    %v2705 = vunpack.c.h.b16 %v2384
    %v2706 = vunpack.c.l.b16 %v2385
    %v2707 = vunpack.c.h.b16 %v2385
    %v2708 = vunpack.c.l.b16 %v2386
    %v2709 = vunpack.c.h.b16 %v2386
    %v2710 = vunpack.c.l.b16 %v2387
    %v2711 = vunpack.c.h.b16 %v2387
    %v2712 = vunpack.c.l.b16 %v2388
    %v2713 = vunpack.c.h.b16 %v2388
    %v2714 = vunpack.c.l.b16 %v2389
    %v2715 = vunpack.c.h.b16 %v2389
    %v2716 = vunpack.c.l.b16 %v2390
    %v2717 = vunpack.c.h.b16 %v2390
    %v2718 = vunpack.c.l.b16 %v2391
    %v2719 = vunpack.c.h.b16 %v2391
    %v2720 = vunpack.c.l.b16 %v2392
    %v2721 = vunpack.c.h.b16 %v2392
    %v2722 = vunpack.c.l.b16 %v2393
    %v2723 = vunpack.c.h.b16 %v2393
    %v2724 = vunpack.c.l.b16 %v2394
    %v2725 = vunpack.c.h.b16 %v2394
    %v2726 = vunpack.c.l.b16 %v2395
    %v2727 = vunpack.c.h.b16 %v2395
    %v2728 = vunpack.c.l.b16 %v2396
    %v2729 = vunpack.c.h.b16 %v2396
    %v2730 = vunpack.c.l.b16 %v2397
    %v2731 = vunpack.c.h.b16 %v2397
    %v2732 = vunpack.c.l.b16 %v2398
    %v2733 = vunpack.c.h.b16 %v2398
    %v2734 = vunpack.c.l.b16 %v2399
    %v2735 = vunpack.c.h.b16 %v2399
    %v2736 = vunpack.c.l.b16 %v2400
    %v2737 = vunpack.c.h.b16 %v2400
    %v2738 = vunpack.c.l.b16 %v2401
    %v2739 = vunpack.c.h.b16 %v2401
    %v2740 = vunpack.c.l.b16 %v2402
    %v2741 = vunpack.c.h.b16 %v2402
    %v2742 = vunpack.c.l.b16 %v2403
    %v2743 = vunpack.c.h.b16 %v2403
    %v2744 = vunpack.c.l.b16 %v2404
    %v2745 = vunpack.c.h.b16 %v2404
    %v2746 = vunpack.c.l.b16 %v2405
    %v2747 = vunpack.c.h.b16 %v2405
    %v2748 = vunpack.c.l.b16 %v2406
    %v2749 = vunpack.c.h.b16 %v2406
    %v2750 = vunpack.c.l.b16 %v2407
    %v2751 = vunpack.c.h.b16 %v2407
    %v2752 = vunpack.c.l.b16 %v2408
    %v2753 = vunpack.c.h.b16 %v2408
    %v2754 = vunpack.c.l.b16 %v2409
    %v2755 = vunpack.c.h.b16 %v2409
    %v2756 = vunpack.c.l.b16 %v2410
    %v2757 = vunpack.c.h.b16 %v2410
    %v2758 = vunpack.c.l.b16 %v2411
    %v2759 = vunpack.c.h.b16 %v2411
    %v2760 = vunpack.c.l.b16 %v2412
    %v2761 = vunpack.c.h.b16 %v2412
    %v2762 = vunpack.c.l.b16 %v2413
    %v2763 = vunpack.c.h.b16 %v2413
    %v2764 = vunpack.c.l.b16 %v2414
    %v2765 = vunpack.c.h.b16 %v2414
    %v2766 = vunpack.c.l.b16 %v2415
    %v2767 = vunpack.c.h.b16 %v2415
    %v2768 = vunpack.c.l.b16 %v2416
    %v2769 = vunpack.c.h.b16 %v2416
    %v2770 = vunpack.c.l.b16 %v2417
    %v2771 = vunpack.c.h.b16 %v2417
    %v2772 = vunpack.c.l.b16 %v2418
    %v2773 = vunpack.c.h.b16 %v2418
    %v2774 = vunpack.c.l.b16 %v2419
    %v2775 = vunpack.c.h.b16 %v2419
    %v2776 = vunpack.c.l.b16 %v2420
    %v2777 = vunpack.c.h.b16 %v2420
    %v2778 = vunpack.c.l.b16 %v2421
    %v2779 = vunpack.c.h.b16 %v2421
    %v2780 = vunpack.c.l.b16 %v2422
    %v2781 = vunpack.c.h.b16 %v2422
    %v2782 = vunpack.c.l.b16 %v2423
    %v2783 = vunpack.c.h.b16 %v2423
    %v2784 = vunpack.c.l.b16 %v2424
    %v2785 = vunpack.c.h.b16 %v2424
    %v2786 = vunpack.c.l.b16 %v2425
    %v2787 = vunpack.c.h.b16 %v2425
    %v2788 = vunpack.c.l.b16 %v2426
    %v2789 = vunpack.c.h.b16 %v2426
    %v2790 = vunpack.c.l.b16 %v2427
    %v2791 = vunpack.c.h.b16 %v2427
    %v2792 = vunpack.c.l.b16 %v2428
    %v2793 = vunpack.c.h.b16 %v2428
    %v2794 = vunpack.c.l.b16 %v2429
    %v2795 = vunpack.c.h.b16 %v2429
    %v2796 = vunpack.c.l.b16 %v2430
    %v2797 = vunpack.c.h.b16 %v2430
    %v2798 = vunpack.c.l.b16 %v2431
    %v2799 = vunpack.c.h.b16 %v2431
    %v2800 = vunpack.c.l.b16 %v2432
    %v2801 = vunpack.c.h.b16 %v2432
    %v2802 = vunpack.c.l.b16 %v2433
    %v2803 = vunpack.c.h.b16 %v2433
    %v2804 = vunpack.c.l.b16 %v2434
    %v2805 = vunpack.c.h.b16 %v2434
    %v2806 = vunpack.c.l.b16 %v2435
    %v2807 = vunpack.c.h.b16 %v2435
    %v2808 = vunpack.c.l.b16 %v2436
    %v2809 = vunpack.c.h.b16 %v2436
    %v2810 = vunpack.c.l.b16 %v2437
    %v2811 = vunpack.c.h.b16 %v2437
    %v2812 = vunpack.c.l.b16 %v2438
    %v2813 = vunpack.c.h.b16 %v2438
    %v2814 = vunpack.c.l.b16 %v2439
    %v2815 = vunpack.c.h.b16 %v2439
    %v2816 = vunpack.c.l.b16 %v2440
    %v2817 = vunpack.c.h.b16 %v2440
    %v2818 = vunpack.c.l.b16 %v2441
    %v2819 = vunpack.c.h.b16 %v2441
    %v2820 = vunpack.c.l.b16 %v2442
    %v2821 = vunpack.c.h.b16 %v2442
    %v2822 = vunpack.c.l.b16 %v2443
    %v2823 = vunpack.c.h.b16 %v2443
    %v2824 = vunpack.c.l.b16 %v2444
    %v2825 = vunpack.c.h.b16 %v2444
    %v2826 = vunpack.c.l.b16 %v2445
    %v2827 = vunpack.c.h.b16 %v2445
    %v2828 = vunpack.c.l.b16 %v2446
    %v2829 = vunpack.c.h.b16 %v2446
    %v2830 = vunpack.c.l.b16 %v2447
    %v2831 = vunpack.c.h.b16 %v2447
    %v2832 = vunpack.c.l.b16 %v2448
    %v2833 = vunpack.c.h.b16 %v2448
    %v2834 = vunpack.c.l.b16 %v2449
    %v2835 = vunpack.c.h.b16 %v2449
    %v2836 = vunpack.c.l.b16 %v2450
    %v2837 = vunpack.c.h.b16 %v2450
    %v2838 = vunpack.c.l.b16 %v2451
    %v2839 = vunpack.c.h.b16 %v2451
    %v2840 = vunpack.c.l.b16 %v2452
    %v2841 = vunpack.c.h.b16 %v2452
    %v2842 = vunpack.c.l.b16 %v2453
    %v2843 = vunpack.c.h.b16 %v2453
    %v2844 = vunpack.c.l.b16 %v2454
    %v2845 = vunpack.c.h.b16 %v2454
    %v2846 = vunpack.c.l.b16 %v2455
    %v2847 = vunpack.c.h.b16 %v2455
    %v2848 = vunpack.c.l.b16 %v2456
    %v2849 = vunpack.c.h.b16 %v2456
    %v2850 = vunpack.c.l.b16 %v2457
    %v2851 = vunpack.c.h.b16 %v2457
    %v2852 = vunpack.c.l.b16 %v2458
    %v2853 = vunpack.c.h.b16 %v2458
    %v2854 = vunpack.c.l.b16 %v2459
    %v2855 = vunpack.c.h.b16 %v2459
    %v2856 = vunpack.c.l.b16 %v2460
    %v2857 = vunpack.c.h.b16 %v2460
    %v2858 = vunpack.c.l.b16 %v2461
    %v2859 = vunpack.c.h.b16 %v2461
    %v2860 = vunpack.c.l.b16 %v2462
    %v2861 = vunpack.c.h.b16 %v2462
    %v2862 = vunpack.c.l.b16 %v2463
    %v2863 = vunpack.c.h.b16 %v2463
    %v2864 = vunpack.c.l.b16 %v2464
    %v2865 = vunpack.c.h.b16 %v2464
    %v2866 = vunpack.c.l.b16 %v2465
    %v2867 = vunpack.c.h.b16 %v2465
    %v2868 = vunpack.c.l.b16 %v2466
    %v2869 = vunpack.c.h.b16 %v2466
    %v2870 = vunpack.c.l.b16 %v2467
    %v2871 = vunpack.c.h.b16 %v2467
    %v2872 = vunpack.c.l.b16 %v2468
    %v2873 = vunpack.c.h.b16 %v2468
    %v2874 = vunpack.c.l.b16 %v2469
    %v2875 = vunpack.c.h.b16 %v2469
    %v2876 = vunpack.c.l.b16 %v2470
    %v2877 = vunpack.c.h.b16 %v2470
    %v2878 = vunpack.c.l.b16 %v2471
    %v2879 = vunpack.c.h.b16 %v2471
    %v2880 = vunpack.c.l.b16 %v2472
    %v2881 = vunpack.c.h.b16 %v2472
    %v2882 = vunpack.c.l.b16 %v2473
    %v2883 = vunpack.c.h.b16 %v2473
    %v2884 = vunpack.c.l.b16 %v2474
    %v2885 = vunpack.c.h.b16 %v2474
    %v2886 = vpack.c.b16 %v2634, %v2630
    %v2887 = vpack.c.b16 %v2635, %v2631
    %v2888 = vpack.c.b16 %v2636, %v2632
    %v2889 = vpack.c.b16 %v2637, %v2633
    %v2890 = vpack.c.b16 %v2642, %v2638
    %v2891 = vpack.c.b16 %v2643, %v2639
    %v2892 = vpack.c.b16 %v2644, %v2640
    %v2893 = vpack.c.b16 %v2645, %v2641
    %v2894 = vpack.c.b16 %v2650, %v2646
    %v2895 = vpack.c.b16 %v2651, %v2647
    %v2896 = vpack.c.b16 %v2652, %v2648
    %v2897 = vpack.c.b16 %v2653, %v2649
    %v2898 = vpack.c.b16 %v2658, %v2654
    %v2899 = vpack.c.b16 %v2659, %v2655
    %v2900 = vpack.c.b16 %v2660, %v2656
    %v2901 = vpack.c.b16 %v2661, %v2657
    %v2902 = vpack.c.b16 %v2666, %v2662
    %v2903 = vpack.c.b16 %v2667, %v2663
    %v2904 = vpack.c.b16 %v2668, %v2664
    %v2905 = vpack.c.b16 %v2669, %v2665
    %v2906 = vpack.c.b16 %v2674, %v2670
    %v2907 = vpack.c.b16 %v2675, %v2671
    %v2908 = vpack.c.b16 %v2676, %v2672
    %v2909 = vpack.c.b16 %v2677, %v2673
    %v2910 = vpack.c.b16 %v2682, %v2678
    %v2911 = vpack.c.b16 %v2683, %v2679
    %v2912 = vpack.c.b16 %v2684, %v2680
    %v2913 = vpack.c.b16 %v2685, %v2681
    %v2914 = vpack.c.b16 %v2690, %v2686
    %v2915 = vpack.c.b16 %v2691, %v2687
    %v2916 = vpack.c.b16 %v2692, %v2688
    %v2917 = vpack.c.b16 %v2693, %v2689
    %v2918 = vpack.c.b16 %v2698, %v2694
    %v2919 = vpack.c.b16 %v2699, %v2695
    %v2920 = vpack.c.b16 %v2700, %v2696
    %v2921 = vpack.c.b16 %v2701, %v2697
    %v2922 = vpack.c.b16 %v2706, %v2702
    %v2923 = vpack.c.b16 %v2707, %v2703
    %v2924 = vpack.c.b16 %v2708, %v2704
    %v2925 = vpack.c.b16 %v2709, %v2705
    %v2926 = vpack.c.b16 %v2714, %v2710
    %v2927 = vpack.c.b16 %v2715, %v2711
    %v2928 = vpack.c.b16 %v2716, %v2712
    %v2929 = vpack.c.b16 %v2717, %v2713
    %v2930 = vpack.c.b16 %v2722, %v2718
    %v2931 = vpack.c.b16 %v2723, %v2719
    %v2932 = vpack.c.b16 %v2724, %v2720
    %v2933 = vpack.c.b16 %v2725, %v2721
    %v2934 = vpack.c.b16 %v2730, %v2726
    %v2935 = vpack.c.b16 %v2731, %v2727
    %v2936 = vpack.c.b16 %v2732, %v2728
    %v2937 = vpack.c.b16 %v2733, %v2729
    %v2938 = vpack.c.b16 %v2738, %v2734
    %v2939 = vpack.c.b16 %v2739, %v2735
    %v2940 = vpack.c.b16 %v2740, %v2736
    %v2941 = vpack.c.b16 %v2741, %v2737
    %v2942 = vpack.c.b16 %v2746, %v2742
    %v2943 = vpack.c.b16 %v2747, %v2743
    %v2944 = vpack.c.b16 %v2748, %v2744
    %v2945 = vpack.c.b16 %v2749, %v2745
    %v2946 = vpack.c.b16 %v2754, %v2750
    %v2947 = vpack.c.b16 %v2755, %v2751
    %v2948 = vpack.c.b16 %v2756, %v2752
    %v2949 = vpack.c.b16 %v2757, %v2753
    %v2950 = vpack.c.b16 %v2762, %v2758
    %v2951 = vpack.c.b16 %v2763, %v2759
    %v2952 = vpack.c.b16 %v2764, %v2760
    %v2953 = vpack.c.b16 %v2765, %v2761
    %v2954 = vpack.c.b16 %v2770, %v2766
    %v2955 = vpack.c.b16 %v2771, %v2767
    %v2956 = vpack.c.b16 %v2772, %v2768
    %v2957 = vpack.c.b16 %v2773, %v2769
    %v2958 = vpack.c.b16 %v2778, %v2774
    %v2959 = vpack.c.b16 %v2779, %v2775
    %v2960 = vpack.c.b16 %v2780, %v2776
    %v2961 = vpack.c.b16 %v2781, %v2777
    %v2962 = vpack.c.b16 %v2786, %v2782
    %v2963 = vpack.c.b16 %v2787, %v2783
    %v2964 = vpack.c.b16 %v2788, %v2784
    %v2965 = vpack.c.b16 %v2789, %v2785
    %v2966 = vpack.c.b16 %v2794, %v2790
    %v2967 = vpack.c.b16 %v2795, %v2791
    %v2968 = vpack.c.b16 %v2796, %v2792
    %v2969 = vpack.c.b16 %v2797, %v2793
    %v2970 = vpack.c.b16 %v2802, %v2798
    %v2971 = vpack.c.b16 %v2803, %v2799
    %v2972 = vpack.c.b16 %v2804, %v2800
    %v2973 = vpack.c.b16 %v2805, %v2801
    %v2974 = vpack.c.b16 %v2810, %v2806
    %v2975 = vpack.c.b16 %v2811, %v2807
    %v2976 = vpack.c.b16 %v2812, %v2808
    %v2977 = vpack.c.b16 %v2813, %v2809
    %v2978 = vpack.c.b16 %v2818, %v2814
    %v2979 = vpack.c.b16 %v2819, %v2815
    %v2980 = vpack.c.b16 %v2820, %v2816
    %v2981 = vpack.c.b16 %v2821, %v2817
    %v2982 = vpack.c.b16 %v2826, %v2822
    %v2983 = vpack.c.b16 %v2827, %v2823
    %v2984 = vpack.c.b16 %v2828, %v2824
    %v2985 = vpack.c.b16 %v2829, %v2825
    %v2986 = vpack.c.b16 %v2834, %v2830
    %v2987 = vpack.c.b16 %v2835, %v2831
    %v2988 = vpack.c.b16 %v2836, %v2832
    %v2989 = vpack.c.b16 %v2837, %v2833
    %v2990 = vpack.c.b16 %v2842, %v2838
    %v2991 = vpack.c.b16 %v2843, %v2839
    %v2992 = vpack.c.b16 %v2844, %v2840
    %v2993 = vpack.c.b16 %v2845, %v2841
    %v2994 = vpack.c.b16 %v2850, %v2846
    %v2995 = vpack.c.b16 %v2851, %v2847
    %v2996 = vpack.c.b16 %v2852, %v2848
    %v2997 = vpack.c.b16 %v2853, %v2849
    %v2998 = vpack.c.b16 %v2858, %v2854
    %v2999 = vpack.c.b16 %v2859, %v2855
    %v3000 = vpack.c.b16 %v2860, %v2856
    %v3001 = vpack.c.b16 %v2861, %v2857
    %v3002 = vpack.c.b16 %v2866, %v2862
    %v3003 = vpack.c.b16 %v2867, %v2863
    %v3004 = vpack.c.b16 %v2868, %v2864
    %v3005 = vpack.c.b16 %v2869, %v2865
    %v3006 = vpack.c.b16 %v2874, %v2870
    %v3007 = vpack.c.b16 %v2875, %v2871
    %v3008 = vpack.c.b16 %v2876, %v2872
    %v3009 = vpack.c.b16 %v2877, %v2873
    %v3010 = vpack.c.b16 %v2882, %v2878
    %v3011 = vpack.c.b16 %v2883, %v2879
    %v3012 = vpack.c.b16 %v2884, %v2880
    %v3013 = vpack.c.b16 %v2885, %v2881
    %3142 = vmatprep.subr.bf16.mxu0 %v2887
    %3143 = vmatpush1.bf16.msra.mxu0 %v2886
    %3144 = vmatprep.subr.bf16.mxu0 %v2891
    %3145 = vmatpush1.bf16.msra.mxu0 %v2890
    %3146 = vmatprep.subr.bf16.mxu0 %v2895
    %3147 = vmatpush1.bf16.msra.mxu0 %v2894
    %3148 = vmatprep.subr.bf16.mxu0 %v2899
    %3149 = vmatpush1.bf16.msra.mxu0 %v2898
    %3150 = vmatprep.subr.bf16.mxu0 %v2903
    %3151 = vmatpush1.bf16.msra.mxu0 %v2902
    %3152 = vmatprep.subr.bf16.mxu0 %v2907
    %3153 = vmatpush1.bf16.msra.mxu0 %v2906
    %3154 = vmatprep.subr.bf16.mxu0 %v2911
    %3155 = vmatpush1.bf16.msra.mxu0 %v2910
    %3156 = vmatprep.subr.bf16.mxu0 %v2915
    %3157 = vmatpush1.bf16.msra.mxu0 %v2914
    %3158 = vmatprep.subr.bf16.mxu0 %v2919
    %3159 = vmatpush1.bf16.msra.mxu0 %v2918
    %3160 = vmatprep.subr.bf16.mxu0 %v2923
    %3161 = vmatpush1.bf16.msra.mxu0 %v2922
    %3162 = vmatprep.subr.bf16.mxu0 %v2927
    %3163 = vmatpush1.bf16.msra.mxu0 %v2926
    %3164 = vmatprep.subr.bf16.mxu0 %v2931
    %3165 = vmatpush1.bf16.msra.mxu0 %v2930
    %3166 = vmatprep.subr.bf16.mxu0 %v2935
    %3167 = vmatpush1.bf16.msra.mxu0 %v2934
    %3168 = vmatprep.subr.bf16.mxu0 %v2939
    %3169 = vmatpush1.bf16.msra.mxu0 %v2938
    %3170 = vmatprep.subr.bf16.mxu0 %v2943
    %3171 = vmatpush1.bf16.msra.mxu0 %v2942
    %3172 = vmatprep.subr.bf16.mxu0 %v2947
    %3173 = vmatpush1.bf16.msra.mxu0 %v2946
    %3174 = vmatprep.mubr.bf16.mxu0 %v2478
    %3175 = vmatmul.mubr.bf16.gmra.mrb[0].mxu0 %v2477
    %v3176 = vpop.f32.mrb[0].mxu0
    %v3177 = vadd.f32 %v2485, %v3176
    %v3178 = vpop.f32.mrb[0].mxu0
    %v3179 = vadd.f32 %v2489, %v3178
    %v3180 = vpop.f32.mrb[0].mxu0
    %v3181 = vadd.f32 %v2485, %v3180
    %v3182 = vpop.f32.mrb[0].mxu0
    %v3183 = vadd.f32 %v2489, %v3182
    %3184 = vdwg.mxu0
    %3185 = vmatprep.subr.bf16.mxu0 %v2951
    %3186 = vmatpush1.bf16.msra.mxu0 %v2950
    %3187 = vmatprep.subr.bf16.mxu0 %v2955
    %3188 = vmatpush1.bf16.msra.mxu0 %v2954
    %3189 = vmatprep.subr.bf16.mxu0 %v2959
    %3190 = vmatpush1.bf16.msra.mxu0 %v2958
    %3191 = vmatprep.subr.bf16.mxu0 %v2963
    %3192 = vmatpush1.bf16.msra.mxu0 %v2962
    %3193 = vmatprep.subr.bf16.mxu0 %v2967
    %3194 = vmatpush1.bf16.msra.mxu0 %v2966
    %3195 = vmatprep.subr.bf16.mxu0 %v2971
    %3196 = vmatpush1.bf16.msra.mxu0 %v2970
    %3197 = vmatprep.subr.bf16.mxu0 %v2975
    %3198 = vmatpush1.bf16.msra.mxu0 %v2974
    %3199 = vmatprep.subr.bf16.mxu0 %v2979
    %3200 = vmatpush1.bf16.msra.mxu0 %v2978
    %3201 = vmatprep.subr.bf16.mxu0 %v2983
    %3202 = vmatpush1.bf16.msra.mxu0 %v2982
    %3203 = vmatprep.subr.bf16.mxu0 %v2987
    %3204 = vmatpush1.bf16.msra.mxu0 %v2986
    %3205 = vmatprep.subr.bf16.mxu0 %v2991
    %3206 = vmatpush1.bf16.msra.mxu0 %v2990
    %3207 = vmatprep.subr.bf16.mxu0 %v2995
    %3208 = vmatpush1.bf16.msra.mxu0 %v2994
    %3209 = vmatprep.subr.bf16.mxu0 %v2999
    %3210 = vmatpush1.bf16.msra.mxu0 %v2998
    %3211 = vmatprep.subr.bf16.mxu0 %v3003
    %3212 = vmatpush1.bf16.msra.mxu0 %v3002
    %3213 = vmatprep.subr.bf16.mxu0 %v3007
    %3214 = vmatpush1.bf16.msra.mxu0 %v3006
    %3215 = vmatprep.subr.bf16.mxu0 %v3011
    %3216 = vmatpush1.bf16.msra.mxu0 %v3010
    %3217 = vmatprep.mubr.bf16.mxu0 %v2480
    %3218 = vmatmul.mubr.bf16.gmra.mrb[0].mxu0 %v2479
    %v3219 = vpop.f32.mrb[0].mxu0
    %v3220 = vadd.f32 %v3177, %v3219
    %v3221 = vpop.f32.mrb[0].mxu0
    %v3222 = vadd.f32 %v3179, %v3221
    %v3223 = vpop.f32.mrb[0].mxu0
    %v3224 = vadd.f32 %v3181, %v3223
    %v3225 = vpop.f32.mrb[0].mxu0
    %v3226 = vadd.f32 %v3183, %v3225
    %3227 = vdwg.mxu0
    %3228 = vmatprep.subr.bf16.mxu0 %v2889
    %3229 = vmatpush1.bf16.msra.mxu0 %v2888
    %3230 = vmatprep.subr.bf16.mxu0 %v2893
    %3231 = vmatpush1.bf16.msra.mxu0 %v2892
    %3232 = vmatprep.subr.bf16.mxu0 %v2897
    %3233 = vmatpush1.bf16.msra.mxu0 %v2896
    %3234 = vmatprep.subr.bf16.mxu0 %v2901
    %3235 = vmatpush1.bf16.msra.mxu0 %v2900
    %3236 = vmatprep.subr.bf16.mxu0 %v2905
    %3237 = vmatpush1.bf16.msra.mxu0 %v2904
    %3238 = vmatprep.subr.bf16.mxu0 %v2909
    %3239 = vmatpush1.bf16.msra.mxu0 %v2908
    %3240 = vmatprep.subr.bf16.mxu0 %v2913
    %3241 = vmatpush1.bf16.msra.mxu0 %v2912
    %3242 = vmatprep.subr.bf16.mxu0 %v2917
    %3243 = vmatpush1.bf16.msra.mxu0 %v2916
    %3244 = vmatprep.subr.bf16.mxu0 %v2921
    %3245 = vmatpush1.bf16.msra.mxu0 %v2920
    %3246 = vmatprep.subr.bf16.mxu0 %v2925
    %3247 = vmatpush1.bf16.msra.mxu0 %v2924
    %3248 = vmatprep.subr.bf16.mxu0 %v2929
    %3249 = vmatpush1.bf16.msra.mxu0 %v2928
    %3250 = vmatprep.subr.bf16.mxu0 %v2933
    %3251 = vmatpush1.bf16.msra.mxu0 %v2932
    %3252 = vmatprep.subr.bf16.mxu0 %v2937
    %3253 = vmatpush1.bf16.msra.mxu0 %v2936
    %3254 = vmatprep.subr.bf16.mxu0 %v2941
    %3255 = vmatpush1.bf16.msra.mxu0 %v2940
    %3256 = vmatprep.subr.bf16.mxu0 %v2945
    %3257 = vmatpush1.bf16.msra.mxu0 %v2944
    %3258 = vmatprep.subr.bf16.mxu0 %v2949
    %3259 = vmatpush1.bf16.msra.mxu0 %v2948
    %3260 = vmatprep.mubr.bf16.mxu0 %v2478
    %3261 = vmatmul.mubr.bf16.gmra.mrb[0].mxu0 %v2477
    %v3262 = vpop.f32.mrb[0].mxu0
    %v3263 = vadd.f32 %v2493, %v3262
    %v3264 = vpop.f32.mrb[0].mxu0
    %v3265 = vadd.f32 %v2497, %v3264
    %v3266 = vpop.f32.mrb[0].mxu0
    %v3267 = vadd.f32 %v2493, %v3266
    %v3268 = vpop.f32.mrb[0].mxu0
    %v3269 = vadd.f32 %v2497, %v3268
    %3270 = vdwg.mxu0
    %3271 = vmatprep.subr.bf16.mxu0 %v2953
    %3272 = vmatpush1.bf16.msra.mxu0 %v2952
    %3273 = vmatprep.subr.bf16.mxu0 %v2957
    %3274 = vmatpush1.bf16.msra.mxu0 %v2956
    %3275 = vmatprep.subr.bf16.mxu0 %v2961
    %3276 = vmatpush1.bf16.msra.mxu0 %v2960
    %3277 = vmatprep.subr.bf16.mxu0 %v2965
    %3278 = vmatpush1.bf16.msra.mxu0 %v2964
    %3279 = vmatprep.subr.bf16.mxu0 %v2969
    %3280 = vmatpush1.bf16.msra.mxu0 %v2968
    %3281 = vmatprep.subr.bf16.mxu0 %v2973
    %3282 = vmatpush1.bf16.msra.mxu0 %v2972
    %3283 = vmatprep.subr.bf16.mxu0 %v2977
    %3284 = vmatpush1.bf16.msra.mxu0 %v2976
    %3285 = vmatprep.subr.bf16.mxu0 %v2981
    %3286 = vmatpush1.bf16.msra.mxu0 %v2980
    %3287 = vmatprep.subr.bf16.mxu0 %v2985
    %3288 = vmatpush1.bf16.msra.mxu0 %v2984
    %3289 = vmatprep.subr.bf16.mxu0 %v2989
    %3290 = vmatpush1.bf16.msra.mxu0 %v2988
    %3291 = vmatprep.subr.bf16.mxu0 %v2993
    %3292 = vmatpush1.bf16.msra.mxu0 %v2992
    %3293 = vmatprep.subr.bf16.mxu0 %v2997
    %3294 = vmatpush1.bf16.msra.mxu0 %v2996
    %3295 = vmatprep.subr.bf16.mxu0 %v3001
    %3296 = vmatpush1.bf16.msra.mxu0 %v3000
    %3297 = vmatprep.subr.bf16.mxu0 %v3005
    %3298 = vmatpush1.bf16.msra.mxu0 %v3004
    %3299 = vmatprep.subr.bf16.mxu0 %v3009
    %3300 = vmatpush1.bf16.msra.mxu0 %v3008
    %3301 = vmatprep.subr.bf16.mxu0 %v3013
    %3302 = vmatpush1.bf16.msra.mxu0 %v3012
    %3303 = vmatprep.mubr.bf16.mxu0 %v2480
    %3304 = vmatmul.mubr.bf16.gmra.mrb[0].mxu0 %v2479
    %v3305 = vpop.f32.mrb[0].mxu0
    %v3306 = vadd.f32 %v3263, %v3305
    %v3307 = vpop.f32.mrb[0].mxu0
    %v3308 = vadd.f32 %v3265, %v3307
    %v3309 = vpop.f32.mrb[0].mxu0
    %v3310 = vadd.f32 %v3267, %v3309
    %v3311 = vpop.f32.mrb[0].mxu0
    %v3312 = vadd.f32 %v3269, %v3311
    %3313 = vdwg.mxu0
    %v3314 = vmax.f32 %v3220, 0.0
    %v3315 = vmax.f32 %v3222, 0.0
    %v3316 = vmax.f32 %v3306, 0.0
    %v3317 = vmax.f32 %v3308, 0.0
    %v3318 = vmax.f32 %v3224, 0.0
    %v3319 = vmax.f32 %v3226, 0.0
    %v3320 = vmax.f32 %v3310, 0.0
    %v3321 = vmax.f32 %v3312, 0.0
    %v3322 = vld [vmem:[#allocation6] sm:$0xf]
    %v3323 = vld [vmem:[#allocation6 + $0x4] sm:$0xf]
    %v3324 = vld [vmem:[#allocation6 + $0x8] sm:$0xf]
    %v3325 = vld [vmem:[#allocation6 + $0xc] sm:$0xf]
    %v3326 = vld [vmem:[#allocation6 + $0x10] sm:$0xf]
    %v3327 = vld [vmem:[#allocation6 + $0x14] sm:$0xf]
    %v3328 = vld [vmem:[#allocation6 + $0x18] sm:$0xf]
    %v3329 = vld [vmem:[#allocation6 + $0x1c] sm:$0xf]
    %v3330 = vld [vmem:[#allocation6 + $0x20] sm:$0xf]
    %v3331 = vld [vmem:[#allocation6 + $0x24] sm:$0xf]
    %v3332 = vld [vmem:[#allocation6 + $0x28] sm:$0xf]
    %v3333 = vld [vmem:[#allocation6 + $0x2c] sm:$0xf]
    %v3334 = vld [vmem:[#allocation6 + $0x30] sm:$0xf]
    %v3335 = vld [vmem:[#allocation6 + $0x34] sm:$0xf]
    %v3336 = vld [vmem:[#allocation6 + $0x38] sm:$0xf]
    %v3337 = vld [vmem:[#allocation6 + $0x3c] sm:$0xf]
    %v3338 = vld [vmem:[#allocation6 + $0x40] sm:$0xf]
    %v3339 = vld [vmem:[#allocation6 + $0x44] sm:$0xf]
    %v3340 = vld [vmem:[#allocation6 + $0x48] sm:$0xf]
    %v3341 = vld [vmem:[#allocation6 + $0x4c] sm:$0xf]
    %v3342 = vld [vmem:[#allocation6 + $0x50] sm:$0xf]
    %v3343 = vld [vmem:[#allocation6 + $0x54] sm:$0xf]
    %v3344 = vld [vmem:[#allocation6 + $0x58] sm:$0xf]
    %v3345 = vld [vmem:[#allocation6 + $0x5c] sm:$0xf]
    %v3346 = vld [vmem:[#allocation6 + $0x60] sm:$0xf]
    %v3347 = vld [vmem:[#allocation6 + $0x64] sm:$0xf]
    %v3348 = vld [vmem:[#allocation6 + $0x68] sm:$0xf]
    %v3349 = vld [vmem:[#allocation6 + $0x6c] sm:$0xf]
    %v3350 = vld [vmem:[#allocation6 + $0x70] sm:$0xf]
    %v3351 = vld [vmem:[#allocation6 + $0x74] sm:$0xf]
    %v3352 = vld [vmem:[#allocation6 + $0x78] sm:$0xf]
    %v3353 = vld [vmem:[#allocation6 + $0x7c] sm:$0xf]
    %v3354 = vld [vmem:[#allocation6 + $0x80] sm:$0xf]
    %v3355 = vld [vmem:[#allocation6 + $0x84] sm:$0xf]
    %v3356 = vld [vmem:[#allocation6 + $0x88] sm:$0xf]
    %v3357 = vld [vmem:[#allocation6 + $0x8c] sm:$0xf]
    %v3358 = vld [vmem:[#allocation6 + $0x90] sm:$0xf]
    %v3359 = vld [vmem:[#allocation6 + $0x94] sm:$0xf]
    %v3360 = vld [vmem:[#allocation6 + $0x98] sm:$0xf]
    %v3361 = vld [vmem:[#allocation6 + $0x9c] sm:$0xf]
    %v3362 = vld [vmem:[#allocation6 + $0xa0] sm:$0xf]
    %v3363 = vld [vmem:[#allocation6 + $0xa4] sm:$0xf]
    %v3364 = vld [vmem:[#allocation6 + $0xa8] sm:$0xf]
    %v3365 = vld [vmem:[#allocation6 + $0xac] sm:$0xf]
    %v3366 = vld [vmem:[#allocation6 + $0xb0] sm:$0xf]
    %v3367 = vld [vmem:[#allocation6 + $0xb4] sm:$0xf]
    %v3368 = vld [vmem:[#allocation6 + $0xb8] sm:$0xf]
    %v3369 = vld [vmem:[#allocation6 + $0xbc] sm:$0xf]
    %v3370 = vld [vmem:[#allocation6 + $0xc0] sm:$0xf]
    %v3371 = vld [vmem:[#allocation6 + $0xc4] sm:$0xf]
    %v3372 = vld [vmem:[#allocation6 + $0xc8] sm:$0xf]
    %v3373 = vld [vmem:[#allocation6 + $0xcc] sm:$0xf]
    %v3374 = vld [vmem:[#allocation6 + $0xd0] sm:$0xf]
    %v3375 = vld [vmem:[#allocation6 + $0xd4] sm:$0xf]
    %v3376 = vld [vmem:[#allocation6 + $0xd8] sm:$0xf]
    %v3377 = vld [vmem:[#allocation6 + $0xdc] sm:$0xf]
    %v3378 = vld [vmem:[#allocation6 + $0xe0] sm:$0xf]
    %v3379 = vld [vmem:[#allocation6 + $0xe4] sm:$0xf]
    %v3380 = vld [vmem:[#allocation6 + $0xe8] sm:$0xf]
    %v3381 = vld [vmem:[#allocation6 + $0xec] sm:$0xf]
    %v3382 = vld [vmem:[#allocation6 + $0xf0] sm:$0xf]
    %v3383 = vld [vmem:[#allocation6 + $0xf4] sm:$0xf]
    %v3384 = vld [vmem:[#allocation6 + $0xf8] sm:$0xf]
    %v3385 = vld [vmem:[#allocation6 + $0xfc] sm:$0xf]
    %v3386 = vld [vmem:[#allocation7 + $0x4] ss:$0 sm:$0xff]
    %v3387 = vpack.c.bf16 %v3318, %v3314
    %v3388 = vpack.c.bf16 %v3319, %v3315
    %v3389 = vpack.c.bf16 %v3320, %v3316
    %v3390 = vpack.c.bf16 %v3321, %v3317
    %v3455 = vunpack.c.l.b16 %v3322
    %v3456 = vunpack.c.l.b16 %v3323
    %v3457 = vunpack.c.l.b16 %v3324
    %v3458 = vunpack.c.l.b16 %v3325
    %v3459 = vunpack.c.l.b16 %v3326
    %v3460 = vunpack.c.l.b16 %v3327
    %v3461 = vunpack.c.l.b16 %v3328
    %v3462 = vunpack.c.l.b16 %v3329
    %v3463 = vunpack.c.l.b16 %v3330
    %v3464 = vunpack.c.l.b16 %v3331
    %v3465 = vunpack.c.l.b16 %v3332
    %v3466 = vunpack.c.l.b16 %v3333
    %v3467 = vunpack.c.l.b16 %v3334
    %v3468 = vunpack.c.l.b16 %v3335
    %v3469 = vunpack.c.l.b16 %v3336
    %v3470 = vunpack.c.l.b16 %v3337
    %v3471 = vunpack.c.l.b16 %v3338
    %v3472 = vunpack.c.l.b16 %v3339
    %v3473 = vunpack.c.l.b16 %v3340
    %v3474 = vunpack.c.l.b16 %v3341
    %v3475 = vunpack.c.l.b16 %v3342
    %v3476 = vunpack.c.l.b16 %v3343
    %v3477 = vunpack.c.l.b16 %v3344
    %v3478 = vunpack.c.l.b16 %v3345
    %v3479 = vunpack.c.l.b16 %v3346
    %v3480 = vunpack.c.l.b16 %v3347
    %v3481 = vunpack.c.l.b16 %v3348
    %v3482 = vunpack.c.l.b16 %v3349
    %v3483 = vunpack.c.l.b16 %v3350
    %v3484 = vunpack.c.l.b16 %v3351
    %v3485 = vunpack.c.l.b16 %v3352
    %v3486 = vunpack.c.l.b16 %v3353
    %v3487 = vunpack.c.l.b16 %v3354
    %v3488 = vunpack.c.l.b16 %v3355
    %v3489 = vunpack.c.l.b16 %v3356
    %v3490 = vunpack.c.l.b16 %v3357
    %v3491 = vunpack.c.l.b16 %v3358
    %v3492 = vunpack.c.l.b16 %v3359
    %v3493 = vunpack.c.l.b16 %v3360
    %v3494 = vunpack.c.l.b16 %v3361
    %v3495 = vunpack.c.l.b16 %v3362
    %v3496 = vunpack.c.l.b16 %v3363
    %v3497 = vunpack.c.l.b16 %v3364
    %v3498 = vunpack.c.l.b16 %v3365
    %v3499 = vunpack.c.l.b16 %v3366
    %v3500 = vunpack.c.l.b16 %v3367
    %v3501 = vunpack.c.l.b16 %v3368
    %v3502 = vunpack.c.l.b16 %v3369
    %v3503 = vunpack.c.l.b16 %v3370
    %v3504 = vunpack.c.l.b16 %v3371
    %v3505 = vunpack.c.l.b16 %v3372
    %v3506 = vunpack.c.l.b16 %v3373
    %v3507 = vunpack.c.l.b16 %v3374
    %v3508 = vunpack.c.l.b16 %v3375
    %v3509 = vunpack.c.l.b16 %v3376
    %v3510 = vunpack.c.l.b16 %v3377
    %v3511 = vunpack.c.l.b16 %v3378
    %v3512 = vunpack.c.l.b16 %v3379
    %v3513 = vunpack.c.l.b16 %v3380
    %v3514 = vunpack.c.l.b16 %v3381
    %v3515 = vunpack.c.l.b16 %v3382
    %v3516 = vunpack.c.l.b16 %v3383
    %v3517 = vunpack.c.l.b16 %v3384
    %v3518 = vunpack.c.l.b16 %v3385
    %v3519 = vpack.c.b16 %v3456, %v3455
    %v3520 = vpack.c.b16 %v3458, %v3457
    %v3521 = vpack.c.b16 %v3460, %v3459
    %v3522 = vpack.c.b16 %v3462, %v3461
    %v3523 = vpack.c.b16 %v3464, %v3463
    %v3524 = vpack.c.b16 %v3466, %v3465
    %v3525 = vpack.c.b16 %v3468, %v3467
    %v3526 = vpack.c.b16 %v3470, %v3469
    %v3527 = vpack.c.b16 %v3472, %v3471
    %v3528 = vpack.c.b16 %v3474, %v3473
    %v3529 = vpack.c.b16 %v3476, %v3475
    %v3530 = vpack.c.b16 %v3478, %v3477
    %v3531 = vpack.c.b16 %v3480, %v3479
    %v3532 = vpack.c.b16 %v3482, %v3481
    %v3533 = vpack.c.b16 %v3484, %v3483
    %v3534 = vpack.c.b16 %v3486, %v3485
    %v3535 = vpack.c.b16 %v3488, %v3487
    %v3536 = vpack.c.b16 %v3490, %v3489
    %v3537 = vpack.c.b16 %v3492, %v3491
    %v3538 = vpack.c.b16 %v3494, %v3493
    %v3539 = vpack.c.b16 %v3496, %v3495
    %v3540 = vpack.c.b16 %v3498, %v3497
    %v3541 = vpack.c.b16 %v3500, %v3499
    %v3542 = vpack.c.b16 %v3502, %v3501
    %v3543 = vpack.c.b16 %v3504, %v3503
    %v3544 = vpack.c.b16 %v3506, %v3505
    %v3545 = vpack.c.b16 %v3508, %v3507
    %v3546 = vpack.c.b16 %v3510, %v3509
    %v3547 = vpack.c.b16 %v3512, %v3511
    %v3548 = vpack.c.b16 %v3514, %v3513
    %v3549 = vpack.c.b16 %v3516, %v3515
    %v3550 = vpack.c.b16 %v3518, %v3517
    %3583 = vmatprep.subr.bf16.mxu0 0
    %3584 = vmatpush1.bf16.msra.mxu0 %v3519
    %3585 = vmatprep.subr.bf16.mxu0 0
    %3586 = vmatpush1.bf16.msra.mxu0 %v3520
    %3587 = vmatprep.subr.bf16.mxu0 0
    %3588 = vmatpush1.bf16.msra.mxu0 %v3521
    %3589 = vmatprep.subr.bf16.mxu0 0
    %3590 = vmatpush1.bf16.msra.mxu0 %v3522
    %3591 = vmatprep.subr.bf16.mxu0 0
    %3592 = vmatpush1.bf16.msra.mxu0 %v3523
    %3593 = vmatprep.subr.bf16.mxu0 0
    %3594 = vmatpush1.bf16.msra.mxu0 %v3524
    %3595 = vmatprep.subr.bf16.mxu0 0
    %3596 = vmatpush1.bf16.msra.mxu0 %v3525
    %3597 = vmatprep.subr.bf16.mxu0 0
    %3598 = vmatpush1.bf16.msra.mxu0 %v3526
    %3599 = vmatprep.subr.bf16.mxu0 0
    %3600 = vmatpush1.bf16.msra.mxu0 %v3527
    %3601 = vmatprep.subr.bf16.mxu0 0
    %3602 = vmatpush1.bf16.msra.mxu0 %v3528
    %3603 = vmatprep.subr.bf16.mxu0 0
    %3604 = vmatpush1.bf16.msra.mxu0 %v3529
    %3605 = vmatprep.subr.bf16.mxu0 0
    %3606 = vmatpush1.bf16.msra.mxu0 %v3530
    %3607 = vmatprep.subr.bf16.mxu0 0
    %3608 = vmatpush1.bf16.msra.mxu0 %v3531
    %3609 = vmatprep.subr.bf16.mxu0 0
    %3610 = vmatpush1.bf16.msra.mxu0 %v3532
    %3611 = vmatprep.subr.bf16.mxu0 0
    %3612 = vmatpush1.bf16.msra.mxu0 %v3533
    %3613 = vmatprep.subr.bf16.mxu0 0
    %3614 = vmatpush1.bf16.msra.mxu0 %v3534
    %3615 = vmatprep.mubr.bf16.mxu0 %v3388
    %3616 = vmatmul.mubr.bf16.gmra.mrb[0].mxu0 %v3387
    %v3617 = vpop.f32.mrb[0].mxu0
    %v3618 = vadd.f32 %v3386, %v3617
    %v3619 = vpop.f32.mrb[0].mxu0
    %v3620 = vpop.f32.mrb[0].mxu0
    %v3621 = vadd.f32 %v3386, %v3620
    %v3622 = vpop.f32.mrb[0].mxu0
    %3623 = vdwg.mxu0
    %3624 = vmatprep.subr.bf16.mxu0 0
    %3625 = vmatpush1.bf16.msra.mxu0 %v3535
    %3626 = vmatprep.subr.bf16.mxu0 0
    %3627 = vmatpush1.bf16.msra.mxu0 %v3536
    %3628 = vmatprep.subr.bf16.mxu0 0
    %3629 = vmatpush1.bf16.msra.mxu0 %v3537
    %3630 = vmatprep.subr.bf16.mxu0 0
    %3631 = vmatpush1.bf16.msra.mxu0 %v3538
    %3632 = vmatprep.subr.bf16.mxu0 0
    %3633 = vmatpush1.bf16.msra.mxu0 %v3539
    %3634 = vmatprep.subr.bf16.mxu0 0
    %3635 = vmatpush1.bf16.msra.mxu0 %v3540
    %3636 = vmatprep.subr.bf16.mxu0 0
    %3637 = vmatpush1.bf16.msra.mxu0 %v3541
    %3638 = vmatprep.subr.bf16.mxu0 0
    %3639 = vmatpush1.bf16.msra.mxu0 %v3542
    %3640 = vmatprep.subr.bf16.mxu0 0
    %3641 = vmatpush1.bf16.msra.mxu0 %v3543
    %3642 = vmatprep.subr.bf16.mxu0 0
    %3643 = vmatpush1.bf16.msra.mxu0 %v3544
    %3644 = vmatprep.subr.bf16.mxu0 0
    %3645 = vmatpush1.bf16.msra.mxu0 %v3545
    %3646 = vmatprep.subr.bf16.mxu0 0
    %3647 = vmatpush1.bf16.msra.mxu0 %v3546
    %3648 = vmatprep.subr.bf16.mxu0 0
    %3649 = vmatpush1.bf16.msra.mxu0 %v3547
    %3650 = vmatprep.subr.bf16.mxu0 0
    %3651 = vmatpush1.bf16.msra.mxu0 %v3548
    %3652 = vmatprep.subr.bf16.mxu0 0
    %3653 = vmatpush1.bf16.msra.mxu0 %v3549
    %3654 = vmatprep.subr.bf16.mxu0 0
    %3655 = vmatpush1.bf16.msra.mxu0 %v3550
    %3656 = vmatprep.mubr.bf16.mxu0 %v3390
    %3657 = vmatmul.mubr.bf16.gmra.mrb[0].mxu0 %v3389
    %v3658 = vpop.f32.mrb[0].mxu0
    %v3659 = vadd.f32 %v3618, %v3658
    %v3660 = vpop.f32.mrb[0].mxu0
    %v3661 = vpop.f32.mrb[0].mxu0
    %v3662 = vadd.f32 %v3621, %v3661
    %v3663 = vpop.f32.mrb[0].mxu0
    %3664 = vdwg.mxu0
    %v3665 = vlaneseq
    %v3666 = vand.u32 %v3665, 127
    %vm3667 = vcmp.ge.s32.totalorder %v3666, 8
    %vm3668 = vcmp.lt.s32.totalorder %v3666, 16
    %vm3669 = vmand %vm3667, %vm3668
    %v3670 = vmul.f32 %v3659, 0.5
    %v3671 = vmul.f32 %v3662, 0.5
    %v3672 = vmul.f32 %v3670, 1.442695
    %v3673 = vpow.pop %v3672
    %v3674 = vmul.f32 %v3671, 1.442695
    %v3675 = vpow.pop %v3674
    %v3676 = vsel %vm3669, %v3673, 0.0
    %v3677 = vsel %vm3669, %v3675, 0.0
    %vm3678 = vcmp.lt.s32.totalorder %v3666, 8
    %v3679 = vsel %vm3678, %v3659, 0.0
    %v3680 = vsel %vm3678, %v3662, 0.0
    %v3681 = vld [vmem:[%s1] sm:$0xf]
    %v3682 = vld [vmem:[%s1 + $0x4] sm:$0xf]
    %v3683 = vunpack.c.l.bf16 %v3681
    %v3684 = vunpack.c.l.bf16 %v3682
    %v3685 = vmul.f32 %v3676, %v3683
    %v3686 = vmul.f32 %v3677, %v3684
    %v3687 = vadd.f32 %v3679, %v3685
    %v3688 = vadd.f32 %v3680, %v3686
    %s3689 = scalar_lea.vmem [#allocation2], 256
    %v3690 = vld [vmem:[%s3689] sm:$0xff]
    %v3691 = vld [vmem:[%s3689 + $0x8] sm:$0xff]
    %v3692 = vld [vmem:[%s3689 + $0x10] sm:$0xff]
    %v3693 = vld [vmem:[%s3689 + $0x18] sm:$0xff]
    %v3694 = vld [vmem:[%s3689 + $0x20] sm:$0xff]
    %v3695 = vld [vmem:[%s3689 + $0x28] sm:$0xff]
    %v3696 = vld [vmem:[%s3689 + $0x30] sm:$0xff]
    %v3697 = vld [vmem:[%s3689 + $0x38] sm:$0xff]
    %v3698 = vld [vmem:[%s3689 + $0x40] sm:$0xff]
    %v3699 = vld [vmem:[%s3689 + $0x48] sm:$0xff]
    %v3700 = vld [vmem:[%s3689 + $0x50] sm:$0xff]
    %v3701 = vld [vmem:[%s3689 + $0x58] sm:$0xff]
    %v3702 = vld [vmem:[%s3689 + $0x60] sm:$0xff]
    %v3703 = vld [vmem:[%s3689 + $0x68] sm:$0xff]
    %v3704 = vld [vmem:[%s3689 + $0x70] sm:$0xff]
    %v3705 = vld [vmem:[%s3689 + $0x78] sm:$0xff]
    %v3706 = vld [vmem:[%s3689 + $0x80] sm:$0xff]
    %v3707 = vld [vmem:[%s3689 + $0x88] sm:$0xff]
    %v3708 = vld [vmem:[%s3689 + $0x90] sm:$0xff]
    %v3709 = vld [vmem:[%s3689 + $0x98] sm:$0xff]
    %v3710 = vld [vmem:[%s3689 + $0xa0] sm:$0xff]
    %v3711 = vld [vmem:[%s3689 + $0xa8] sm:$0xff]
    %v3712 = vld [vmem:[%s3689 + $0xb0] sm:$0xff]
    %v3713 = vld [vmem:[%s3689 + $0xb8] sm:$0xff]
    %v3714 = vld [vmem:[%s3689 + $0xc0] sm:$0xff]
    %v3715 = vld [vmem:[%s3689 + $0xc8] sm:$0xff]
    %v3716 = vld [vmem:[%s3689 + $0xd0] sm:$0xff]
    %v3717 = vld [vmem:[%s3689 + $0xd8] sm:$0xff]
    %v3718 = vld [vmem:[%s3689 + $0xe0] sm:$0xff]
    %v3719 = vld [vmem:[%s3689 + $0xe8] sm:$0xff]
    %v3720 = vld [vmem:[%s3689 + $0xf0] sm:$0xff]
    %v3721 = vld [vmem:[%s3689 + $0xf8] sm:$0xff]
    %s3722 = scalar_lea.vmem [#allocation7], 5
    %v3723 = vld [vmem:[%s3722] ss:$8 sm:$0xf]
    %v3724 = vpack.c.bf16 %v3688, %v3687
    %v3726 = vlaneseq
    %v3727 = vshrl.u32 %v3726, 7
    %v3728 = vsub.s32 0, %v3727
    %v3729 = vrot.slane %v3723, %v3728
    %v3730 = vlaneseq
    %v3731 = vshrl.u32 %v3730, 7
    %v3732 = vsub.s32 1, %v3731
    %v3733 = vrot.slane %v3723, %v3732
    %v3734 = vlaneseq
    %v3735 = vshrl.u32 %v3734, 7
    %v3736 = vsub.s32 2, %v3735
    %v3737 = vrot.slane %v3723, %v3736
    %v3738 = vlaneseq
    %v3739 = vshrl.u32 %v3738, 7
    %v3740 = vsub.s32 3, %v3739
    %v3741 = vrot.slane %v3723, %v3740
    %v3778 = vunpack.c.l.b16 %v3690
    %v3779 = vunpack.c.h.b16 %v3690
    %v3780 = vunpack.c.l.b16 %v3691
    %v3781 = vunpack.c.h.b16 %v3691
    %v3782 = vunpack.c.l.b16 %v3692
    %v3783 = vunpack.c.h.b16 %v3692
    %v3784 = vunpack.c.l.b16 %v3693
    %v3785 = vunpack.c.h.b16 %v3693
    %v3786 = vunpack.c.l.b16 %v3694
    %v3787 = vunpack.c.h.b16 %v3694
    %v3788 = vunpack.c.l.b16 %v3695
    %v3789 = vunpack.c.h.b16 %v3695
    %v3790 = vunpack.c.l.b16 %v3696
    %v3791 = vunpack.c.h.b16 %v3696
    %v3792 = vunpack.c.l.b16 %v3697
    %v3793 = vunpack.c.h.b16 %v3697
    %v3794 = vunpack.c.l.b16 %v3698
    %v3795 = vunpack.c.h.b16 %v3698
    %v3796 = vunpack.c.l.b16 %v3699
    %v3797 = vunpack.c.h.b16 %v3699
    %v3798 = vunpack.c.l.b16 %v3700
    %v3799 = vunpack.c.h.b16 %v3700
    %v3800 = vunpack.c.l.b16 %v3701
    %v3801 = vunpack.c.h.b16 %v3701
    %v3802 = vunpack.c.l.b16 %v3702
    %v3803 = vunpack.c.h.b16 %v3702
    %v3804 = vunpack.c.l.b16 %v3703
    %v3805 = vunpack.c.h.b16 %v3703
    %v3806 = vunpack.c.l.b16 %v3704
    %v3807 = vunpack.c.h.b16 %v3704
    %v3808 = vunpack.c.l.b16 %v3705
    %v3809 = vunpack.c.h.b16 %v3705
    %v3810 = vunpack.c.l.b16 %v3706
    %v3811 = vunpack.c.h.b16 %v3706
    %v3812 = vunpack.c.l.b16 %v3707
    %v3813 = vunpack.c.h.b16 %v3707
    %v3814 = vunpack.c.l.b16 %v3708
    %v3815 = vunpack.c.h.b16 %v3708
    %v3816 = vunpack.c.l.b16 %v3709
    %v3817 = vunpack.c.h.b16 %v3709
    %v3818 = vunpack.c.l.b16 %v3710
    %v3819 = vunpack.c.h.b16 %v3710
    %v3820 = vunpack.c.l.b16 %v3711
    %v3821 = vunpack.c.h.b16 %v3711
    %v3822 = vunpack.c.l.b16 %v3712
    %v3823 = vunpack.c.h.b16 %v3712
    %v3824 = vunpack.c.l.b16 %v3713
    %v3825 = vunpack.c.h.b16 %v3713
    %v3826 = vunpack.c.l.b16 %v3714
    %v3827 = vunpack.c.h.b16 %v3714
    %v3828 = vunpack.c.l.b16 %v3715
    %v3829 = vunpack.c.h.b16 %v3715
    %v3830 = vunpack.c.l.b16 %v3716
    %v3831 = vunpack.c.h.b16 %v3716
    %v3832 = vunpack.c.l.b16 %v3717
    %v3833 = vunpack.c.h.b16 %v3717
    %v3834 = vunpack.c.l.b16 %v3718
    %v3835 = vunpack.c.h.b16 %v3718
    %v3836 = vunpack.c.l.b16 %v3719
    %v3837 = vunpack.c.h.b16 %v3719
    %v3838 = vunpack.c.l.b16 %v3720
    %v3839 = vunpack.c.h.b16 %v3720
    %v3840 = vunpack.c.l.b16 %v3721
    %v3841 = vunpack.c.h.b16 %v3721
    %v3842 = vpack.c.b16 %v3782, %v3778
    %v3843 = vpack.c.b16 %v3783, %v3779
    %v3844 = vpack.c.b16 %v3784, %v3780
    %v3845 = vpack.c.b16 %v3785, %v3781
    %v3846 = vpack.c.b16 %v3790, %v3786
    %v3847 = vpack.c.b16 %v3791, %v3787
    %v3848 = vpack.c.b16 %v3792, %v3788
    %v3849 = vpack.c.b16 %v3793, %v3789
    %v3850 = vpack.c.b16 %v3798, %v3794
    %v3851 = vpack.c.b16 %v3799, %v3795
    %v3852 = vpack.c.b16 %v3800, %v3796
    %v3853 = vpack.c.b16 %v3801, %v3797
    %v3854 = vpack.c.b16 %v3806, %v3802
    %v3855 = vpack.c.b16 %v3807, %v3803
    %v3856 = vpack.c.b16 %v3808, %v3804
    %v3857 = vpack.c.b16 %v3809, %v3805
    %v3858 = vpack.c.b16 %v3814, %v3810
    %v3859 = vpack.c.b16 %v3815, %v3811
    %v3860 = vpack.c.b16 %v3816, %v3812
    %v3861 = vpack.c.b16 %v3817, %v3813
    %v3862 = vpack.c.b16 %v3822, %v3818
    %v3863 = vpack.c.b16 %v3823, %v3819
    %v3864 = vpack.c.b16 %v3824, %v3820
    %v3865 = vpack.c.b16 %v3825, %v3821
    %v3866 = vpack.c.b16 %v3830, %v3826
    %v3867 = vpack.c.b16 %v3831, %v3827
    %v3868 = vpack.c.b16 %v3832, %v3828
    %v3869 = vpack.c.b16 %v3833, %v3829
    %v3870 = vpack.c.b16 %v3838, %v3834
    %v3871 = vpack.c.b16 %v3839, %v3835
    %v3872 = vpack.c.b16 %v3840, %v3836
    %v3873 = vpack.c.b16 %v3841, %v3837
    %3906 = vmatprep.subr.bf16.mxu0 %v3843
    %3907 = vmatpush1.bf16.msra.mxu0 %v3842
    %3908 = vmatprep.subr.bf16.mxu0 %v3847
    %3909 = vmatpush1.bf16.msra.mxu0 %v3846
    %3910 = vmatprep.subr.bf16.mxu0 %v3851
    %3911 = vmatpush1.bf16.msra.mxu0 %v3850
    %3912 = vmatprep.subr.bf16.mxu0 %v3855
    %3913 = vmatpush1.bf16.msra.mxu0 %v3854
    %3914 = vmatprep.subr.bf16.mxu0 %v3859
    %3915 = vmatpush1.bf16.msra.mxu0 %v3858
    %3916 = vmatprep.subr.bf16.mxu0 %v3863
    %3917 = vmatpush1.bf16.msra.mxu0 %v3862
    %3918 = vmatprep.subr.bf16.mxu0 %v3867
    %3919 = vmatpush1.bf16.msra.mxu0 %v3866
    %3920 = vmatprep.subr.bf16.mxu0 %v3871
    %3921 = vmatpush1.bf16.msra.mxu0 %v3870
    %3922 = vmatprep.subr.bf16.mxu0 0
    %3923 = vmatpush1.bf16.msra.mxu0 0
    %3924 = vmatprep.subr.bf16.mxu0 0
    %3925 = vmatpush1.bf16.msra.mxu0 0
    %3926 = vmatprep.subr.bf16.mxu0 0
    %3927 = vmatpush1.bf16.msra.mxu0 0
    %3928 = vmatprep.subr.bf16.mxu0 0
    %3929 = vmatpush1.bf16.msra.mxu0 0
    %3930 = vmatprep.subr.bf16.mxu0 0
    %3931 = vmatpush1.bf16.msra.mxu0 0
    %3932 = vmatprep.subr.bf16.mxu0 0
    %3933 = vmatpush1.bf16.msra.mxu0 0
    %3934 = vmatprep.subr.bf16.mxu0 0
    %3935 = vmatpush1.bf16.msra.mxu0 0
    %3936 = vmatprep.subr.bf16.mxu0 0
    %3937 = vmatpush1.bf16.msra.mxu0 0
    %3938 = vmatprep.mubr.bf16.mxu0 0
    %3939 = vmatmul.mubr.bf16.gmra.mrb[0].mxu0 %v3724
    %v3940 = vpop.f32.mrb[0].mxu0
    %v3941 = vadd.f32 %v3729, %v3940
    %v3942 = vpop.f32.mrb[0].mxu0
    %v3943 = vadd.f32 %v3733, %v3942
    %v3944 = vpop.f32.mrb[0].mxu0
    %v3945 = vadd.f32 %v3729, %v3944
    %v3946 = vpop.f32.mrb[0].mxu0
    %v3947 = vadd.f32 %v3733, %v3946
    %3948 = vdwg.mxu0
    %3949 = vmatprep.subr.bf16.mxu0 %v3845
    %3950 = vmatpush1.bf16.msra.mxu0 %v3844
    %3951 = vmatprep.subr.bf16.mxu0 %v3849
    %3952 = vmatpush1.bf16.msra.mxu0 %v3848
    %3953 = vmatprep.subr.bf16.mxu0 %v3853
    %3954 = vmatpush1.bf16.msra.mxu0 %v3852
    %3955 = vmatprep.subr.bf16.mxu0 %v3857
    %3956 = vmatpush1.bf16.msra.mxu0 %v3856
    %3957 = vmatprep.subr.bf16.mxu0 %v3861
    %3958 = vmatpush1.bf16.msra.mxu0 %v3860
    %3959 = vmatprep.subr.bf16.mxu0 %v3865
    %3960 = vmatpush1.bf16.msra.mxu0 %v3864
    %3961 = vmatprep.subr.bf16.mxu0 %v3869
    %3962 = vmatpush1.bf16.msra.mxu0 %v3868
    %3963 = vmatprep.subr.bf16.mxu0 %v3873
    %3964 = vmatpush1.bf16.msra.mxu0 %v3872
    %3965 = vmatprep.subr.bf16.mxu0 0
    %3966 = vmatpush1.bf16.msra.mxu0 0
    %3967 = vmatprep.subr.bf16.mxu0 0
    %3968 = vmatpush1.bf16.msra.mxu0 0
    %3969 = vmatprep.subr.bf16.mxu0 0
    %3970 = vmatpush1.bf16.msra.mxu0 0
    %3971 = vmatprep.subr.bf16.mxu0 0
    %3972 = vmatpush1.bf16.msra.mxu0 0
    %3973 = vmatprep.subr.bf16.mxu0 0
    %3974 = vmatpush1.bf16.msra.mxu0 0
    %3975 = vmatprep.subr.bf16.mxu0 0
    %3976 = vmatpush1.bf16.msra.mxu0 0
    %3977 = vmatprep.subr.bf16.mxu0 0
    %3978 = vmatpush1.bf16.msra.mxu0 0
    %3979 = vmatprep.subr.bf16.mxu0 0
    %3980 = vmatpush1.bf16.msra.mxu0 0
    %3981 = vmatprep.mubr.bf16.mxu0 0
    %3982 = vmatmul.mubr.bf16.gmra.mrb[0].mxu0 %v3724
    %v3983 = vpop.f32.mrb[0].mxu0
    %v3984 = vadd.f32 %v3737, %v3983
    %v3985 = vpop.f32.mrb[0].mxu0
    %v3986 = vadd.f32 %v3741, %v3985
    %v3987 = vpop.f32.mrb[0].mxu0
    %v3988 = vadd.f32 %v3737, %v3987
    %v3989 = vpop.f32.mrb[0].mxu0
    %v3990 = vadd.f32 %v3741, %v3989
    %3991 = vdwg.mxu0
    %v3992 = vmax.f32 %v3941, 0.0
    %v3993 = vmax.f32 %v3943, 0.0
    %v3994 = vmax.f32 %v3984, 0.0
    %v3995 = vmax.f32 %v3986, 0.0
    %v3996 = vmax.f32 %v3945, 0.0
    %v3997 = vmax.f32 %v3947, 0.0
    %v3998 = vmax.f32 %v3988, 0.0
    %v3999 = vmax.f32 %v3990, 0.0
    %s4000 = scalar_lea.vmem [#allocation4], 3072
    %v4001 = vld [vmem:[%s4000] sm:$0xff]
    %v4002 = vld [vmem:[%s4000 + $0x8] sm:$0xff]
    %v4003 = vld [vmem:[%s4000 + $0x10] sm:$0xff]
    %v4004 = vld [vmem:[%s4000 + $0x18] sm:$0xff]
    %v4005 = vld [vmem:[%s4000 + $0x20] sm:$0xff]
    %v4006 = vld [vmem:[%s4000 + $0x28] sm:$0xff]
    %v4007 = vld [vmem:[%s4000 + $0x30] sm:$0xff]
    %v4008 = vld [vmem:[%s4000 + $0x38] sm:$0xff]
    %v4009 = vld [vmem:[%s4000 + $0x40] sm:$0xff]
    %v4010 = vld [vmem:[%s4000 + $0x48] sm:$0xff]
    %v4011 = vld [vmem:[%s4000 + $0x50] sm:$0xff]
    %v4012 = vld [vmem:[%s4000 + $0x58] sm:$0xff]
    %v4013 = vld [vmem:[%s4000 + $0x60] sm:$0xff]
    %v4014 = vld [vmem:[%s4000 + $0x68] sm:$0xff]
    %v4015 = vld [vmem:[%s4000 + $0x70] sm:$0xff]
    %v4016 = vld [vmem:[%s4000 + $0x78] sm:$0xff]
    %v4017 = vld [vmem:[%s4000 + $0x80] sm:$0xff]
    %v4018 = vld [vmem:[%s4000 + $0x88] sm:$0xff]
    %v4019 = vld [vmem:[%s4000 + $0x90] sm:$0xff]
    %v4020 = vld [vmem:[%s4000 + $0x98] sm:$0xff]
    %v4021 = vld [vmem:[%s4000 + $0xa0] sm:$0xff]
    %v4022 = vld [vmem:[%s4000 + $0xa8] sm:$0xff]
    %v4023 = vld [vmem:[%s4000 + $0xb0] sm:$0xff]
    %v4024 = vld [vmem:[%s4000 + $0xb8] sm:$0xff]
    %v4025 = vld [vmem:[%s4000 + $0xc0] sm:$0xff]
    %v4026 = vld [vmem:[%s4000 + $0xc8] sm:$0xff]
    %v4027 = vld [vmem:[%s4000 + $0xd0] sm:$0xff]
    %v4028 = vld [vmem:[%s4000 + $0xd8] sm:$0xff]
    %v4029 = vld [vmem:[%s4000 + $0xe0] sm:$0xff]
    %v4030 = vld [vmem:[%s4000 + $0xe8] sm:$0xff]
    %v4031 = vld [vmem:[%s4000 + $0xf0] sm:$0xff]
    %v4032 = vld [vmem:[%s4000 + $0xf8] sm:$0xff]
    %v4033 = vld [vmem:[%s4000 + $0x100] sm:$0xff]
    %v4034 = vld [vmem:[%s4000 + $0x108] sm:$0xff]
    %v4035 = vld [vmem:[%s4000 + $0x110] sm:$0xff]
    %v4036 = vld [vmem:[%s4000 + $0x118] sm:$0xff]
    %v4037 = vld [vmem:[%s4000 + $0x120] sm:$0xff]
    %v4038 = vld [vmem:[%s4000 + $0x128] sm:$0xff]
    %v4039 = vld [vmem:[%s4000 + $0x130] sm:$0xff]
    %v4040 = vld [vmem:[%s4000 + $0x138] sm:$0xff]
    %v4041 = vld [vmem:[%s4000 + $0x140] sm:$0xff]
    %v4042 = vld [vmem:[%s4000 + $0x148] sm:$0xff]
    %v4043 = vld [vmem:[%s4000 + $0x150] sm:$0xff]
    %v4044 = vld [vmem:[%s4000 + $0x158] sm:$0xff]
    %v4045 = vld [vmem:[%s4000 + $0x160] sm:$0xff]
    %v4046 = vld [vmem:[%s4000 + $0x168] sm:$0xff]
    %v4047 = vld [vmem:[%s4000 + $0x170] sm:$0xff]
    %v4048 = vld [vmem:[%s4000 + $0x178] sm:$0xff]
    %v4049 = vld [vmem:[%s4000 + $0x180] sm:$0xff]
    %v4050 = vld [vmem:[%s4000 + $0x188] sm:$0xff]
    %v4051 = vld [vmem:[%s4000 + $0x190] sm:$0xff]
    %v4052 = vld [vmem:[%s4000 + $0x198] sm:$0xff]
    %v4053 = vld [vmem:[%s4000 + $0x1a0] sm:$0xff]
    %v4054 = vld [vmem:[%s4000 + $0x1a8] sm:$0xff]
    %v4055 = vld [vmem:[%s4000 + $0x1b0] sm:$0xff]
    %v4056 = vld [vmem:[%s4000 + $0x1b8] sm:$0xff]
    %v4057 = vld [vmem:[%s4000 + $0x1c0] sm:$0xff]
    %v4058 = vld [vmem:[%s4000 + $0x1c8] sm:$0xff]
    %v4059 = vld [vmem:[%s4000 + $0x1d0] sm:$0xff]
    %v4060 = vld [vmem:[%s4000 + $0x1d8] sm:$0xff]
    %v4061 = vld [vmem:[%s4000 + $0x1e0] sm:$0xff]
    %v4062 = vld [vmem:[%s4000 + $0x1e8] sm:$0xff]
    %v4063 = vld [vmem:[%s4000 + $0x1f0] sm:$0xff]
    %v4064 = vld [vmem:[%s4000 + $0x1f8] sm:$0xff]
    %v4065 = vld [vmem:[%s4000 + $0x200] sm:$0xff]
    %v4066 = vld [vmem:[%s4000 + $0x208] sm:$0xff]
    %v4067 = vld [vmem:[%s4000 + $0x210] sm:$0xff]
    %v4068 = vld [vmem:[%s4000 + $0x218] sm:$0xff]
    %v4069 = vld [vmem:[%s4000 + $0x220] sm:$0xff]
    %v4070 = vld [vmem:[%s4000 + $0x228] sm:$0xff]
    %v4071 = vld [vmem:[%s4000 + $0x230] sm:$0xff]
    %v4072 = vld [vmem:[%s4000 + $0x238] sm:$0xff]
    %v4073 = vld [vmem:[%s4000 + $0x240] sm:$0xff]
    %v4074 = vld [vmem:[%s4000 + $0x248] sm:$0xff]
    %v4075 = vld [vmem:[%s4000 + $0x250] sm:$0xff]
    %v4076 = vld [vmem:[%s4000 + $0x258] sm:$0xff]
    %v4077 = vld [vmem:[%s4000 + $0x260] sm:$0xff]
    %v4078 = vld [vmem:[%s4000 + $0x268] sm:$0xff]
    %v4079 = vld [vmem:[%s4000 + $0x270] sm:$0xff]
    %v4080 = vld [vmem:[%s4000 + $0x278] sm:$0xff]
    %v4081 = vld [vmem:[%s4000 + $0x280] sm:$0xff]
    %v4082 = vld [vmem:[%s4000 + $0x288] sm:$0xff]
    %v4083 = vld [vmem:[%s4000 + $0x290] sm:$0xff]
    %v4084 = vld [vmem:[%s4000 + $0x298] sm:$0xff]
    %v4085 = vld [vmem:[%s4000 + $0x2a0] sm:$0xff]
    %v4086 = vld [vmem:[%s4000 + $0x2a8] sm:$0xff]
    %v4087 = vld [vmem:[%s4000 + $0x2b0] sm:$0xff]
    %v4088 = vld [vmem:[%s4000 + $0x2b8] sm:$0xff]
    %v4089 = vld [vmem:[%s4000 + $0x2c0] sm:$0xff]
    %v4090 = vld [vmem:[%s4000 + $0x2c8] sm:$0xff]
    %v4091 = vld [vmem:[%s4000 + $0x2d0] sm:$0xff]
    %v4092 = vld [vmem:[%s4000 + $0x2d8] sm:$0xff]
    %v4093 = vld [vmem:[%s4000 + $0x2e0] sm:$0xff]
    %v4094 = vld [vmem:[%s4000 + $0x2e8] sm:$0xff]
    %v4095 = vld [vmem:[%s4000 + $0x2f0] sm:$0xff]
    %v4096 = vld [vmem:[%s4000 + $0x2f8] sm:$0xff]
    %v4097 = vld [vmem:[%s4000 + $0x300] sm:$0xff]
    %v4098 = vld [vmem:[%s4000 + $0x308] sm:$0xff]
    %v4099 = vld [vmem:[%s4000 + $0x310] sm:$0xff]
    %v4100 = vld [vmem:[%s4000 + $0x318] sm:$0xff]
    %v4101 = vld [vmem:[%s4000 + $0x320] sm:$0xff]
    %v4102 = vld [vmem:[%s4000 + $0x328] sm:$0xff]
    %v4103 = vld [vmem:[%s4000 + $0x330] sm:$0xff]
    %v4104 = vld [vmem:[%s4000 + $0x338] sm:$0xff]
    %v4105 = vld [vmem:[%s4000 + $0x340] sm:$0xff]
    %v4106 = vld [vmem:[%s4000 + $0x348] sm:$0xff]
    %v4107 = vld [vmem:[%s4000 + $0x350] sm:$0xff]
    %v4108 = vld [vmem:[%s4000 + $0x358] sm:$0xff]
    %v4109 = vld [vmem:[%s4000 + $0x360] sm:$0xff]
    %v4110 = vld [vmem:[%s4000 + $0x368] sm:$0xff]
    %v4111 = vld [vmem:[%s4000 + $0x370] sm:$0xff]
    %v4112 = vld [vmem:[%s4000 + $0x378] sm:$0xff]
    %v4113 = vld [vmem:[%s4000 + $0x380] sm:$0xff]
    %v4114 = vld [vmem:[%s4000 + $0x388] sm:$0xff]
    %v4115 = vld [vmem:[%s4000 + $0x390] sm:$0xff]
    %v4116 = vld [vmem:[%s4000 + $0x398] sm:$0xff]
    %v4117 = vld [vmem:[%s4000 + $0x3a0] sm:$0xff]
    %v4118 = vld [vmem:[%s4000 + $0x3a8] sm:$0xff]
    %v4119 = vld [vmem:[%s4000 + $0x3b0] sm:$0xff]
    %v4120 = vld [vmem:[%s4000 + $0x3b8] sm:$0xff]
    %v4121 = vld [vmem:[%s4000 + $0x3c0] sm:$0xff]
    %v4122 = vld [vmem:[%s4000 + $0x3c8] sm:$0xff]
    %v4123 = vld [vmem:[%s4000 + $0x3d0] sm:$0xff]
    %v4124 = vld [vmem:[%s4000 + $0x3d8] sm:$0xff]
    %v4125 = vld [vmem:[%s4000 + $0x3e0] sm:$0xff]
    %v4126 = vld [vmem:[%s4000 + $0x3e8] sm:$0xff]
    %v4127 = vld [vmem:[%s4000 + $0x3f0] sm:$0xff]
    %v4128 = vld [vmem:[%s4000 + $0x3f8] sm:$0xff]
    %s4129 = scalar_lea.vmem [#allocation7], 6
    %v4130 = vld [vmem:[%s4129] ss:$8 sm:$0xf]
    %v4131 = vpack.c.bf16 %v3996, %v3992
    %v4132 = vpack.c.bf16 %v3997, %v3993
    %v4133 = vpack.c.bf16 %v3998, %v3994
    %v4134 = vpack.c.bf16 %v3999, %v3995
    %v4136 = vlaneseq
    %v4137 = vshrl.u32 %v4136, 7
    %v4138 = vsub.s32 0, %v4137
    %v4139 = vrot.slane %v4130, %v4138
    %v4140 = vlaneseq
    %v4141 = vshrl.u32 %v4140, 7
    %v4142 = vsub.s32 1, %v4141
    %v4143 = vrot.slane %v4130, %v4142
    %v4144 = vlaneseq
    %v4145 = vshrl.u32 %v4144, 7
    %v4146 = vsub.s32 2, %v4145
    %v4147 = vrot.slane %v4130, %v4146
    %v4148 = vlaneseq
    %v4149 = vshrl.u32 %v4148, 7
    %v4150 = vsub.s32 3, %v4149
    %v4151 = vrot.slane %v4130, %v4150
    %v4284 = vunpack.c.l.b16 %v4001
    %v4285 = vunpack.c.h.b16 %v4001
    %v4286 = vunpack.c.l.b16 %v4002
    %v4287 = vunpack.c.h.b16 %v4002
    %v4288 = vunpack.c.l.b16 %v4003
    %v4289 = vunpack.c.h.b16 %v4003
    %v4290 = vunpack.c.l.b16 %v4004
    %v4291 = vunpack.c.h.b16 %v4004
    %v4292 = vunpack.c.l.b16 %v4005
    %v4293 = vunpack.c.h.b16 %v4005
    %v4294 = vunpack.c.l.b16 %v4006
    %v4295 = vunpack.c.h.b16 %v4006
    %v4296 = vunpack.c.l.b16 %v4007
    %v4297 = vunpack.c.h.b16 %v4007
    %v4298 = vunpack.c.l.b16 %v4008
    %v4299 = vunpack.c.h.b16 %v4008
    %v4300 = vunpack.c.l.b16 %v4009
    %v4301 = vunpack.c.h.b16 %v4009
    %v4302 = vunpack.c.l.b16 %v4010
    %v4303 = vunpack.c.h.b16 %v4010
    %v4304 = vunpack.c.l.b16 %v4011
    %v4305 = vunpack.c.h.b16 %v4011
    %v4306 = vunpack.c.l.b16 %v4012
    %v4307 = vunpack.c.h.b16 %v4012
    %v4308 = vunpack.c.l.b16 %v4013
    %v4309 = vunpack.c.h.b16 %v4013
    %v4310 = vunpack.c.l.b16 %v4014
    %v4311 = vunpack.c.h.b16 %v4014
    %v4312 = vunpack.c.l.b16 %v4015
    %v4313 = vunpack.c.h.b16 %v4015
    %v4314 = vunpack.c.l.b16 %v4016
    %v4315 = vunpack.c.h.b16 %v4016
    %v4316 = vunpack.c.l.b16 %v4017
    %v4317 = vunpack.c.h.b16 %v4017
    %v4318 = vunpack.c.l.b16 %v4018
    %v4319 = vunpack.c.h.b16 %v4018
    %v4320 = vunpack.c.l.b16 %v4019
    %v4321 = vunpack.c.h.b16 %v4019
    %v4322 = vunpack.c.l.b16 %v4020
    %v4323 = vunpack.c.h.b16 %v4020
    %v4324 = vunpack.c.l.b16 %v4021
    %v4325 = vunpack.c.h.b16 %v4021
    %v4326 = vunpack.c.l.b16 %v4022
    %v4327 = vunpack.c.h.b16 %v4022
    %v4328 = vunpack.c.l.b16 %v4023
    %v4329 = vunpack.c.h.b16 %v4023
    %v4330 = vunpack.c.l.b16 %v4024
    %v4331 = vunpack.c.h.b16 %v4024
    %v4332 = vunpack.c.l.b16 %v4025
    %v4333 = vunpack.c.h.b16 %v4025
    %v4334 = vunpack.c.l.b16 %v4026
    %v4335 = vunpack.c.h.b16 %v4026
    %v4336 = vunpack.c.l.b16 %v4027
    %v4337 = vunpack.c.h.b16 %v4027
    %v4338 = vunpack.c.l.b16 %v4028
    %v4339 = vunpack.c.h.b16 %v4028
    %v4340 = vunpack.c.l.b16 %v4029
    %v4341 = vunpack.c.h.b16 %v4029
    %v4342 = vunpack.c.l.b16 %v4030
    %v4343 = vunpack.c.h.b16 %v4030
    %v4344 = vunpack.c.l.b16 %v4031
    %v4345 = vunpack.c.h.b16 %v4031
    %v4346 = vunpack.c.l.b16 %v4032
    %v4347 = vunpack.c.h.b16 %v4032
    %v4348 = vunpack.c.l.b16 %v4033
    %v4349 = vunpack.c.h.b16 %v4033
    %v4350 = vunpack.c.l.b16 %v4034
    %v4351 = vunpack.c.h.b16 %v4034
    %v4352 = vunpack.c.l.b16 %v4035
    %v4353 = vunpack.c.h.b16 %v4035
    %v4354 = vunpack.c.l.b16 %v4036
    %v4355 = vunpack.c.h.b16 %v4036
    %v4356 = vunpack.c.l.b16 %v4037
    %v4357 = vunpack.c.h.b16 %v4037
    %v4358 = vunpack.c.l.b16 %v4038
    %v4359 = vunpack.c.h.b16 %v4038
    %v4360 = vunpack.c.l.b16 %v4039
    %v4361 = vunpack.c.h.b16 %v4039
    %v4362 = vunpack.c.l.b16 %v4040
    %v4363 = vunpack.c.h.b16 %v4040
    %v4364 = vunpack.c.l.b16 %v4041
    %v4365 = vunpack.c.h.b16 %v4041
    %v4366 = vunpack.c.l.b16 %v4042
    %v4367 = vunpack.c.h.b16 %v4042
    %v4368 = vunpack.c.l.b16 %v4043
    %v4369 = vunpack.c.h.b16 %v4043
    %v4370 = vunpack.c.l.b16 %v4044
    %v4371 = vunpack.c.h.b16 %v4044
    %v4372 = vunpack.c.l.b16 %v4045
    %v4373 = vunpack.c.h.b16 %v4045
    %v4374 = vunpack.c.l.b16 %v4046
    %v4375 = vunpack.c.h.b16 %v4046
    %v4376 = vunpack.c.l.b16 %v4047
    %v4377 = vunpack.c.h.b16 %v4047
    %v4378 = vunpack.c.l.b16 %v4048
    %v4379 = vunpack.c.h.b16 %v4048
    %v4380 = vunpack.c.l.b16 %v4049
    %v4381 = vunpack.c.h.b16 %v4049
    %v4382 = vunpack.c.l.b16 %v4050
    %v4383 = vunpack.c.h.b16 %v4050
    %v4384 = vunpack.c.l.b16 %v4051
    %v4385 = vunpack.c.h.b16 %v4051
    %v4386 = vunpack.c.l.b16 %v4052
    %v4387 = vunpack.c.h.b16 %v4052
    %v4388 = vunpack.c.l.b16 %v4053
    %v4389 = vunpack.c.h.b16 %v4053
    %v4390 = vunpack.c.l.b16 %v4054
    %v4391 = vunpack.c.h.b16 %v4054
    %v4392 = vunpack.c.l.b16 %v4055
    %v4393 = vunpack.c.h.b16 %v4055
    %v4394 = vunpack.c.l.b16 %v4056
    %v4395 = vunpack.c.h.b16 %v4056
    %v4396 = vunpack.c.l.b16 %v4057
    %v4397 = vunpack.c.h.b16 %v4057
    %v4398 = vunpack.c.l.b16 %v4058
    %v4399 = vunpack.c.h.b16 %v4058
    %v4400 = vunpack.c.l.b16 %v4059
    %v4401 = vunpack.c.h.b16 %v4059
    %v4402 = vunpack.c.l.b16 %v4060
    %v4403 = vunpack.c.h.b16 %v4060
    %v4404 = vunpack.c.l.b16 %v4061
    %v4405 = vunpack.c.h.b16 %v4061
    %v4406 = vunpack.c.l.b16 %v4062
    %v4407 = vunpack.c.h.b16 %v4062
    %v4408 = vunpack.c.l.b16 %v4063
    %v4409 = vunpack.c.h.b16 %v4063
    %v4410 = vunpack.c.l.b16 %v4064
    %v4411 = vunpack.c.h.b16 %v4064
    %v4412 = vunpack.c.l.b16 %v4065
    %v4413 = vunpack.c.h.b16 %v4065
    %v4414 = vunpack.c.l.b16 %v4066
    %v4415 = vunpack.c.h.b16 %v4066
    %v4416 = vunpack.c.l.b16 %v4067
    %v4417 = vunpack.c.h.b16 %v4067
    %v4418 = vunpack.c.l.b16 %v4068
    %v4419 = vunpack.c.h.b16 %v4068
    %v4420 = vunpack.c.l.b16 %v4069
    %v4421 = vunpack.c.h.b16 %v4069
    %v4422 = vunpack.c.l.b16 %v4070
    %v4423 = vunpack.c.h.b16 %v4070
    %v4424 = vunpack.c.l.b16 %v4071
    %v4425 = vunpack.c.h.b16 %v4071
    %v4426 = vunpack.c.l.b16 %v4072
    %v4427 = vunpack.c.h.b16 %v4072
    %v4428 = vunpack.c.l.b16 %v4073
    %v4429 = vunpack.c.h.b16 %v4073
    %v4430 = vunpack.c.l.b16 %v4074
    %v4431 = vunpack.c.h.b16 %v4074
    %v4432 = vunpack.c.l.b16 %v4075
    %v4433 = vunpack.c.h.b16 %v4075
    %v4434 = vunpack.c.l.b16 %v4076
    %v4435 = vunpack.c.h.b16 %v4076
    %v4436 = vunpack.c.l.b16 %v4077
    %v4437 = vunpack.c.h.b16 %v4077
    %v4438 = vunpack.c.l.b16 %v4078
    %v4439 = vunpack.c.h.b16 %v4078
    %v4440 = vunpack.c.l.b16 %v4079
    %v4441 = vunpack.c.h.b16 %v4079
    %v4442 = vunpack.c.l.b16 %v4080
    %v4443 = vunpack.c.h.b16 %v4080
    %v4444 = vunpack.c.l.b16 %v4081
    %v4445 = vunpack.c.h.b16 %v4081
    %v4446 = vunpack.c.l.b16 %v4082
    %v4447 = vunpack.c.h.b16 %v4082
    %v4448 = vunpack.c.l.b16 %v4083
    %v4449 = vunpack.c.h.b16 %v4083
    %v4450 = vunpack.c.l.b16 %v4084
    %v4451 = vunpack.c.h.b16 %v4084
    %v4452 = vunpack.c.l.b16 %v4085
    %v4453 = vunpack.c.h.b16 %v4085
    %v4454 = vunpack.c.l.b16 %v4086
    %v4455 = vunpack.c.h.b16 %v4086
    %v4456 = vunpack.c.l.b16 %v4087
    %v4457 = vunpack.c.h.b16 %v4087
    %v4458 = vunpack.c.l.b16 %v4088
    %v4459 = vunpack.c.h.b16 %v4088
    %v4460 = vunpack.c.l.b16 %v4089
    %v4461 = vunpack.c.h.b16 %v4089
    %v4462 = vunpack.c.l.b16 %v4090
    %v4463 = vunpack.c.h.b16 %v4090
    %v4464 = vunpack.c.l.b16 %v4091
    %v4465 = vunpack.c.h.b16 %v4091
    %v4466 = vunpack.c.l.b16 %v4092
    %v4467 = vunpack.c.h.b16 %v4092
    %v4468 = vunpack.c.l.b16 %v4093
    %v4469 = vunpack.c.h.b16 %v4093
    %v4470 = vunpack.c.l.b16 %v4094
    %v4471 = vunpack.c.h.b16 %v4094
    %v4472 = vunpack.c.l.b16 %v4095
    %v4473 = vunpack.c.h.b16 %v4095
    %v4474 = vunpack.c.l.b16 %v4096
    %v4475 = vunpack.c.h.b16 %v4096
    %v4476 = vunpack.c.l.b16 %v4097
    %v4477 = vunpack.c.h.b16 %v4097
    %v4478 = vunpack.c.l.b16 %v4098
    %v4479 = vunpack.c.h.b16 %v4098
    %v4480 = vunpack.c.l.b16 %v4099
    %v4481 = vunpack.c.h.b16 %v4099
    %v4482 = vunpack.c.l.b16 %v4100
    %v4483 = vunpack.c.h.b16 %v4100
    %v4484 = vunpack.c.l.b16 %v4101
    %v4485 = vunpack.c.h.b16 %v4101
    %v4486 = vunpack.c.l.b16 %v4102
    %v4487 = vunpack.c.h.b16 %v4102
    %v4488 = vunpack.c.l.b16 %v4103
    %v4489 = vunpack.c.h.b16 %v4103
    %v4490 = vunpack.c.l.b16 %v4104
    %v4491 = vunpack.c.h.b16 %v4104
    %v4492 = vunpack.c.l.b16 %v4105
    %v4493 = vunpack.c.h.b16 %v4105
    %v4494 = vunpack.c.l.b16 %v4106
    %v4495 = vunpack.c.h.b16 %v4106
    %v4496 = vunpack.c.l.b16 %v4107
    %v4497 = vunpack.c.h.b16 %v4107
    %v4498 = vunpack.c.l.b16 %v4108
    %v4499 = vunpack.c.h.b16 %v4108
    %v4500 = vunpack.c.l.b16 %v4109
    %v4501 = vunpack.c.h.b16 %v4109
    %v4502 = vunpack.c.l.b16 %v4110
    %v4503 = vunpack.c.h.b16 %v4110
    %v4504 = vunpack.c.l.b16 %v4111
    %v4505 = vunpack.c.h.b16 %v4111
    %v4506 = vunpack.c.l.b16 %v4112
    %v4507 = vunpack.c.h.b16 %v4112
    %v4508 = vunpack.c.l.b16 %v4113
    %v4509 = vunpack.c.h.b16 %v4113
    %v4510 = vunpack.c.l.b16 %v4114
    %v4511 = vunpack.c.h.b16 %v4114
    %v4512 = vunpack.c.l.b16 %v4115
    %v4513 = vunpack.c.h.b16 %v4115
    %v4514 = vunpack.c.l.b16 %v4116
    %v4515 = vunpack.c.h.b16 %v4116
    %v4516 = vunpack.c.l.b16 %v4117
    %v4517 = vunpack.c.h.b16 %v4117
    %v4518 = vunpack.c.l.b16 %v4118
    %v4519 = vunpack.c.h.b16 %v4118
    %v4520 = vunpack.c.l.b16 %v4119
    %v4521 = vunpack.c.h.b16 %v4119
    %v4522 = vunpack.c.l.b16 %v4120
    %v4523 = vunpack.c.h.b16 %v4120
    %v4524 = vunpack.c.l.b16 %v4121
    %v4525 = vunpack.c.h.b16 %v4121
    %v4526 = vunpack.c.l.b16 %v4122
    %v4527 = vunpack.c.h.b16 %v4122
    %v4528 = vunpack.c.l.b16 %v4123
    %v4529 = vunpack.c.h.b16 %v4123
    %v4530 = vunpack.c.l.b16 %v4124
    %v4531 = vunpack.c.h.b16 %v4124
    %v4532 = vunpack.c.l.b16 %v4125
    %v4533 = vunpack.c.h.b16 %v4125
    %v4534 = vunpack.c.l.b16 %v4126
    %v4535 = vunpack.c.h.b16 %v4126
    %v4536 = vunpack.c.l.b16 %v4127
    %v4537 = vunpack.c.h.b16 %v4127
    %v4538 = vunpack.c.l.b16 %v4128
    %v4539 = vunpack.c.h.b16 %v4128
    %v4540 = vpack.c.b16 %v4288, %v4284
    %v4541 = vpack.c.b16 %v4289, %v4285
    %v4542 = vpack.c.b16 %v4290, %v4286
    %v4543 = vpack.c.b16 %v4291, %v4287
    %v4544 = vpack.c.b16 %v4296, %v4292
    %v4545 = vpack.c.b16 %v4297, %v4293
    %v4546 = vpack.c.b16 %v4298, %v4294
    %v4547 = vpack.c.b16 %v4299, %v4295
    %v4548 = vpack.c.b16 %v4304, %v4300
    %v4549 = vpack.c.b16 %v4305, %v4301
    %v4550 = vpack.c.b16 %v4306, %v4302
    %v4551 = vpack.c.b16 %v4307, %v4303
    %v4552 = vpack.c.b16 %v4312, %v4308
    %v4553 = vpack.c.b16 %v4313, %v4309
    %v4554 = vpack.c.b16 %v4314, %v4310
    %v4555 = vpack.c.b16 %v4315, %v4311
    %v4556 = vpack.c.b16 %v4320, %v4316
    %v4557 = vpack.c.b16 %v4321, %v4317
    %v4558 = vpack.c.b16 %v4322, %v4318
    %v4559 = vpack.c.b16 %v4323, %v4319
    %v4560 = vpack.c.b16 %v4328, %v4324
    %v4561 = vpack.c.b16 %v4329, %v4325
    %v4562 = vpack.c.b16 %v4330, %v4326
    %v4563 = vpack.c.b16 %v4331, %v4327
    %v4564 = vpack.c.b16 %v4336, %v4332
    %v4565 = vpack.c.b16 %v4337, %v4333
    %v4566 = vpack.c.b16 %v4338, %v4334
    %v4567 = vpack.c.b16 %v4339, %v4335
    %v4568 = vpack.c.b16 %v4344, %v4340
    %v4569 = vpack.c.b16 %v4345, %v4341
    %v4570 = vpack.c.b16 %v4346, %v4342
    %v4571 = vpack.c.b16 %v4347, %v4343
    %v4572 = vpack.c.b16 %v4352, %v4348
    %v4573 = vpack.c.b16 %v4353, %v4349
    %v4574 = vpack.c.b16 %v4354, %v4350
    %v4575 = vpack.c.b16 %v4355, %v4351
    %v4576 = vpack.c.b16 %v4360, %v4356
    %v4577 = vpack.c.b16 %v4361, %v4357
    %v4578 = vpack.c.b16 %v4362, %v4358
    %v4579 = vpack.c.b16 %v4363, %v4359
    %v4580 = vpack.c.b16 %v4368, %v4364
    %v4581 = vpack.c.b16 %v4369, %v4365
    %v4582 = vpack.c.b16 %v4370, %v4366
    %v4583 = vpack.c.b16 %v4371, %v4367
    %v4584 = vpack.c.b16 %v4376, %v4372
    %v4585 = vpack.c.b16 %v4377, %v4373
    %v4586 = vpack.c.b16 %v4378, %v4374
    %v4587 = vpack.c.b16 %v4379, %v4375
    %v4588 = vpack.c.b16 %v4384, %v4380
    %v4589 = vpack.c.b16 %v4385, %v4381
    %v4590 = vpack.c.b16 %v4386, %v4382
    %v4591 = vpack.c.b16 %v4387, %v4383
    %v4592 = vpack.c.b16 %v4392, %v4388
    %v4593 = vpack.c.b16 %v4393, %v4389
    %v4594 = vpack.c.b16 %v4394, %v4390
    %v4595 = vpack.c.b16 %v4395, %v4391
    %v4596 = vpack.c.b16 %v4400, %v4396
    %v4597 = vpack.c.b16 %v4401, %v4397
    %v4598 = vpack.c.b16 %v4402, %v4398
    %v4599 = vpack.c.b16 %v4403, %v4399
    %v4600 = vpack.c.b16 %v4408, %v4404
    %v4601 = vpack.c.b16 %v4409, %v4405
    %v4602 = vpack.c.b16 %v4410, %v4406
    %v4603 = vpack.c.b16 %v4411, %v4407
    %v4604 = vpack.c.b16 %v4416, %v4412
    %v4605 = vpack.c.b16 %v4417, %v4413
    %v4606 = vpack.c.b16 %v4418, %v4414
    %v4607 = vpack.c.b16 %v4419, %v4415
    %v4608 = vpack.c.b16 %v4424, %v4420
    %v4609 = vpack.c.b16 %v4425, %v4421
    %v4610 = vpack.c.b16 %v4426, %v4422
    %v4611 = vpack.c.b16 %v4427, %v4423
    %v4612 = vpack.c.b16 %v4432, %v4428
    %v4613 = vpack.c.b16 %v4433, %v4429
    %v4614 = vpack.c.b16 %v4434, %v4430
    %v4615 = vpack.c.b16 %v4435, %v4431
    %v4616 = vpack.c.b16 %v4440, %v4436
    %v4617 = vpack.c.b16 %v4441, %v4437
    %v4618 = vpack.c.b16 %v4442, %v4438
    %v4619 = vpack.c.b16 %v4443, %v4439
    %v4620 = vpack.c.b16 %v4448, %v4444
    %v4621 = vpack.c.b16 %v4449, %v4445
    %v4622 = vpack.c.b16 %v4450, %v4446
    %v4623 = vpack.c.b16 %v4451, %v4447
    %v4624 = vpack.c.b16 %v4456, %v4452
    %v4625 = vpack.c.b16 %v4457, %v4453
    %v4626 = vpack.c.b16 %v4458, %v4454
    %v4627 = vpack.c.b16 %v4459, %v4455
    %v4628 = vpack.c.b16 %v4464, %v4460
    %v4629 = vpack.c.b16 %v4465, %v4461
    %v4630 = vpack.c.b16 %v4466, %v4462
    %v4631 = vpack.c.b16 %v4467, %v4463
    %v4632 = vpack.c.b16 %v4472, %v4468
    %v4633 = vpack.c.b16 %v4473, %v4469
    %v4634 = vpack.c.b16 %v4474, %v4470
    %v4635 = vpack.c.b16 %v4475, %v4471
    %v4636 = vpack.c.b16 %v4480, %v4476
    %v4637 = vpack.c.b16 %v4481, %v4477
    %v4638 = vpack.c.b16 %v4482, %v4478
    %v4639 = vpack.c.b16 %v4483, %v4479
    %v4640 = vpack.c.b16 %v4488, %v4484
    %v4641 = vpack.c.b16 %v4489, %v4485
    %v4642 = vpack.c.b16 %v4490, %v4486
    %v4643 = vpack.c.b16 %v4491, %v4487
    %v4644 = vpack.c.b16 %v4496, %v4492
    %v4645 = vpack.c.b16 %v4497, %v4493
    %v4646 = vpack.c.b16 %v4498, %v4494
    %v4647 = vpack.c.b16 %v4499, %v4495
    %v4648 = vpack.c.b16 %v4504, %v4500
    %v4649 = vpack.c.b16 %v4505, %v4501
    %v4650 = vpack.c.b16 %v4506, %v4502
    %v4651 = vpack.c.b16 %v4507, %v4503
    %v4652 = vpack.c.b16 %v4512, %v4508
    %v4653 = vpack.c.b16 %v4513, %v4509
    %v4654 = vpack.c.b16 %v4514, %v4510
    %v4655 = vpack.c.b16 %v4515, %v4511
    %v4656 = vpack.c.b16 %v4520, %v4516
    %v4657 = vpack.c.b16 %v4521, %v4517
    %v4658 = vpack.c.b16 %v4522, %v4518
    %v4659 = vpack.c.b16 %v4523, %v4519
    %v4660 = vpack.c.b16 %v4528, %v4524
    %v4661 = vpack.c.b16 %v4529, %v4525
    %v4662 = vpack.c.b16 %v4530, %v4526
    %v4663 = vpack.c.b16 %v4531, %v4527
    %v4664 = vpack.c.b16 %v4536, %v4532
    %v4665 = vpack.c.b16 %v4537, %v4533
    %v4666 = vpack.c.b16 %v4538, %v4534
    %v4667 = vpack.c.b16 %v4539, %v4535
    %4796 = vmatprep.subr.bf16.mxu0 %v4541
    %4797 = vmatpush1.bf16.msra.mxu0 %v4540
    %4798 = vmatprep.subr.bf16.mxu0 %v4545
    %4799 = vmatpush1.bf16.msra.mxu0 %v4544
    %4800 = vmatprep.subr.bf16.mxu0 %v4549
    %4801 = vmatpush1.bf16.msra.mxu0 %v4548
    %4802 = vmatprep.subr.bf16.mxu0 %v4553
    %4803 = vmatpush1.bf16.msra.mxu0 %v4552
    %4804 = vmatprep.subr.bf16.mxu0 %v4557
    %4805 = vmatpush1.bf16.msra.mxu0 %v4556
    %4806 = vmatprep.subr.bf16.mxu0 %v4561
    %4807 = vmatpush1.bf16.msra.mxu0 %v4560
    %4808 = vmatprep.subr.bf16.mxu0 %v4565
    %4809 = vmatpush1.bf16.msra.mxu0 %v4564
    %4810 = vmatprep.subr.bf16.mxu0 %v4569
    %4811 = vmatpush1.bf16.msra.mxu0 %v4568
    %4812 = vmatprep.subr.bf16.mxu0 %v4573
    %4813 = vmatpush1.bf16.msra.mxu0 %v4572
    %4814 = vmatprep.subr.bf16.mxu0 %v4577
    %4815 = vmatpush1.bf16.msra.mxu0 %v4576
    %4816 = vmatprep.subr.bf16.mxu0 %v4581
    %4817 = vmatpush1.bf16.msra.mxu0 %v4580
    %4818 = vmatprep.subr.bf16.mxu0 %v4585
    %4819 = vmatpush1.bf16.msra.mxu0 %v4584
    %4820 = vmatprep.subr.bf16.mxu0 %v4589
    %4821 = vmatpush1.bf16.msra.mxu0 %v4588
    %4822 = vmatprep.subr.bf16.mxu0 %v4593
    %4823 = vmatpush1.bf16.msra.mxu0 %v4592
    %4824 = vmatprep.subr.bf16.mxu0 %v4597
    %4825 = vmatpush1.bf16.msra.mxu0 %v4596
    %4826 = vmatprep.subr.bf16.mxu0 %v4601
    %4827 = vmatpush1.bf16.msra.mxu0 %v4600
    %4828 = vmatprep.mubr.bf16.mxu0 %v4132
    %4829 = vmatmul.mubr.bf16.gmra.mrb[0].mxu0 %v4131
    %v4830 = vpop.f32.mrb[0].mxu0
    %v4831 = vadd.f32 %v4139, %v4830
    %v4832 = vpop.f32.mrb[0].mxu0
    %v4833 = vadd.f32 %v4143, %v4832
    %v4834 = vpop.f32.mrb[0].mxu0
    %v4835 = vadd.f32 %v4139, %v4834
    %v4836 = vpop.f32.mrb[0].mxu0
    %v4837 = vadd.f32 %v4143, %v4836
    %4838 = vdwg.mxu0
    %4839 = vmatprep.subr.bf16.mxu0 %v4605
    %4840 = vmatpush1.bf16.msra.mxu0 %v4604
    %4841 = vmatprep.subr.bf16.mxu0 %v4609
    %4842 = vmatpush1.bf16.msra.mxu0 %v4608
    %4843 = vmatprep.subr.bf16.mxu0 %v4613
    %4844 = vmatpush1.bf16.msra.mxu0 %v4612
    %4845 = vmatprep.subr.bf16.mxu0 %v4617
    %4846 = vmatpush1.bf16.msra.mxu0 %v4616
    %4847 = vmatprep.subr.bf16.mxu0 %v4621
    %4848 = vmatpush1.bf16.msra.mxu0 %v4620
    %4849 = vmatprep.subr.bf16.mxu0 %v4625
    %4850 = vmatpush1.bf16.msra.mxu0 %v4624
    %4851 = vmatprep.subr.bf16.mxu0 %v4629
    %4852 = vmatpush1.bf16.msra.mxu0 %v4628
    %4853 = vmatprep.subr.bf16.mxu0 %v4633
    %4854 = vmatpush1.bf16.msra.mxu0 %v4632
    %4855 = vmatprep.subr.bf16.mxu0 %v4637
    %4856 = vmatpush1.bf16.msra.mxu0 %v4636
    %4857 = vmatprep.subr.bf16.mxu0 %v4641
    %4858 = vmatpush1.bf16.msra.mxu0 %v4640
    %4859 = vmatprep.subr.bf16.mxu0 %v4645
    %4860 = vmatpush1.bf16.msra.mxu0 %v4644
    %4861 = vmatprep.subr.bf16.mxu0 %v4649
    %4862 = vmatpush1.bf16.msra.mxu0 %v4648
    %4863 = vmatprep.subr.bf16.mxu0 %v4653
    %4864 = vmatpush1.bf16.msra.mxu0 %v4652
    %4865 = vmatprep.subr.bf16.mxu0 %v4657
    %4866 = vmatpush1.bf16.msra.mxu0 %v4656
    %4867 = vmatprep.subr.bf16.mxu0 %v4661
    %4868 = vmatpush1.bf16.msra.mxu0 %v4660
    %4869 = vmatprep.subr.bf16.mxu0 %v4665
    %4870 = vmatpush1.bf16.msra.mxu0 %v4664
    %4871 = vmatprep.mubr.bf16.mxu0 %v4134
    %4872 = vmatmul.mubr.bf16.gmra.mrb[0].mxu0 %v4133
    %v4873 = vpop.f32.mrb[0].mxu0
    %v4874 = vadd.f32 %v4831, %v4873
    %v4875 = vpop.f32.mrb[0].mxu0
    %v4876 = vadd.f32 %v4833, %v4875
    %v4877 = vpop.f32.mrb[0].mxu0
    %v4878 = vadd.f32 %v4835, %v4877
    %v4879 = vpop.f32.mrb[0].mxu0
    %v4880 = vadd.f32 %v4837, %v4879
    %4881 = vdwg.mxu0
    %4882 = vmatprep.subr.bf16.mxu0 %v4543
    %4883 = vmatpush1.bf16.msra.mxu0 %v4542
    %4884 = vmatprep.subr.bf16.mxu0 %v4547
    %4885 = vmatpush1.bf16.msra.mxu0 %v4546
    %4886 = vmatprep.subr.bf16.mxu0 %v4551
    %4887 = vmatpush1.bf16.msra.mxu0 %v4550
    %4888 = vmatprep.subr.bf16.mxu0 %v4555
    %4889 = vmatpush1.bf16.msra.mxu0 %v4554
    %4890 = vmatprep.subr.bf16.mxu0 %v4559
    %4891 = vmatpush1.bf16.msra.mxu0 %v4558
    %4892 = vmatprep.subr.bf16.mxu0 %v4563
    %4893 = vmatpush1.bf16.msra.mxu0 %v4562
    %4894 = vmatprep.subr.bf16.mxu0 %v4567
    %4895 = vmatpush1.bf16.msra.mxu0 %v4566
    %4896 = vmatprep.subr.bf16.mxu0 %v4571
    %4897 = vmatpush1.bf16.msra.mxu0 %v4570
    %4898 = vmatprep.subr.bf16.mxu0 %v4575
    %4899 = vmatpush1.bf16.msra.mxu0 %v4574
    %4900 = vmatprep.subr.bf16.mxu0 %v4579
    %4901 = vmatpush1.bf16.msra.mxu0 %v4578
    %4902 = vmatprep.subr.bf16.mxu0 %v4583
    %4903 = vmatpush1.bf16.msra.mxu0 %v4582
    %4904 = vmatprep.subr.bf16.mxu0 %v4587
    %4905 = vmatpush1.bf16.msra.mxu0 %v4586
    %4906 = vmatprep.subr.bf16.mxu0 %v4591
    %4907 = vmatpush1.bf16.msra.mxu0 %v4590
    %4908 = vmatprep.subr.bf16.mxu0 %v4595
    %4909 = vmatpush1.bf16.msra.mxu0 %v4594
    %4910 = vmatprep.subr.bf16.mxu0 %v4599
    %4911 = vmatpush1.bf16.msra.mxu0 %v4598
    %4912 = vmatprep.subr.bf16.mxu0 %v4603
    %4913 = vmatpush1.bf16.msra.mxu0 %v4602
    %4914 = vmatprep.mubr.bf16.mxu0 %v4132
    %4915 = vmatmul.mubr.bf16.gmra.mrb[0].mxu0 %v4131
    %v4916 = vpop.f32.mrb[0].mxu0
    %v4917 = vadd.f32 %v4147, %v4916
    %v4918 = vpop.f32.mrb[0].mxu0
    %v4919 = vadd.f32 %v4151, %v4918
    %v4920 = vpop.f32.mrb[0].mxu0
    %v4921 = vadd.f32 %v4147, %v4920
    %v4922 = vpop.f32.mrb[0].mxu0
    %v4923 = vadd.f32 %v4151, %v4922
    %4924 = vdwg.mxu0
    %4925 = vmatprep.subr.bf16.mxu0 %v4607
    %4926 = vmatpush1.bf16.msra.mxu0 %v4606
    %4927 = vmatprep.subr.bf16.mxu0 %v4611
    %4928 = vmatpush1.bf16.msra.mxu0 %v4610
    %4929 = vmatprep.subr.bf16.mxu0 %v4615
    %4930 = vmatpush1.bf16.msra.mxu0 %v4614
    %4931 = vmatprep.subr.bf16.mxu0 %v4619
    %4932 = vmatpush1.bf16.msra.mxu0 %v4618
    %4933 = vmatprep.subr.bf16.mxu0 %v4623
    %4934 = vmatpush1.bf16.msra.mxu0 %v4622
    %4935 = vmatprep.subr.bf16.mxu0 %v4627
    %4936 = vmatpush1.bf16.msra.mxu0 %v4626
    %4937 = vmatprep.subr.bf16.mxu0 %v4631
    %4938 = vmatpush1.bf16.msra.mxu0 %v4630
    %4939 = vmatprep.subr.bf16.mxu0 %v4635
    %4940 = vmatpush1.bf16.msra.mxu0 %v4634
    %4941 = vmatprep.subr.bf16.mxu0 %v4639
    %4942 = vmatpush1.bf16.msra.mxu0 %v4638
    %4943 = vmatprep.subr.bf16.mxu0 %v4643
    %4944 = vmatpush1.bf16.msra.mxu0 %v4642
    %4945 = vmatprep.subr.bf16.mxu0 %v4647
    %4946 = vmatpush1.bf16.msra.mxu0 %v4646
    %4947 = vmatprep.subr.bf16.mxu0 %v4651
    %4948 = vmatpush1.bf16.msra.mxu0 %v4650
    %4949 = vmatprep.subr.bf16.mxu0 %v4655
    %4950 = vmatpush1.bf16.msra.mxu0 %v4654
    %4951 = vmatprep.subr.bf16.mxu0 %v4659
    %4952 = vmatpush1.bf16.msra.mxu0 %v4658
    %4953 = vmatprep.subr.bf16.mxu0 %v4663
    %4954 = vmatpush1.bf16.msra.mxu0 %v4662
    %4955 = vmatprep.subr.bf16.mxu0 %v4667
    %4956 = vmatpush1.bf16.msra.mxu0 %v4666
    %4957 = vmatprep.mubr.bf16.mxu0 %v4134
    %4958 = vmatmul.mubr.bf16.gmra.mrb[0].mxu0 %v4133
    %v4959 = vpop.f32.mrb[0].mxu0
    %v4960 = vadd.f32 %v4917, %v4959
    %v4961 = vpop.f32.mrb[0].mxu0
    %v4962 = vadd.f32 %v4919, %v4961
    %v4963 = vpop.f32.mrb[0].mxu0
    %v4964 = vadd.f32 %v4921, %v4963
    %v4965 = vpop.f32.mrb[0].mxu0
    %v4966 = vadd.f32 %v4923, %v4965
    %4967 = vdwg.mxu0
    %v4968 = vmax.f32 %v4874, 0.0
    %v4969 = vmax.f32 %v4876, 0.0
    %v4970 = vmax.f32 %v4960, 0.0
    %v4971 = vmax.f32 %v4962, 0.0
    %v4972 = vmax.f32 %v4878, 0.0
    %v4973 = vmax.f32 %v4880, 0.0
    %v4974 = vmax.f32 %v4964, 0.0
    %v4975 = vmax.f32 %v4966, 0.0
    %s4976 = scalar_lea.vmem [#allocation4], 4096
    %v4977 = vld [vmem:[%s4976] sm:$0xff]
    %v4978 = vld [vmem:[%s4976 + $0x8] sm:$0xff]
    %v4979 = vld [vmem:[%s4976 + $0x10] sm:$0xff]
    %v4980 = vld [vmem:[%s4976 + $0x18] sm:$0xff]
    %v4981 = vld [vmem:[%s4976 + $0x20] sm:$0xff]
    %v4982 = vld [vmem:[%s4976 + $0x28] sm:$0xff]
    %v4983 = vld [vmem:[%s4976 + $0x30] sm:$0xff]
    %v4984 = vld [vmem:[%s4976 + $0x38] sm:$0xff]
    %v4985 = vld [vmem:[%s4976 + $0x40] sm:$0xff]
    %v4986 = vld [vmem:[%s4976 + $0x48] sm:$0xff]
    %v4987 = vld [vmem:[%s4976 + $0x50] sm:$0xff]
    %v4988 = vld [vmem:[%s4976 + $0x58] sm:$0xff]
    %v4989 = vld [vmem:[%s4976 + $0x60] sm:$0xff]
    %v4990 = vld [vmem:[%s4976 + $0x68] sm:$0xff]
    %v4991 = vld [vmem:[%s4976 + $0x70] sm:$0xff]
    %v4992 = vld [vmem:[%s4976 + $0x78] sm:$0xff]
    %v4993 = vld [vmem:[%s4976 + $0x80] sm:$0xff]
    %v4994 = vld [vmem:[%s4976 + $0x88] sm:$0xff]
    %v4995 = vld [vmem:[%s4976 + $0x90] sm:$0xff]
    %v4996 = vld [vmem:[%s4976 + $0x98] sm:$0xff]
    %v4997 = vld [vmem:[%s4976 + $0xa0] sm:$0xff]
    %v4998 = vld [vmem:[%s4976 + $0xa8] sm:$0xff]
    %v4999 = vld [vmem:[%s4976 + $0xb0] sm:$0xff]
    %v5000 = vld [vmem:[%s4976 + $0xb8] sm:$0xff]
    %v5001 = vld [vmem:[%s4976 + $0xc0] sm:$0xff]
    %v5002 = vld [vmem:[%s4976 + $0xc8] sm:$0xff]
    %v5003 = vld [vmem:[%s4976 + $0xd0] sm:$0xff]
    %v5004 = vld [vmem:[%s4976 + $0xd8] sm:$0xff]
    %v5005 = vld [vmem:[%s4976 + $0xe0] sm:$0xff]
    %v5006 = vld [vmem:[%s4976 + $0xe8] sm:$0xff]
    %v5007 = vld [vmem:[%s4976 + $0xf0] sm:$0xff]
    %v5008 = vld [vmem:[%s4976 + $0xf8] sm:$0xff]
    %v5009 = vld [vmem:[%s4976 + $0x100] sm:$0xff]
    %v5010 = vld [vmem:[%s4976 + $0x108] sm:$0xff]
    %v5011 = vld [vmem:[%s4976 + $0x110] sm:$0xff]
    %v5012 = vld [vmem:[%s4976 + $0x118] sm:$0xff]
    %v5013 = vld [vmem:[%s4976 + $0x120] sm:$0xff]
    %v5014 = vld [vmem:[%s4976 + $0x128] sm:$0xff]
    %v5015 = vld [vmem:[%s4976 + $0x130] sm:$0xff]
    %v5016 = vld [vmem:[%s4976 + $0x138] sm:$0xff]
    %v5017 = vld [vmem:[%s4976 + $0x140] sm:$0xff]
    %v5018 = vld [vmem:[%s4976 + $0x148] sm:$0xff]
    %v5019 = vld [vmem:[%s4976 + $0x150] sm:$0xff]
    %v5020 = vld [vmem:[%s4976 + $0x158] sm:$0xff]
    %v5021 = vld [vmem:[%s4976 + $0x160] sm:$0xff]
    %v5022 = vld [vmem:[%s4976 + $0x168] sm:$0xff]
    %v5023 = vld [vmem:[%s4976 + $0x170] sm:$0xff]
    %v5024 = vld [vmem:[%s4976 + $0x178] sm:$0xff]
    %v5025 = vld [vmem:[%s4976 + $0x180] sm:$0xff]
    %v5026 = vld [vmem:[%s4976 + $0x188] sm:$0xff]
    %v5027 = vld [vmem:[%s4976 + $0x190] sm:$0xff]
    %v5028 = vld [vmem:[%s4976 + $0x198] sm:$0xff]
    %v5029 = vld [vmem:[%s4976 + $0x1a0] sm:$0xff]
    %v5030 = vld [vmem:[%s4976 + $0x1a8] sm:$0xff]
    %v5031 = vld [vmem:[%s4976 + $0x1b0] sm:$0xff]
    %v5032 = vld [vmem:[%s4976 + $0x1b8] sm:$0xff]
    %v5033 = vld [vmem:[%s4976 + $0x1c0] sm:$0xff]
    %v5034 = vld [vmem:[%s4976 + $0x1c8] sm:$0xff]
    %v5035 = vld [vmem:[%s4976 + $0x1d0] sm:$0xff]
    %v5036 = vld [vmem:[%s4976 + $0x1d8] sm:$0xff]
    %v5037 = vld [vmem:[%s4976 + $0x1e0] sm:$0xff]
    %v5038 = vld [vmem:[%s4976 + $0x1e8] sm:$0xff]
    %v5039 = vld [vmem:[%s4976 + $0x1f0] sm:$0xff]
    %v5040 = vld [vmem:[%s4976 + $0x1f8] sm:$0xff]
    %v5041 = vld [vmem:[%s4976 + $0x200] sm:$0xff]
    %v5042 = vld [vmem:[%s4976 + $0x208] sm:$0xff]
    %v5043 = vld [vmem:[%s4976 + $0x210] sm:$0xff]
    %v5044 = vld [vmem:[%s4976 + $0x218] sm:$0xff]
    %v5045 = vld [vmem:[%s4976 + $0x220] sm:$0xff]
    %v5046 = vld [vmem:[%s4976 + $0x228] sm:$0xff]
    %v5047 = vld [vmem:[%s4976 + $0x230] sm:$0xff]
    %v5048 = vld [vmem:[%s4976 + $0x238] sm:$0xff]
    %v5049 = vld [vmem:[%s4976 + $0x240] sm:$0xff]
    %v5050 = vld [vmem:[%s4976 + $0x248] sm:$0xff]
    %v5051 = vld [vmem:[%s4976 + $0x250] sm:$0xff]
    %v5052 = vld [vmem:[%s4976 + $0x258] sm:$0xff]
    %v5053 = vld [vmem:[%s4976 + $0x260] sm:$0xff]
    %v5054 = vld [vmem:[%s4976 + $0x268] sm:$0xff]
    %v5055 = vld [vmem:[%s4976 + $0x270] sm:$0xff]
    %v5056 = vld [vmem:[%s4976 + $0x278] sm:$0xff]
    %v5057 = vld [vmem:[%s4976 + $0x280] sm:$0xff]
    %v5058 = vld [vmem:[%s4976 + $0x288] sm:$0xff]
    %v5059 = vld [vmem:[%s4976 + $0x290] sm:$0xff]
    %v5060 = vld [vmem:[%s4976 + $0x298] sm:$0xff]
    %v5061 = vld [vmem:[%s4976 + $0x2a0] sm:$0xff]
    %v5062 = vld [vmem:[%s4976 + $0x2a8] sm:$0xff]
    %v5063 = vld [vmem:[%s4976 + $0x2b0] sm:$0xff]
    %v5064 = vld [vmem:[%s4976 + $0x2b8] sm:$0xff]
    %v5065 = vld [vmem:[%s4976 + $0x2c0] sm:$0xff]
    %v5066 = vld [vmem:[%s4976 + $0x2c8] sm:$0xff]
    %v5067 = vld [vmem:[%s4976 + $0x2d0] sm:$0xff]
    %v5068 = vld [vmem:[%s4976 + $0x2d8] sm:$0xff]
    %v5069 = vld [vmem:[%s4976 + $0x2e0] sm:$0xff]
    %v5070 = vld [vmem:[%s4976 + $0x2e8] sm:$0xff]
    %v5071 = vld [vmem:[%s4976 + $0x2f0] sm:$0xff]
    %v5072 = vld [vmem:[%s4976 + $0x2f8] sm:$0xff]
    %v5073 = vld [vmem:[%s4976 + $0x300] sm:$0xff]
    %v5074 = vld [vmem:[%s4976 + $0x308] sm:$0xff]
    %v5075 = vld [vmem:[%s4976 + $0x310] sm:$0xff]
    %v5076 = vld [vmem:[%s4976 + $0x318] sm:$0xff]
    %v5077 = vld [vmem:[%s4976 + $0x320] sm:$0xff]
    %v5078 = vld [vmem:[%s4976 + $0x328] sm:$0xff]
    %v5079 = vld [vmem:[%s4976 + $0x330] sm:$0xff]
    %v5080 = vld [vmem:[%s4976 + $0x338] sm:$0xff]
    %v5081 = vld [vmem:[%s4976 + $0x340] sm:$0xff]
    %v5082 = vld [vmem:[%s4976 + $0x348] sm:$0xff]
    %v5083 = vld [vmem:[%s4976 + $0x350] sm:$0xff]
    %v5084 = vld [vmem:[%s4976 + $0x358] sm:$0xff]
    %v5085 = vld [vmem:[%s4976 + $0x360] sm:$0xff]
    %v5086 = vld [vmem:[%s4976 + $0x368] sm:$0xff]
    %v5087 = vld [vmem:[%s4976 + $0x370] sm:$0xff]
    %v5088 = vld [vmem:[%s4976 + $0x378] sm:$0xff]
    %v5089 = vld [vmem:[%s4976 + $0x380] sm:$0xff]
    %v5090 = vld [vmem:[%s4976 + $0x388] sm:$0xff]
    %v5091 = vld [vmem:[%s4976 + $0x390] sm:$0xff]
    %v5092 = vld [vmem:[%s4976 + $0x398] sm:$0xff]
    %v5093 = vld [vmem:[%s4976 + $0x3a0] sm:$0xff]
    %v5094 = vld [vmem:[%s4976 + $0x3a8] sm:$0xff]
    %v5095 = vld [vmem:[%s4976 + $0x3b0] sm:$0xff]
    %v5096 = vld [vmem:[%s4976 + $0x3b8] sm:$0xff]
    %v5097 = vld [vmem:[%s4976 + $0x3c0] sm:$0xff]
    %v5098 = vld [vmem:[%s4976 + $0x3c8] sm:$0xff]
    %v5099 = vld [vmem:[%s4976 + $0x3d0] sm:$0xff]
    %v5100 = vld [vmem:[%s4976 + $0x3d8] sm:$0xff]
    %v5101 = vld [vmem:[%s4976 + $0x3e0] sm:$0xff]
    %v5102 = vld [vmem:[%s4976 + $0x3e8] sm:$0xff]
    %v5103 = vld [vmem:[%s4976 + $0x3f0] sm:$0xff]
    %v5104 = vld [vmem:[%s4976 + $0x3f8] sm:$0xff]
    %s5105 = scalar_lea.vmem [#allocation7], 7
    %v5106 = vld [vmem:[%s5105] ss:$8 sm:$0xf]
    %v5107 = vpack.c.bf16 %v4972, %v4968
    %v5108 = vpack.c.bf16 %v4973, %v4969
    %v5109 = vpack.c.bf16 %v4974, %v4970
    %v5110 = vpack.c.bf16 %v4975, %v4971
    %v5112 = vlaneseq
    %v5113 = vshrl.u32 %v5112, 7
    %v5114 = vsub.s32 0, %v5113
    %v5115 = vrot.slane %v5106, %v5114
    %v5116 = vlaneseq
    %v5117 = vshrl.u32 %v5116, 7
    %v5118 = vsub.s32 1, %v5117
    %v5119 = vrot.slane %v5106, %v5118
    %v5120 = vlaneseq
    %v5121 = vshrl.u32 %v5120, 7
    %v5122 = vsub.s32 2, %v5121
    %v5123 = vrot.slane %v5106, %v5122
    %v5124 = vlaneseq
    %v5125 = vshrl.u32 %v5124, 7
    %v5126 = vsub.s32 3, %v5125
    %v5127 = vrot.slane %v5106, %v5126
    %v5260 = vunpack.c.l.b16 %v4977
    %v5261 = vunpack.c.h.b16 %v4977
    %v5262 = vunpack.c.l.b16 %v4978
    %v5263 = vunpack.c.h.b16 %v4978
    %v5264 = vunpack.c.l.b16 %v4979
    %v5265 = vunpack.c.h.b16 %v4979
    %v5266 = vunpack.c.l.b16 %v4980
    %v5267 = vunpack.c.h.b16 %v4980
    %v5268 = vunpack.c.l.b16 %v4981
    %v5269 = vunpack.c.h.b16 %v4981
    %v5270 = vunpack.c.l.b16 %v4982
    %v5271 = vunpack.c.h.b16 %v4982
    %v5272 = vunpack.c.l.b16 %v4983
    %v5273 = vunpack.c.h.b16 %v4983
    %v5274 = vunpack.c.l.b16 %v4984
    %v5275 = vunpack.c.h.b16 %v4984
    %v5276 = vunpack.c.l.b16 %v4985
    %v5277 = vunpack.c.h.b16 %v4985
    %v5278 = vunpack.c.l.b16 %v4986
    %v5279 = vunpack.c.h.b16 %v4986
    %v5280 = vunpack.c.l.b16 %v4987
    %v5281 = vunpack.c.h.b16 %v4987
    %v5282 = vunpack.c.l.b16 %v4988
    %v5283 = vunpack.c.h.b16 %v4988
    %v5284 = vunpack.c.l.b16 %v4989
    %v5285 = vunpack.c.h.b16 %v4989
    %v5286 = vunpack.c.l.b16 %v4990
    %v5287 = vunpack.c.h.b16 %v4990
    %v5288 = vunpack.c.l.b16 %v4991
    %v5289 = vunpack.c.h.b16 %v4991
    %v5290 = vunpack.c.l.b16 %v4992
    %v5291 = vunpack.c.h.b16 %v4992
    %v5292 = vunpack.c.l.b16 %v4993
    %v5293 = vunpack.c.h.b16 %v4993
    %v5294 = vunpack.c.l.b16 %v4994
    %v5295 = vunpack.c.h.b16 %v4994
    %v5296 = vunpack.c.l.b16 %v4995
    %v5297 = vunpack.c.h.b16 %v4995
    %v5298 = vunpack.c.l.b16 %v4996
    %v5299 = vunpack.c.h.b16 %v4996
    %v5300 = vunpack.c.l.b16 %v4997
    %v5301 = vunpack.c.h.b16 %v4997
    %v5302 = vunpack.c.l.b16 %v4998
    %v5303 = vunpack.c.h.b16 %v4998
    %v5304 = vunpack.c.l.b16 %v4999
    %v5305 = vunpack.c.h.b16 %v4999
    %v5306 = vunpack.c.l.b16 %v5000
    %v5307 = vunpack.c.h.b16 %v5000
    %v5308 = vunpack.c.l.b16 %v5001
    %v5309 = vunpack.c.h.b16 %v5001
    %v5310 = vunpack.c.l.b16 %v5002
    %v5311 = vunpack.c.h.b16 %v5002
    %v5312 = vunpack.c.l.b16 %v5003
    %v5313 = vunpack.c.h.b16 %v5003
    %v5314 = vunpack.c.l.b16 %v5004
    %v5315 = vunpack.c.h.b16 %v5004
    %v5316 = vunpack.c.l.b16 %v5005
    %v5317 = vunpack.c.h.b16 %v5005
    %v5318 = vunpack.c.l.b16 %v5006
    %v5319 = vunpack.c.h.b16 %v5006
    %v5320 = vunpack.c.l.b16 %v5007
    %v5321 = vunpack.c.h.b16 %v5007
    %v5322 = vunpack.c.l.b16 %v5008
    %v5323 = vunpack.c.h.b16 %v5008
    %v5324 = vunpack.c.l.b16 %v5009
    %v5325 = vunpack.c.h.b16 %v5009
    %v5326 = vunpack.c.l.b16 %v5010
    %v5327 = vunpack.c.h.b16 %v5010
    %v5328 = vunpack.c.l.b16 %v5011
    %v5329 = vunpack.c.h.b16 %v5011
    %v5330 = vunpack.c.l.b16 %v5012
    %v5331 = vunpack.c.h.b16 %v5012
    %v5332 = vunpack.c.l.b16 %v5013
    %v5333 = vunpack.c.h.b16 %v5013
    %v5334 = vunpack.c.l.b16 %v5014
    %v5335 = vunpack.c.h.b16 %v5014
    %v5336 = vunpack.c.l.b16 %v5015
    %v5337 = vunpack.c.h.b16 %v5015
    %v5338 = vunpack.c.l.b16 %v5016
    %v5339 = vunpack.c.h.b16 %v5016
    %v5340 = vunpack.c.l.b16 %v5017
    %v5341 = vunpack.c.h.b16 %v5017
    %v5342 = vunpack.c.l.b16 %v5018
    %v5343 = vunpack.c.h.b16 %v5018
    %v5344 = vunpack.c.l.b16 %v5019
    %v5345 = vunpack.c.h.b16 %v5019
    %v5346 = vunpack.c.l.b16 %v5020
    %v5347 = vunpack.c.h.b16 %v5020
    %v5348 = vunpack.c.l.b16 %v5021
    %v5349 = vunpack.c.h.b16 %v5021
    %v5350 = vunpack.c.l.b16 %v5022
    %v5351 = vunpack.c.h.b16 %v5022
    %v5352 = vunpack.c.l.b16 %v5023
    %v5353 = vunpack.c.h.b16 %v5023
    %v5354 = vunpack.c.l.b16 %v5024
    %v5355 = vunpack.c.h.b16 %v5024
    %v5356 = vunpack.c.l.b16 %v5025
    %v5357 = vunpack.c.h.b16 %v5025
    %v5358 = vunpack.c.l.b16 %v5026
    %v5359 = vunpack.c.h.b16 %v5026
    %v5360 = vunpack.c.l.b16 %v5027
    %v5361 = vunpack.c.h.b16 %v5027
    %v5362 = vunpack.c.l.b16 %v5028
    %v5363 = vunpack.c.h.b16 %v5028
    %v5364 = vunpack.c.l.b16 %v5029
    %v5365 = vunpack.c.h.b16 %v5029
    %v5366 = vunpack.c.l.b16 %v5030
    %v5367 = vunpack.c.h.b16 %v5030
    %v5368 = vunpack.c.l.b16 %v5031
    %v5369 = vunpack.c.h.b16 %v5031
    %v5370 = vunpack.c.l.b16 %v5032
    %v5371 = vunpack.c.h.b16 %v5032
    %v5372 = vunpack.c.l.b16 %v5033
    %v5373 = vunpack.c.h.b16 %v5033
    %v5374 = vunpack.c.l.b16 %v5034
    %v5375 = vunpack.c.h.b16 %v5034
    %v5376 = vunpack.c.l.b16 %v5035
    %v5377 = vunpack.c.h.b16 %v5035
    %v5378 = vunpack.c.l.b16 %v5036
    %v5379 = vunpack.c.h.b16 %v5036
    %v5380 = vunpack.c.l.b16 %v5037
    %v5381 = vunpack.c.h.b16 %v5037
    %v5382 = vunpack.c.l.b16 %v5038
    %v5383 = vunpack.c.h.b16 %v5038
    %v5384 = vunpack.c.l.b16 %v5039
    %v5385 = vunpack.c.h.b16 %v5039
    %v5386 = vunpack.c.l.b16 %v5040
    %v5387 = vunpack.c.h.b16 %v5040
    %v5388 = vunpack.c.l.b16 %v5041
    %v5389 = vunpack.c.h.b16 %v5041
    %v5390 = vunpack.c.l.b16 %v5042
    %v5391 = vunpack.c.h.b16 %v5042
    %v5392 = vunpack.c.l.b16 %v5043
    %v5393 = vunpack.c.h.b16 %v5043
    %v5394 = vunpack.c.l.b16 %v5044
    %v5395 = vunpack.c.h.b16 %v5044
    %v5396 = vunpack.c.l.b16 %v5045
    %v5397 = vunpack.c.h.b16 %v5045
    %v5398 = vunpack.c.l.b16 %v5046
    %v5399 = vunpack.c.h.b16 %v5046
    %v5400 = vunpack.c.l.b16 %v5047
    %v5401 = vunpack.c.h.b16 %v5047
    %v5402 = vunpack.c.l.b16 %v5048
    %v5403 = vunpack.c.h.b16 %v5048
    %v5404 = vunpack.c.l.b16 %v5049
    %v5405 = vunpack.c.h.b16 %v5049
    %v5406 = vunpack.c.l.b16 %v5050
    %v5407 = vunpack.c.h.b16 %v5050
    %v5408 = vunpack.c.l.b16 %v5051
    %v5409 = vunpack.c.h.b16 %v5051
    %v5410 = vunpack.c.l.b16 %v5052
    %v5411 = vunpack.c.h.b16 %v5052
    %v5412 = vunpack.c.l.b16 %v5053
    %v5413 = vunpack.c.h.b16 %v5053
    %v5414 = vunpack.c.l.b16 %v5054
    %v5415 = vunpack.c.h.b16 %v5054
    %v5416 = vunpack.c.l.b16 %v5055
    %v5417 = vunpack.c.h.b16 %v5055
    %v5418 = vunpack.c.l.b16 %v5056
    %v5419 = vunpack.c.h.b16 %v5056
    %v5420 = vunpack.c.l.b16 %v5057
    %v5421 = vunpack.c.h.b16 %v5057
    %v5422 = vunpack.c.l.b16 %v5058
    %v5423 = vunpack.c.h.b16 %v5058
    %v5424 = vunpack.c.l.b16 %v5059
    %v5425 = vunpack.c.h.b16 %v5059
    %v5426 = vunpack.c.l.b16 %v5060
    %v5427 = vunpack.c.h.b16 %v5060
    %v5428 = vunpack.c.l.b16 %v5061
    %v5429 = vunpack.c.h.b16 %v5061
    %v5430 = vunpack.c.l.b16 %v5062
    %v5431 = vunpack.c.h.b16 %v5062
    %v5432 = vunpack.c.l.b16 %v5063
    %v5433 = vunpack.c.h.b16 %v5063
    %v5434 = vunpack.c.l.b16 %v5064
    %v5435 = vunpack.c.h.b16 %v5064
    %v5436 = vunpack.c.l.b16 %v5065
    %v5437 = vunpack.c.h.b16 %v5065
    %v5438 = vunpack.c.l.b16 %v5066
    %v5439 = vunpack.c.h.b16 %v5066
    %v5440 = vunpack.c.l.b16 %v5067
    %v5441 = vunpack.c.h.b16 %v5067
    %v5442 = vunpack.c.l.b16 %v5068
    %v5443 = vunpack.c.h.b16 %v5068
    %v5444 = vunpack.c.l.b16 %v5069
    %v5445 = vunpack.c.h.b16 %v5069
    %v5446 = vunpack.c.l.b16 %v5070
    %v5447 = vunpack.c.h.b16 %v5070
    %v5448 = vunpack.c.l.b16 %v5071
    %v5449 = vunpack.c.h.b16 %v5071
    %v5450 = vunpack.c.l.b16 %v5072
    %v5451 = vunpack.c.h.b16 %v5072
    %v5452 = vunpack.c.l.b16 %v5073
    %v5453 = vunpack.c.h.b16 %v5073
    %v5454 = vunpack.c.l.b16 %v5074
    %v5455 = vunpack.c.h.b16 %v5074
    %v5456 = vunpack.c.l.b16 %v5075
    %v5457 = vunpack.c.h.b16 %v5075
    %v5458 = vunpack.c.l.b16 %v5076
    %v5459 = vunpack.c.h.b16 %v5076
    %v5460 = vunpack.c.l.b16 %v5077
    %v5461 = vunpack.c.h.b16 %v5077
    %v5462 = vunpack.c.l.b16 %v5078
    %v5463 = vunpack.c.h.b16 %v5078
    %v5464 = vunpack.c.l.b16 %v5079
    %v5465 = vunpack.c.h.b16 %v5079
    %v5466 = vunpack.c.l.b16 %v5080
    %v5467 = vunpack.c.h.b16 %v5080
    %v5468 = vunpack.c.l.b16 %v5081
    %v5469 = vunpack.c.h.b16 %v5081
    %v5470 = vunpack.c.l.b16 %v5082
    %v5471 = vunpack.c.h.b16 %v5082
    %v5472 = vunpack.c.l.b16 %v5083
    %v5473 = vunpack.c.h.b16 %v5083
    %v5474 = vunpack.c.l.b16 %v5084
    %v5475 = vunpack.c.h.b16 %v5084
    %v5476 = vunpack.c.l.b16 %v5085
    %v5477 = vunpack.c.h.b16 %v5085
    %v5478 = vunpack.c.l.b16 %v5086
    %v5479 = vunpack.c.h.b16 %v5086
    %v5480 = vunpack.c.l.b16 %v5087
    %v5481 = vunpack.c.h.b16 %v5087
    %v5482 = vunpack.c.l.b16 %v5088
    %v5483 = vunpack.c.h.b16 %v5088
    %v5484 = vunpack.c.l.b16 %v5089
    %v5485 = vunpack.c.h.b16 %v5089
    %v5486 = vunpack.c.l.b16 %v5090
    %v5487 = vunpack.c.h.b16 %v5090
    %v5488 = vunpack.c.l.b16 %v5091
    %v5489 = vunpack.c.h.b16 %v5091
    %v5490 = vunpack.c.l.b16 %v5092
    %v5491 = vunpack.c.h.b16 %v5092
    %v5492 = vunpack.c.l.b16 %v5093
    %v5493 = vunpack.c.h.b16 %v5093
    %v5494 = vunpack.c.l.b16 %v5094
    %v5495 = vunpack.c.h.b16 %v5094
    %v5496 = vunpack.c.l.b16 %v5095
    %v5497 = vunpack.c.h.b16 %v5095
    %v5498 = vunpack.c.l.b16 %v5096
    %v5499 = vunpack.c.h.b16 %v5096
    %v5500 = vunpack.c.l.b16 %v5097
    %v5501 = vunpack.c.h.b16 %v5097
    %v5502 = vunpack.c.l.b16 %v5098
    %v5503 = vunpack.c.h.b16 %v5098
    %v5504 = vunpack.c.l.b16 %v5099
    %v5505 = vunpack.c.h.b16 %v5099
    %v5506 = vunpack.c.l.b16 %v5100
    %v5507 = vunpack.c.h.b16 %v5100
    %v5508 = vunpack.c.l.b16 %v5101
    %v5509 = vunpack.c.h.b16 %v5101
    %v5510 = vunpack.c.l.b16 %v5102
    %v5511 = vunpack.c.h.b16 %v5102
    %v5512 = vunpack.c.l.b16 %v5103
    %v5513 = vunpack.c.h.b16 %v5103
    %v5514 = vunpack.c.l.b16 %v5104
    %v5515 = vunpack.c.h.b16 %v5104
    %v5516 = vpack.c.b16 %v5264, %v5260
    %v5517 = vpack.c.b16 %v5265, %v5261
    %v5518 = vpack.c.b16 %v5266, %v5262
    %v5519 = vpack.c.b16 %v5267, %v5263
    %v5520 = vpack.c.b16 %v5272, %v5268
    %v5521 = vpack.c.b16 %v5273, %v5269
    %v5522 = vpack.c.b16 %v5274, %v5270
    %v5523 = vpack.c.b16 %v5275, %v5271
    %v5524 = vpack.c.b16 %v5280, %v5276
    %v5525 = vpack.c.b16 %v5281, %v5277
    %v5526 = vpack.c.b16 %v5282, %v5278
    %v5527 = vpack.c.b16 %v5283, %v5279
    %v5528 = vpack.c.b16 %v5288, %v5284
    %v5529 = vpack.c.b16 %v5289, %v5285
    %v5530 = vpack.c.b16 %v5290, %v5286
    %v5531 = vpack.c.b16 %v5291, %v5287
    %v5532 = vpack.c.b16 %v5296, %v5292
    %v5533 = vpack.c.b16 %v5297, %v5293
    %v5534 = vpack.c.b16 %v5298, %v5294
    %v5535 = vpack.c.b16 %v5299, %v5295
    %v5536 = vpack.c.b16 %v5304, %v5300
    %v5537 = vpack.c.b16 %v5305, %v5301
    %v5538 = vpack.c.b16 %v5306, %v5302
    %v5539 = vpack.c.b16 %v5307, %v5303
    %v5540 = vpack.c.b16 %v5312, %v5308
    %v5541 = vpack.c.b16 %v5313, %v5309
    %v5542 = vpack.c.b16 %v5314, %v5310
    %v5543 = vpack.c.b16 %v5315, %v5311
    %v5544 = vpack.c.b16 %v5320, %v5316
    %v5545 = vpack.c.b16 %v5321, %v5317
    %v5546 = vpack.c.b16 %v5322, %v5318
    %v5547 = vpack.c.b16 %v5323, %v5319
    %v5548 = vpack.c.b16 %v5328, %v5324
    %v5549 = vpack.c.b16 %v5329, %v5325
    %v5550 = vpack.c.b16 %v5330, %v5326
    %v5551 = vpack.c.b16 %v5331, %v5327
    %v5552 = vpack.c.b16 %v5336, %v5332
    %v5553 = vpack.c.b16 %v5337, %v5333
    %v5554 = vpack.c.b16 %v5338, %v5334
    %v5555 = vpack.c.b16 %v5339, %v5335
    %v5556 = vpack.c.b16 %v5344, %v5340
    %v5557 = vpack.c.b16 %v5345, %v5341
    %v5558 = vpack.c.b16 %v5346, %v5342
    %v5559 = vpack.c.b16 %v5347, %v5343
    %v5560 = vpack.c.b16 %v5352, %v5348
    %v5561 = vpack.c.b16 %v5353, %v5349
    %v5562 = vpack.c.b16 %v5354, %v5350
    %v5563 = vpack.c.b16 %v5355, %v5351
    %v5564 = vpack.c.b16 %v5360, %v5356
    %v5565 = vpack.c.b16 %v5361, %v5357
    %v5566 = vpack.c.b16 %v5362, %v5358
    %v5567 = vpack.c.b16 %v5363, %v5359
    %v5568 = vpack.c.b16 %v5368, %v5364
    %v5569 = vpack.c.b16 %v5369, %v5365
    %v5570 = vpack.c.b16 %v5370, %v5366
    %v5571 = vpack.c.b16 %v5371, %v5367
    %v5572 = vpack.c.b16 %v5376, %v5372
    %v5573 = vpack.c.b16 %v5377, %v5373
    %v5574 = vpack.c.b16 %v5378, %v5374
    %v5575 = vpack.c.b16 %v5379, %v5375
    %v5576 = vpack.c.b16 %v5384, %v5380
    %v5577 = vpack.c.b16 %v5385, %v5381
    %v5578 = vpack.c.b16 %v5386, %v5382
    %v5579 = vpack.c.b16 %v5387, %v5383
    %v5580 = vpack.c.b16 %v5392, %v5388
    %v5581 = vpack.c.b16 %v5393, %v5389
    %v5582 = vpack.c.b16 %v5394, %v5390
    %v5583 = vpack.c.b16 %v5395, %v5391
    %v5584 = vpack.c.b16 %v5400, %v5396
    %v5585 = vpack.c.b16 %v5401, %v5397
    %v5586 = vpack.c.b16 %v5402, %v5398
    %v5587 = vpack.c.b16 %v5403, %v5399
    %v5588 = vpack.c.b16 %v5408, %v5404
    %v5589 = vpack.c.b16 %v5409, %v5405
    %v5590 = vpack.c.b16 %v5410, %v5406
    %v5591 = vpack.c.b16 %v5411, %v5407
    %v5592 = vpack.c.b16 %v5416, %v5412
    %v5593 = vpack.c.b16 %v5417, %v5413
    %v5594 = vpack.c.b16 %v5418, %v5414
    %v5595 = vpack.c.b16 %v5419, %v5415
    %v5596 = vpack.c.b16 %v5424, %v5420
    %v5597 = vpack.c.b16 %v5425, %v5421
    %v5598 = vpack.c.b16 %v5426, %v5422
    %v5599 = vpack.c.b16 %v5427, %v5423
    %v5600 = vpack.c.b16 %v5432, %v5428
    %v5601 = vpack.c.b16 %v5433, %v5429
    %v5602 = vpack.c.b16 %v5434, %v5430
    %v5603 = vpack.c.b16 %v5435, %v5431
    %v5604 = vpack.c.b16 %v5440, %v5436
    %v5605 = vpack.c.b16 %v5441, %v5437
    %v5606 = vpack.c.b16 %v5442, %v5438
    %v5607 = vpack.c.b16 %v5443, %v5439
    %v5608 = vpack.c.b16 %v5448, %v5444
    %v5609 = vpack.c.b16 %v5449, %v5445
    %v5610 = vpack.c.b16 %v5450, %v5446
    %v5611 = vpack.c.b16 %v5451, %v5447
    %v5612 = vpack.c.b16 %v5456, %v5452
    %v5613 = vpack.c.b16 %v5457, %v5453
    %v5614 = vpack.c.b16 %v5458, %v5454
    %v5615 = vpack.c.b16 %v5459, %v5455
    %v5616 = vpack.c.b16 %v5464, %v5460
    %v5617 = vpack.c.b16 %v5465, %v5461
    %v5618 = vpack.c.b16 %v5466, %v5462
    %v5619 = vpack.c.b16 %v5467, %v5463
    %v5620 = vpack.c.b16 %v5472, %v5468
    %v5621 = vpack.c.b16 %v5473, %v5469
    %v5622 = vpack.c.b16 %v5474, %v5470
    %v5623 = vpack.c.b16 %v5475, %v5471
    %v5624 = vpack.c.b16 %v5480, %v5476
    %v5625 = vpack.c.b16 %v5481, %v5477
    %v5626 = vpack.c.b16 %v5482, %v5478
    %v5627 = vpack.c.b16 %v5483, %v5479
    %v5628 = vpack.c.b16 %v5488, %v5484
    %v5629 = vpack.c.b16 %v5489, %v5485
    %v5630 = vpack.c.b16 %v5490, %v5486
    %v5631 = vpack.c.b16 %v5491, %v5487
    %v5632 = vpack.c.b16 %v5496, %v5492
    %v5633 = vpack.c.b16 %v5497, %v5493
    %v5634 = vpack.c.b16 %v5498, %v5494
    %v5635 = vpack.c.b16 %v5499, %v5495
    %v5636 = vpack.c.b16 %v5504, %v5500
    %v5637 = vpack.c.b16 %v5505, %v5501
    %v5638 = vpack.c.b16 %v5506, %v5502
    %v5639 = vpack.c.b16 %v5507, %v5503
    %v5640 = vpack.c.b16 %v5512, %v5508
    %v5641 = vpack.c.b16 %v5513, %v5509
    %v5642 = vpack.c.b16 %v5514, %v5510
    %v5643 = vpack.c.b16 %v5515, %v5511
    %5772 = vmatprep.subr.bf16.mxu0 %v5517
    %5773 = vmatpush1.bf16.msra.mxu0 %v5516
    %5774 = vmatprep.subr.bf16.mxu0 %v5521
    %5775 = vmatpush1.bf16.msra.mxu0 %v5520
    %5776 = vmatprep.subr.bf16.mxu0 %v5525
    %5777 = vmatpush1.bf16.msra.mxu0 %v5524
    %5778 = vmatprep.subr.bf16.mxu0 %v5529
    %5779 = vmatpush1.bf16.msra.mxu0 %v5528
    %5780 = vmatprep.subr.bf16.mxu0 %v5533
    %5781 = vmatpush1.bf16.msra.mxu0 %v5532
    %5782 = vmatprep.subr.bf16.mxu0 %v5537
    %5783 = vmatpush1.bf16.msra.mxu0 %v5536
    %5784 = vmatprep.subr.bf16.mxu0 %v5541
    %5785 = vmatpush1.bf16.msra.mxu0 %v5540
    %5786 = vmatprep.subr.bf16.mxu0 %v5545
    %5787 = vmatpush1.bf16.msra.mxu0 %v5544
    %5788 = vmatprep.subr.bf16.mxu0 %v5549
    %5789 = vmatpush1.bf16.msra.mxu0 %v5548
    %5790 = vmatprep.subr.bf16.mxu0 %v5553
    %5791 = vmatpush1.bf16.msra.mxu0 %v5552
    %5792 = vmatprep.subr.bf16.mxu0 %v5557
    %5793 = vmatpush1.bf16.msra.mxu0 %v5556
    %5794 = vmatprep.subr.bf16.mxu0 %v5561
    %5795 = vmatpush1.bf16.msra.mxu0 %v5560
    %5796 = vmatprep.subr.bf16.mxu0 %v5565
    %5797 = vmatpush1.bf16.msra.mxu0 %v5564
    %5798 = vmatprep.subr.bf16.mxu0 %v5569
    %5799 = vmatpush1.bf16.msra.mxu0 %v5568
    %5800 = vmatprep.subr.bf16.mxu0 %v5573
    %5801 = vmatpush1.bf16.msra.mxu0 %v5572
    %5802 = vmatprep.subr.bf16.mxu0 %v5577
    %5803 = vmatpush1.bf16.msra.mxu0 %v5576
    %5804 = vmatprep.mubr.bf16.mxu0 %v5108
    %5805 = vmatmul.mubr.bf16.gmra.mrb[0].mxu0 %v5107
    %v5806 = vpop.f32.mrb[0].mxu0
    %v5807 = vadd.f32 %v5115, %v5806
    %v5808 = vpop.f32.mrb[0].mxu0
    %v5809 = vadd.f32 %v5119, %v5808
    %v5810 = vpop.f32.mrb[0].mxu0
    %v5811 = vadd.f32 %v5115, %v5810
    %v5812 = vpop.f32.mrb[0].mxu0
    %v5813 = vadd.f32 %v5119, %v5812
    %5814 = vdwg.mxu0
    %5815 = vmatprep.subr.bf16.mxu0 %v5581
    %5816 = vmatpush1.bf16.msra.mxu0 %v5580
    %5817 = vmatprep.subr.bf16.mxu0 %v5585
    %5818 = vmatpush1.bf16.msra.mxu0 %v5584
    %5819 = vmatprep.subr.bf16.mxu0 %v5589
    %5820 = vmatpush1.bf16.msra.mxu0 %v5588
    %5821 = vmatprep.subr.bf16.mxu0 %v5593
    %5822 = vmatpush1.bf16.msra.mxu0 %v5592
    %5823 = vmatprep.subr.bf16.mxu0 %v5597
    %5824 = vmatpush1.bf16.msra.mxu0 %v5596
    %5825 = vmatprep.subr.bf16.mxu0 %v5601
    %5826 = vmatpush1.bf16.msra.mxu0 %v5600
    %5827 = vmatprep.subr.bf16.mxu0 %v5605
    %5828 = vmatpush1.bf16.msra.mxu0 %v5604
    %5829 = vmatprep.subr.bf16.mxu0 %v5609
    %5830 = vmatpush1.bf16.msra.mxu0 %v5608
    %5831 = vmatprep.subr.bf16.mxu0 %v5613
    %5832 = vmatpush1.bf16.msra.mxu0 %v5612
    %5833 = vmatprep.subr.bf16.mxu0 %v5617
    %5834 = vmatpush1.bf16.msra.mxu0 %v5616
    %5835 = vmatprep.subr.bf16.mxu0 %v5621
    %5836 = vmatpush1.bf16.msra.mxu0 %v5620
    %5837 = vmatprep.subr.bf16.mxu0 %v5625
    %5838 = vmatpush1.bf16.msra.mxu0 %v5624
    %5839 = vmatprep.subr.bf16.mxu0 %v5629
    %5840 = vmatpush1.bf16.msra.mxu0 %v5628
    %5841 = vmatprep.subr.bf16.mxu0 %v5633
    %5842 = vmatpush1.bf16.msra.mxu0 %v5632
    %5843 = vmatprep.subr.bf16.mxu0 %v5637
    %5844 = vmatpush1.bf16.msra.mxu0 %v5636
    %5845 = vmatprep.subr.bf16.mxu0 %v5641
    %5846 = vmatpush1.bf16.msra.mxu0 %v5640
    %5847 = vmatprep.mubr.bf16.mxu0 %v5110
    %5848 = vmatmul.mubr.bf16.gmra.mrb[0].mxu0 %v5109
    %v5849 = vpop.f32.mrb[0].mxu0
    %v5850 = vadd.f32 %v5807, %v5849
    %v5851 = vpop.f32.mrb[0].mxu0
    %v5852 = vadd.f32 %v5809, %v5851
    %v5853 = vpop.f32.mrb[0].mxu0
    %v5854 = vadd.f32 %v5811, %v5853
    %v5855 = vpop.f32.mrb[0].mxu0
    %v5856 = vadd.f32 %v5813, %v5855
    %5857 = vdwg.mxu0
    %5858 = vmatprep.subr.bf16.mxu0 %v5519
    %5859 = vmatpush1.bf16.msra.mxu0 %v5518
    %5860 = vmatprep.subr.bf16.mxu0 %v5523
    %5861 = vmatpush1.bf16.msra.mxu0 %v5522
    %5862 = vmatprep.subr.bf16.mxu0 %v5527
    %5863 = vmatpush1.bf16.msra.mxu0 %v5526
    %5864 = vmatprep.subr.bf16.mxu0 %v5531
    %5865 = vmatpush1.bf16.msra.mxu0 %v5530
    %5866 = vmatprep.subr.bf16.mxu0 %v5535
    %5867 = vmatpush1.bf16.msra.mxu0 %v5534
    %5868 = vmatprep.subr.bf16.mxu0 %v5539
    %5869 = vmatpush1.bf16.msra.mxu0 %v5538
    %5870 = vmatprep.subr.bf16.mxu0 %v5543
    %5871 = vmatpush1.bf16.msra.mxu0 %v5542
    %5872 = vmatprep.subr.bf16.mxu0 %v5547
    %5873 = vmatpush1.bf16.msra.mxu0 %v5546
    %5874 = vmatprep.subr.bf16.mxu0 %v5551
    %5875 = vmatpush1.bf16.msra.mxu0 %v5550
    %5876 = vmatprep.subr.bf16.mxu0 %v5555
    %5877 = vmatpush1.bf16.msra.mxu0 %v5554
    %5878 = vmatprep.subr.bf16.mxu0 %v5559
    %5879 = vmatpush1.bf16.msra.mxu0 %v5558
    %5880 = vmatprep.subr.bf16.mxu0 %v5563
    %5881 = vmatpush1.bf16.msra.mxu0 %v5562
    %5882 = vmatprep.subr.bf16.mxu0 %v5567
    %5883 = vmatpush1.bf16.msra.mxu0 %v5566
    %5884 = vmatprep.subr.bf16.mxu0 %v5571
    %5885 = vmatpush1.bf16.msra.mxu0 %v5570
    %5886 = vmatprep.subr.bf16.mxu0 %v5575
    %5887 = vmatpush1.bf16.msra.mxu0 %v5574
    %5888 = vmatprep.subr.bf16.mxu0 %v5579
    %5889 = vmatpush1.bf16.msra.mxu0 %v5578
    %5890 = vmatprep.mubr.bf16.mxu0 %v5108
    %5891 = vmatmul.mubr.bf16.gmra.mrb[0].mxu0 %v5107
    %v5892 = vpop.f32.mrb[0].mxu0
    %v5893 = vadd.f32 %v5123, %v5892
    %v5894 = vpop.f32.mrb[0].mxu0
    %v5895 = vadd.f32 %v5127, %v5894
    %v5896 = vpop.f32.mrb[0].mxu0
    %v5897 = vadd.f32 %v5123, %v5896
    %v5898 = vpop.f32.mrb[0].mxu0
    %v5899 = vadd.f32 %v5127, %v5898
    %5900 = vdwg.mxu0
    %5901 = vmatprep.subr.bf16.mxu0 %v5583
    %5902 = vmatpush1.bf16.msra.mxu0 %v5582
    %5903 = vmatprep.subr.bf16.mxu0 %v5587
    %5904 = vmatpush1.bf16.msra.mxu0 %v5586
    %5905 = vmatprep.subr.bf16.mxu0 %v5591
    %5906 = vmatpush1.bf16.msra.mxu0 %v5590
    %5907 = vmatprep.subr.bf16.mxu0 %v5595
    %5908 = vmatpush1.bf16.msra.mxu0 %v5594
    %5909 = vmatprep.subr.bf16.mxu0 %v5599
    %5910 = vmatpush1.bf16.msra.mxu0 %v5598
    %5911 = vmatprep.subr.bf16.mxu0 %v5603
    %5912 = vmatpush1.bf16.msra.mxu0 %v5602
    %5913 = vmatprep.subr.bf16.mxu0 %v5607
    %5914 = vmatpush1.bf16.msra.mxu0 %v5606
    %5915 = vmatprep.subr.bf16.mxu0 %v5611
    %5916 = vmatpush1.bf16.msra.mxu0 %v5610
    %5917 = vmatprep.subr.bf16.mxu0 %v5615
    %5918 = vmatpush1.bf16.msra.mxu0 %v5614
    %5919 = vmatprep.subr.bf16.mxu0 %v5619
    %5920 = vmatpush1.bf16.msra.mxu0 %v5618
    %5921 = vmatprep.subr.bf16.mxu0 %v5623
    %5922 = vmatpush1.bf16.msra.mxu0 %v5622
    %5923 = vmatprep.subr.bf16.mxu0 %v5627
    %5924 = vmatpush1.bf16.msra.mxu0 %v5626
    %5925 = vmatprep.subr.bf16.mxu0 %v5631
    %5926 = vmatpush1.bf16.msra.mxu0 %v5630
    %5927 = vmatprep.subr.bf16.mxu0 %v5635
    %5928 = vmatpush1.bf16.msra.mxu0 %v5634
    %5929 = vmatprep.subr.bf16.mxu0 %v5639
    %5930 = vmatpush1.bf16.msra.mxu0 %v5638
    %5931 = vmatprep.subr.bf16.mxu0 %v5643
    %5932 = vmatpush1.bf16.msra.mxu0 %v5642
    %5933 = vmatprep.mubr.bf16.mxu0 %v5110
    %5934 = vmatmul.mubr.bf16.gmra.mrb[0].mxu0 %v5109
    %v5935 = vpop.f32.mrb[0].mxu0
    %v5936 = vadd.f32 %v5893, %v5935
    %v5937 = vpop.f32.mrb[0].mxu0
    %v5938 = vadd.f32 %v5895, %v5937
    %v5939 = vpop.f32.mrb[0].mxu0
    %v5940 = vadd.f32 %v5897, %v5939
    %v5941 = vpop.f32.mrb[0].mxu0
    %v5942 = vadd.f32 %v5899, %v5941
    %5943 = vdwg.mxu0
    %v5944 = vmax.f32 %v5850, 0.0
    %v5945 = vmax.f32 %v5852, 0.0
    %v5946 = vmax.f32 %v5936, 0.0
    %v5947 = vmax.f32 %v5938, 0.0
    %v5948 = vmax.f32 %v5854, 0.0
    %v5949 = vmax.f32 %v5856, 0.0
    %v5950 = vmax.f32 %v5940, 0.0
    %v5951 = vmax.f32 %v5942, 0.0
    %s5952 = scalar_lea.vmem [#allocation4], 5120
    %v5953 = vld [vmem:[%s5952] sm:$0xff]
    %v5954 = vld [vmem:[%s5952 + $0x8] sm:$0xff]
    %v5955 = vld [vmem:[%s5952 + $0x10] sm:$0xff]
    %v5956 = vld [vmem:[%s5952 + $0x18] sm:$0xff]
    %v5957 = vld [vmem:[%s5952 + $0x20] sm:$0xff]
    %v5958 = vld [vmem:[%s5952 + $0x28] sm:$0xff]
    %v5959 = vld [vmem:[%s5952 + $0x30] sm:$0xff]
    %v5960 = vld [vmem:[%s5952 + $0x38] sm:$0xff]
    %v5961 = vld [vmem:[%s5952 + $0x40] sm:$0xff]
    %v5962 = vld [vmem:[%s5952 + $0x48] sm:$0xff]
    %v5963 = vld [vmem:[%s5952 + $0x50] sm:$0xff]
    %v5964 = vld [vmem:[%s5952 + $0x58] sm:$0xff]
    %v5965 = vld [vmem:[%s5952 + $0x60] sm:$0xff]
    %v5966 = vld [vmem:[%s5952 + $0x68] sm:$0xff]
    %v5967 = vld [vmem:[%s5952 + $0x70] sm:$0xff]
    %v5968 = vld [vmem:[%s5952 + $0x78] sm:$0xff]
    %v5969 = vld [vmem:[%s5952 + $0x80] sm:$0xff]
    %v5970 = vld [vmem:[%s5952 + $0x88] sm:$0xff]
    %v5971 = vld [vmem:[%s5952 + $0x90] sm:$0xff]
    %v5972 = vld [vmem:[%s5952 + $0x98] sm:$0xff]
    %v5973 = vld [vmem:[%s5952 + $0xa0] sm:$0xff]
    %v5974 = vld [vmem:[%s5952 + $0xa8] sm:$0xff]
    %v5975 = vld [vmem:[%s5952 + $0xb0] sm:$0xff]
    %v5976 = vld [vmem:[%s5952 + $0xb8] sm:$0xff]
    %v5977 = vld [vmem:[%s5952 + $0xc0] sm:$0xff]
    %v5978 = vld [vmem:[%s5952 + $0xc8] sm:$0xff]
    %v5979 = vld [vmem:[%s5952 + $0xd0] sm:$0xff]
    %v5980 = vld [vmem:[%s5952 + $0xd8] sm:$0xff]
    %v5981 = vld [vmem:[%s5952 + $0xe0] sm:$0xff]
    %v5982 = vld [vmem:[%s5952 + $0xe8] sm:$0xff]
    %v5983 = vld [vmem:[%s5952 + $0xf0] sm:$0xff]
    %v5984 = vld [vmem:[%s5952 + $0xf8] sm:$0xff]
    %v5985 = vld [vmem:[%s5952 + $0x100] sm:$0xff]
    %v5986 = vld [vmem:[%s5952 + $0x108] sm:$0xff]
    %v5987 = vld [vmem:[%s5952 + $0x110] sm:$0xff]
    %v5988 = vld [vmem:[%s5952 + $0x118] sm:$0xff]
    %v5989 = vld [vmem:[%s5952 + $0x120] sm:$0xff]
    %v5990 = vld [vmem:[%s5952 + $0x128] sm:$0xff]
    %v5991 = vld [vmem:[%s5952 + $0x130] sm:$0xff]
    %v5992 = vld [vmem:[%s5952 + $0x138] sm:$0xff]
    %v5993 = vld [vmem:[%s5952 + $0x140] sm:$0xff]
    %v5994 = vld [vmem:[%s5952 + $0x148] sm:$0xff]
    %v5995 = vld [vmem:[%s5952 + $0x150] sm:$0xff]
    %v5996 = vld [vmem:[%s5952 + $0x158] sm:$0xff]
    %v5997 = vld [vmem:[%s5952 + $0x160] sm:$0xff]
    %v5998 = vld [vmem:[%s5952 + $0x168] sm:$0xff]
    %v5999 = vld [vmem:[%s5952 + $0x170] sm:$0xff]
    %v6000 = vld [vmem:[%s5952 + $0x178] sm:$0xff]
    %v6001 = vld [vmem:[%s5952 + $0x180] sm:$0xff]
    %v6002 = vld [vmem:[%s5952 + $0x188] sm:$0xff]
    %v6003 = vld [vmem:[%s5952 + $0x190] sm:$0xff]
    %v6004 = vld [vmem:[%s5952 + $0x198] sm:$0xff]
    %v6005 = vld [vmem:[%s5952 + $0x1a0] sm:$0xff]
    %v6006 = vld [vmem:[%s5952 + $0x1a8] sm:$0xff]
    %v6007 = vld [vmem:[%s5952 + $0x1b0] sm:$0xff]
    %v6008 = vld [vmem:[%s5952 + $0x1b8] sm:$0xff]
    %v6009 = vld [vmem:[%s5952 + $0x1c0] sm:$0xff]
    %v6010 = vld [vmem:[%s5952 + $0x1c8] sm:$0xff]
    %v6011 = vld [vmem:[%s5952 + $0x1d0] sm:$0xff]
    %v6012 = vld [vmem:[%s5952 + $0x1d8] sm:$0xff]
    %v6013 = vld [vmem:[%s5952 + $0x1e0] sm:$0xff]
    %v6014 = vld [vmem:[%s5952 + $0x1e8] sm:$0xff]
    %v6015 = vld [vmem:[%s5952 + $0x1f0] sm:$0xff]
    %v6016 = vld [vmem:[%s5952 + $0x1f8] sm:$0xff]
    %v6017 = vld [vmem:[%s5952 + $0x200] sm:$0xff]
    %v6018 = vld [vmem:[%s5952 + $0x208] sm:$0xff]
    %v6019 = vld [vmem:[%s5952 + $0x210] sm:$0xff]
    %v6020 = vld [vmem:[%s5952 + $0x218] sm:$0xff]
    %v6021 = vld [vmem:[%s5952 + $0x220] sm:$0xff]
    %v6022 = vld [vmem:[%s5952 + $0x228] sm:$0xff]
    %v6023 = vld [vmem:[%s5952 + $0x230] sm:$0xff]
    %v6024 = vld [vmem:[%s5952 + $0x238] sm:$0xff]
    %v6025 = vld [vmem:[%s5952 + $0x240] sm:$0xff]
    %v6026 = vld [vmem:[%s5952 + $0x248] sm:$0xff]
    %v6027 = vld [vmem:[%s5952 + $0x250] sm:$0xff]
    %v6028 = vld [vmem:[%s5952 + $0x258] sm:$0xff]
    %v6029 = vld [vmem:[%s5952 + $0x260] sm:$0xff]
    %v6030 = vld [vmem:[%s5952 + $0x268] sm:$0xff]
    %v6031 = vld [vmem:[%s5952 + $0x270] sm:$0xff]
    %v6032 = vld [vmem:[%s5952 + $0x278] sm:$0xff]
    %v6033 = vld [vmem:[%s5952 + $0x280] sm:$0xff]
    %v6034 = vld [vmem:[%s5952 + $0x288] sm:$0xff]
    %v6035 = vld [vmem:[%s5952 + $0x290] sm:$0xff]
    %v6036 = vld [vmem:[%s5952 + $0x298] sm:$0xff]
    %v6037 = vld [vmem:[%s5952 + $0x2a0] sm:$0xff]
    %v6038 = vld [vmem:[%s5952 + $0x2a8] sm:$0xff]
    %v6039 = vld [vmem:[%s5952 + $0x2b0] sm:$0xff]
    %v6040 = vld [vmem:[%s5952 + $0x2b8] sm:$0xff]
    %v6041 = vld [vmem:[%s5952 + $0x2c0] sm:$0xff]
    %v6042 = vld [vmem:[%s5952 + $0x2c8] sm:$0xff]
    %v6043 = vld [vmem:[%s5952 + $0x2d0] sm:$0xff]
    %v6044 = vld [vmem:[%s5952 + $0x2d8] sm:$0xff]
    %v6045 = vld [vmem:[%s5952 + $0x2e0] sm:$0xff]
    %v6046 = vld [vmem:[%s5952 + $0x2e8] sm:$0xff]
    %v6047 = vld [vmem:[%s5952 + $0x2f0] sm:$0xff]
    %v6048 = vld [vmem:[%s5952 + $0x2f8] sm:$0xff]
    %v6049 = vld [vmem:[%s5952 + $0x300] sm:$0xff]
    %v6050 = vld [vmem:[%s5952 + $0x308] sm:$0xff]
    %v6051 = vld [vmem:[%s5952 + $0x310] sm:$0xff]
    %v6052 = vld [vmem:[%s5952 + $0x318] sm:$0xff]
    %v6053 = vld [vmem:[%s5952 + $0x320] sm:$0xff]
    %v6054 = vld [vmem:[%s5952 + $0x328] sm:$0xff]
    %v6055 = vld [vmem:[%s5952 + $0x330] sm:$0xff]
    %v6056 = vld [vmem:[%s5952 + $0x338] sm:$0xff]
    %v6057 = vld [vmem:[%s5952 + $0x340] sm:$0xff]
    %v6058 = vld [vmem:[%s5952 + $0x348] sm:$0xff]
    %v6059 = vld [vmem:[%s5952 + $0x350] sm:$0xff]
    %v6060 = vld [vmem:[%s5952 + $0x358] sm:$0xff]
    %v6061 = vld [vmem:[%s5952 + $0x360] sm:$0xff]
    %v6062 = vld [vmem:[%s5952 + $0x368] sm:$0xff]
    %v6063 = vld [vmem:[%s5952 + $0x370] sm:$0xff]
    %v6064 = vld [vmem:[%s5952 + $0x378] sm:$0xff]
    %v6065 = vld [vmem:[%s5952 + $0x380] sm:$0xff]
    %v6066 = vld [vmem:[%s5952 + $0x388] sm:$0xff]
    %v6067 = vld [vmem:[%s5952 + $0x390] sm:$0xff]
    %v6068 = vld [vmem:[%s5952 + $0x398] sm:$0xff]
    %v6069 = vld [vmem:[%s5952 + $0x3a0] sm:$0xff]
    %v6070 = vld [vmem:[%s5952 + $0x3a8] sm:$0xff]
    %v6071 = vld [vmem:[%s5952 + $0x3b0] sm:$0xff]
    %v6072 = vld [vmem:[%s5952 + $0x3b8] sm:$0xff]
    %v6073 = vld [vmem:[%s5952 + $0x3c0] sm:$0xff]
    %v6074 = vld [vmem:[%s5952 + $0x3c8] sm:$0xff]
    %v6075 = vld [vmem:[%s5952 + $0x3d0] sm:$0xff]
    %v6076 = vld [vmem:[%s5952 + $0x3d8] sm:$0xff]
    %v6077 = vld [vmem:[%s5952 + $0x3e0] sm:$0xff]
    %v6078 = vld [vmem:[%s5952 + $0x3e8] sm:$0xff]
    %v6079 = vld [vmem:[%s5952 + $0x3f0] sm:$0xff]
    %v6080 = vld [vmem:[%s5952 + $0x3f8] sm:$0xff]
    %s6081 = scalar_lea.vmem [#allocation7], 32
    %v6082 = vld [vmem:[%s6081] ss:$8 sm:$0xf]
    %v6083 = vpack.c.bf16 %v5948, %v5944
    %v6084 = vpack.c.bf16 %v5949, %v5945
    %v6085 = vpack.c.bf16 %v5950, %v5946
    %v6086 = vpack.c.bf16 %v5951, %v5947
    %v6088 = vlaneseq
    %v6089 = vshrl.u32 %v6088, 7
    %v6090 = vsub.s32 0, %v6089
    %v6091 = vrot.slane %v6082, %v6090
    %v6092 = vlaneseq
    %v6093 = vshrl.u32 %v6092, 7
    %v6094 = vsub.s32 1, %v6093
    %v6095 = vrot.slane %v6082, %v6094
    %v6096 = vlaneseq
    %v6097 = vshrl.u32 %v6096, 7
    %v6098 = vsub.s32 2, %v6097
    %v6099 = vrot.slane %v6082, %v6098
    %v6100 = vlaneseq
    %v6101 = vshrl.u32 %v6100, 7
    %v6102 = vsub.s32 3, %v6101
    %v6103 = vrot.slane %v6082, %v6102
    %v6236 = vunpack.c.l.b16 %v5953
    %v6237 = vunpack.c.h.b16 %v5953
    %v6238 = vunpack.c.l.b16 %v5954
    %v6239 = vunpack.c.h.b16 %v5954
    %v6240 = vunpack.c.l.b16 %v5955
    %v6241 = vunpack.c.h.b16 %v5955
    %v6242 = vunpack.c.l.b16 %v5956
    %v6243 = vunpack.c.h.b16 %v5956
    %v6244 = vunpack.c.l.b16 %v5957
    %v6245 = vunpack.c.h.b16 %v5957
    %v6246 = vunpack.c.l.b16 %v5958
    %v6247 = vunpack.c.h.b16 %v5958
    %v6248 = vunpack.c.l.b16 %v5959
    %v6249 = vunpack.c.h.b16 %v5959
    %v6250 = vunpack.c.l.b16 %v5960
    %v6251 = vunpack.c.h.b16 %v5960
    %v6252 = vunpack.c.l.b16 %v5961
    %v6253 = vunpack.c.h.b16 %v5961
    %v6254 = vunpack.c.l.b16 %v5962
    %v6255 = vunpack.c.h.b16 %v5962
    %v6256 = vunpack.c.l.b16 %v5963
    %v6257 = vunpack.c.h.b16 %v5963
    %v6258 = vunpack.c.l.b16 %v5964
    %v6259 = vunpack.c.h.b16 %v5964
    %v6260 = vunpack.c.l.b16 %v5965
    %v6261 = vunpack.c.h.b16 %v5965
    %v6262 = vunpack.c.l.b16 %v5966
    %v6263 = vunpack.c.h.b16 %v5966
    %v6264 = vunpack.c.l.b16 %v5967
    %v6265 = vunpack.c.h.b16 %v5967
    %v6266 = vunpack.c.l.b16 %v5968
    %v6267 = vunpack.c.h.b16 %v5968
    %v6268 = vunpack.c.l.b16 %v5969
    %v6269 = vunpack.c.h.b16 %v5969
    %v6270 = vunpack.c.l.b16 %v5970
    %v6271 = vunpack.c.h.b16 %v5970
    %v6272 = vunpack.c.l.b16 %v5971
    %v6273 = vunpack.c.h.b16 %v5971
    %v6274 = vunpack.c.l.b16 %v5972
    %v6275 = vunpack.c.h.b16 %v5972
    %v6276 = vunpack.c.l.b16 %v5973
    %v6277 = vunpack.c.h.b16 %v5973
    %v6278 = vunpack.c.l.b16 %v5974
    %v6279 = vunpack.c.h.b16 %v5974
    %v6280 = vunpack.c.l.b16 %v5975
    %v6281 = vunpack.c.h.b16 %v5975
    %v6282 = vunpack.c.l.b16 %v5976
    %v6283 = vunpack.c.h.b16 %v5976
    %v6284 = vunpack.c.l.b16 %v5977
    %v6285 = vunpack.c.h.b16 %v5977
    %v6286 = vunpack.c.l.b16 %v5978
    %v6287 = vunpack.c.h.b16 %v5978
    %v6288 = vunpack.c.l.b16 %v5979
    %v6289 = vunpack.c.h.b16 %v5979
    %v6290 = vunpack.c.l.b16 %v5980
    %v6291 = vunpack.c.h.b16 %v5980
    %v6292 = vunpack.c.l.b16 %v5981
    %v6293 = vunpack.c.h.b16 %v5981
    %v6294 = vunpack.c.l.b16 %v5982
    %v6295 = vunpack.c.h.b16 %v5982
    %v6296 = vunpack.c.l.b16 %v5983
    %v6297 = vunpack.c.h.b16 %v5983
    %v6298 = vunpack.c.l.b16 %v5984
    %v6299 = vunpack.c.h.b16 %v5984
    %v6300 = vunpack.c.l.b16 %v5985
    %v6301 = vunpack.c.h.b16 %v5985
    %v6302 = vunpack.c.l.b16 %v5986
    %v6303 = vunpack.c.h.b16 %v5986
    %v6304 = vunpack.c.l.b16 %v5987
    %v6305 = vunpack.c.h.b16 %v5987
    %v6306 = vunpack.c.l.b16 %v5988
    %v6307 = vunpack.c.h.b16 %v5988
    %v6308 = vunpack.c.l.b16 %v5989
    %v6309 = vunpack.c.h.b16 %v5989
    %v6310 = vunpack.c.l.b16 %v5990
    %v6311 = vunpack.c.h.b16 %v5990
    %v6312 = vunpack.c.l.b16 %v5991
    %v6313 = vunpack.c.h.b16 %v5991
    %v6314 = vunpack.c.l.b16 %v5992
    %v6315 = vunpack.c.h.b16 %v5992
    %v6316 = vunpack.c.l.b16 %v5993
    %v6317 = vunpack.c.h.b16 %v5993
    %v6318 = vunpack.c.l.b16 %v5994
    %v6319 = vunpack.c.h.b16 %v5994
    %v6320 = vunpack.c.l.b16 %v5995
    %v6321 = vunpack.c.h.b16 %v5995
    %v6322 = vunpack.c.l.b16 %v5996
    %v6323 = vunpack.c.h.b16 %v5996
    %v6324 = vunpack.c.l.b16 %v5997
    %v6325 = vunpack.c.h.b16 %v5997
    %v6326 = vunpack.c.l.b16 %v5998
    %v6327 = vunpack.c.h.b16 %v5998
    %v6328 = vunpack.c.l.b16 %v5999
    %v6329 = vunpack.c.h.b16 %v5999
    %v6330 = vunpack.c.l.b16 %v6000
    %v6331 = vunpack.c.h.b16 %v6000
    %v6332 = vunpack.c.l.b16 %v6001
    %v6333 = vunpack.c.h.b16 %v6001
    %v6334 = vunpack.c.l.b16 %v6002
    %v6335 = vunpack.c.h.b16 %v6002
    %v6336 = vunpack.c.l.b16 %v6003
    %v6337 = vunpack.c.h.b16 %v6003
    %v6338 = vunpack.c.l.b16 %v6004
    %v6339 = vunpack.c.h.b16 %v6004
    %v6340 = vunpack.c.l.b16 %v6005
    %v6341 = vunpack.c.h.b16 %v6005
    %v6342 = vunpack.c.l.b16 %v6006
    %v6343 = vunpack.c.h.b16 %v6006
    %v6344 = vunpack.c.l.b16 %v6007
    %v6345 = vunpack.c.h.b16 %v6007
    %v6346 = vunpack.c.l.b16 %v6008
    %v6347 = vunpack.c.h.b16 %v6008
    %v6348 = vunpack.c.l.b16 %v6009
    %v6349 = vunpack.c.h.b16 %v6009
    %v6350 = vunpack.c.l.b16 %v6010
    %v6351 = vunpack.c.h.b16 %v6010
    %v6352 = vunpack.c.l.b16 %v6011
    %v6353 = vunpack.c.h.b16 %v6011
    %v6354 = vunpack.c.l.b16 %v6012
    %v6355 = vunpack.c.h.b16 %v6012
    %v6356 = vunpack.c.l.b16 %v6013
    %v6357 = vunpack.c.h.b16 %v6013
    %v6358 = vunpack.c.l.b16 %v6014
    %v6359 = vunpack.c.h.b16 %v6014
    %v6360 = vunpack.c.l.b16 %v6015
    %v6361 = vunpack.c.h.b16 %v6015
    %v6362 = vunpack.c.l.b16 %v6016
    %v6363 = vunpack.c.h.b16 %v6016
    %v6364 = vunpack.c.l.b16 %v6017
    %v6365 = vunpack.c.h.b16 %v6017
    %v6366 = vunpack.c.l.b16 %v6018
    %v6367 = vunpack.c.h.b16 %v6018
    %v6368 = vunpack.c.l.b16 %v6019
    %v6369 = vunpack.c.h.b16 %v6019
    %v6370 = vunpack.c.l.b16 %v6020
    %v6371 = vunpack.c.h.b16 %v6020
    %v6372 = vunpack.c.l.b16 %v6021
    %v6373 = vunpack.c.h.b16 %v6021
    %v6374 = vunpack.c.l.b16 %v6022
    %v6375 = vunpack.c.h.b16 %v6022
    %v6376 = vunpack.c.l.b16 %v6023
    %v6377 = vunpack.c.h.b16 %v6023
    %v6378 = vunpack.c.l.b16 %v6024
    %v6379 = vunpack.c.h.b16 %v6024
    %v6380 = vunpack.c.l.b16 %v6025
    %v6381 = vunpack.c.h.b16 %v6025
    %v6382 = vunpack.c.l.b16 %v6026
    %v6383 = vunpack.c.h.b16 %v6026
    %v6384 = vunpack.c.l.b16 %v6027
    %v6385 = vunpack.c.h.b16 %v6027
    %v6386 = vunpack.c.l.b16 %v6028
    %v6387 = vunpack.c.h.b16 %v6028
    %v6388 = vunpack.c.l.b16 %v6029
    %v6389 = vunpack.c.h.b16 %v6029
    %v6390 = vunpack.c.l.b16 %v6030
    %v6391 = vunpack.c.h.b16 %v6030
    %v6392 = vunpack.c.l.b16 %v6031
    %v6393 = vunpack.c.h.b16 %v6031
    %v6394 = vunpack.c.l.b16 %v6032
    %v6395 = vunpack.c.h.b16 %v6032
    %v6396 = vunpack.c.l.b16 %v6033
    %v6397 = vunpack.c.h.b16 %v6033
    %v6398 = vunpack.c.l.b16 %v6034
    %v6399 = vunpack.c.h.b16 %v6034
    %v6400 = vunpack.c.l.b16 %v6035
    %v6401 = vunpack.c.h.b16 %v6035
    %v6402 = vunpack.c.l.b16 %v6036
    %v6403 = vunpack.c.h.b16 %v6036
    %v6404 = vunpack.c.l.b16 %v6037
    %v6405 = vunpack.c.h.b16 %v6037
    %v6406 = vunpack.c.l.b16 %v6038
    %v6407 = vunpack.c.h.b16 %v6038
    %v6408 = vunpack.c.l.b16 %v6039
    %v6409 = vunpack.c.h.b16 %v6039
    %v6410 = vunpack.c.l.b16 %v6040
    %v6411 = vunpack.c.h.b16 %v6040
    %v6412 = vunpack.c.l.b16 %v6041
    %v6413 = vunpack.c.h.b16 %v6041
    %v6414 = vunpack.c.l.b16 %v6042
    %v6415 = vunpack.c.h.b16 %v6042
    %v6416 = vunpack.c.l.b16 %v6043
    %v6417 = vunpack.c.h.b16 %v6043
    %v6418 = vunpack.c.l.b16 %v6044
    %v6419 = vunpack.c.h.b16 %v6044
    %v6420 = vunpack.c.l.b16 %v6045
    %v6421 = vunpack.c.h.b16 %v6045
    %v6422 = vunpack.c.l.b16 %v6046
    %v6423 = vunpack.c.h.b16 %v6046
    %v6424 = vunpack.c.l.b16 %v6047
    %v6425 = vunpack.c.h.b16 %v6047
    %v6426 = vunpack.c.l.b16 %v6048
    %v6427 = vunpack.c.h.b16 %v6048
    %v6428 = vunpack.c.l.b16 %v6049
    %v6429 = vunpack.c.h.b16 %v6049
    %v6430 = vunpack.c.l.b16 %v6050
    %v6431 = vunpack.c.h.b16 %v6050
    %v6432 = vunpack.c.l.b16 %v6051
    %v6433 = vunpack.c.h.b16 %v6051
    %v6434 = vunpack.c.l.b16 %v6052
    %v6435 = vunpack.c.h.b16 %v6052
    %v6436 = vunpack.c.l.b16 %v6053
    %v6437 = vunpack.c.h.b16 %v6053
    %v6438 = vunpack.c.l.b16 %v6054
    %v6439 = vunpack.c.h.b16 %v6054
    %v6440 = vunpack.c.l.b16 %v6055
    %v6441 = vunpack.c.h.b16 %v6055
    %v6442 = vunpack.c.l.b16 %v6056
    %v6443 = vunpack.c.h.b16 %v6056
    %v6444 = vunpack.c.l.b16 %v6057
    %v6445 = vunpack.c.h.b16 %v6057
    %v6446 = vunpack.c.l.b16 %v6058
    %v6447 = vunpack.c.h.b16 %v6058
    %v6448 = vunpack.c.l.b16 %v6059
    %v6449 = vunpack.c.h.b16 %v6059
    %v6450 = vunpack.c.l.b16 %v6060
    %v6451 = vunpack.c.h.b16 %v6060
    %v6452 = vunpack.c.l.b16 %v6061
    %v6453 = vunpack.c.h.b16 %v6061
    %v6454 = vunpack.c.l.b16 %v6062
    %v6455 = vunpack.c.h.b16 %v6062
    %v6456 = vunpack.c.l.b16 %v6063
    %v6457 = vunpack.c.h.b16 %v6063
    %v6458 = vunpack.c.l.b16 %v6064
    %v6459 = vunpack.c.h.b16 %v6064
    %v6460 = vunpack.c.l.b16 %v6065
    %v6461 = vunpack.c.h.b16 %v6065
    %v6462 = vunpack.c.l.b16 %v6066
    %v6463 = vunpack.c.h.b16 %v6066
    %v6464 = vunpack.c.l.b16 %v6067
    %v6465 = vunpack.c.h.b16 %v6067
    %v6466 = vunpack.c.l.b16 %v6068
    %v6467 = vunpack.c.h.b16 %v6068
    %v6468 = vunpack.c.l.b16 %v6069
    %v6469 = vunpack.c.h.b16 %v6069
    %v6470 = vunpack.c.l.b16 %v6070
    %v6471 = vunpack.c.h.b16 %v6070
    %v6472 = vunpack.c.l.b16 %v6071
    %v6473 = vunpack.c.h.b16 %v6071
    %v6474 = vunpack.c.l.b16 %v6072
    %v6475 = vunpack.c.h.b16 %v6072
    %v6476 = vunpack.c.l.b16 %v6073
    %v6477 = vunpack.c.h.b16 %v6073
    %v6478 = vunpack.c.l.b16 %v6074
    %v6479 = vunpack.c.h.b16 %v6074
    %v6480 = vunpack.c.l.b16 %v6075
    %v6481 = vunpack.c.h.b16 %v6075
    %v6482 = vunpack.c.l.b16 %v6076
    %v6483 = vunpack.c.h.b16 %v6076
    %v6484 = vunpack.c.l.b16 %v6077
    %v6485 = vunpack.c.h.b16 %v6077
    %v6486 = vunpack.c.l.b16 %v6078
    %v6487 = vunpack.c.h.b16 %v6078
    %v6488 = vunpack.c.l.b16 %v6079
    %v6489 = vunpack.c.h.b16 %v6079
    %v6490 = vunpack.c.l.b16 %v6080
    %v6491 = vunpack.c.h.b16 %v6080
    %v6492 = vpack.c.b16 %v6240, %v6236
    %v6493 = vpack.c.b16 %v6241, %v6237
    %v6494 = vpack.c.b16 %v6242, %v6238
    %v6495 = vpack.c.b16 %v6243, %v6239
    %v6496 = vpack.c.b16 %v6248, %v6244
    %v6497 = vpack.c.b16 %v6249, %v6245
    %v6498 = vpack.c.b16 %v6250, %v6246
    %v6499 = vpack.c.b16 %v6251, %v6247
    %v6500 = vpack.c.b16 %v6256, %v6252
    %v6501 = vpack.c.b16 %v6257, %v6253
    %v6502 = vpack.c.b16 %v6258, %v6254
    %v6503 = vpack.c.b16 %v6259, %v6255
    %v6504 = vpack.c.b16 %v6264, %v6260
    %v6505 = vpack.c.b16 %v6265, %v6261
    %v6506 = vpack.c.b16 %v6266, %v6262
    %v6507 = vpack.c.b16 %v6267, %v6263
    %v6508 = vpack.c.b16 %v6272, %v6268
    %v6509 = vpack.c.b16 %v6273, %v6269
    %v6510 = vpack.c.b16 %v6274, %v6270
    %v6511 = vpack.c.b16 %v6275, %v6271
    %v6512 = vpack.c.b16 %v6280, %v6276
    %v6513 = vpack.c.b16 %v6281, %v6277
    %v6514 = vpack.c.b16 %v6282, %v6278
    %v6515 = vpack.c.b16 %v6283, %v6279
    %v6516 = vpack.c.b16 %v6288, %v6284
    %v6517 = vpack.c.b16 %v6289, %v6285
    %v6518 = vpack.c.b16 %v6290, %v6286
    %v6519 = vpack.c.b16 %v6291, %v6287
    %v6520 = vpack.c.b16 %v6296, %v6292
    %v6521 = vpack.c.b16 %v6297, %v6293
    %v6522 = vpack.c.b16 %v6298, %v6294
    %v6523 = vpack.c.b16 %v6299, %v6295
    %v6524 = vpack.c.b16 %v6304, %v6300
    %v6525 = vpack.c.b16 %v6305, %v6301
    %v6526 = vpack.c.b16 %v6306, %v6302
    %v6527 = vpack.c.b16 %v6307, %v6303
    %v6528 = vpack.c.b16 %v6312, %v6308
    %v6529 = vpack.c.b16 %v6313, %v6309
    %v6530 = vpack.c.b16 %v6314, %v6310
    %v6531 = vpack.c.b16 %v6315, %v6311
    %v6532 = vpack.c.b16 %v6320, %v6316
    %v6533 = vpack.c.b16 %v6321, %v6317
    %v6534 = vpack.c.b16 %v6322, %v6318
    %v6535 = vpack.c.b16 %v6323, %v6319
    %v6536 = vpack.c.b16 %v6328, %v6324
    %v6537 = vpack.c.b16 %v6329, %v6325
    %v6538 = vpack.c.b16 %v6330, %v6326
    %v6539 = vpack.c.b16 %v6331, %v6327
    %v6540 = vpack.c.b16 %v6336, %v6332
    %v6541 = vpack.c.b16 %v6337, %v6333
    %v6542 = vpack.c.b16 %v6338, %v6334
    %v6543 = vpack.c.b16 %v6339, %v6335
    %v6544 = vpack.c.b16 %v6344, %v6340
    %v6545 = vpack.c.b16 %v6345, %v6341
    %v6546 = vpack.c.b16 %v6346, %v6342
    %v6547 = vpack.c.b16 %v6347, %v6343
    %v6548 = vpack.c.b16 %v6352, %v6348
    %v6549 = vpack.c.b16 %v6353, %v6349
    %v6550 = vpack.c.b16 %v6354, %v6350
    %v6551 = vpack.c.b16 %v6355, %v6351
    %v6552 = vpack.c.b16 %v6360, %v6356
    %v6553 = vpack.c.b16 %v6361, %v6357
    %v6554 = vpack.c.b16 %v6362, %v6358
    %v6555 = vpack.c.b16 %v6363, %v6359
    %v6556 = vpack.c.b16 %v6368, %v6364
    %v6557 = vpack.c.b16 %v6369, %v6365
    %v6558 = vpack.c.b16 %v6370, %v6366
    %v6559 = vpack.c.b16 %v6371, %v6367
    %v6560 = vpack.c.b16 %v6376, %v6372
    %v6561 = vpack.c.b16 %v6377, %v6373
    %v6562 = vpack.c.b16 %v6378, %v6374
    %v6563 = vpack.c.b16 %v6379, %v6375
    %v6564 = vpack.c.b16 %v6384, %v6380
    %v6565 = vpack.c.b16 %v6385, %v6381
    %v6566 = vpack.c.b16 %v6386, %v6382
    %v6567 = vpack.c.b16 %v6387, %v6383
    %v6568 = vpack.c.b16 %v6392, %v6388
    %v6569 = vpack.c.b16 %v6393, %v6389
    %v6570 = vpack.c.b16 %v6394, %v6390
    %v6571 = vpack.c.b16 %v6395, %v6391
    %v6572 = vpack.c.b16 %v6400, %v6396
    %v6573 = vpack.c.b16 %v6401, %v6397
    %v6574 = vpack.c.b16 %v6402, %v6398
    %v6575 = vpack.c.b16 %v6403, %v6399
    %v6576 = vpack.c.b16 %v6408, %v6404
    %v6577 = vpack.c.b16 %v6409, %v6405
    %v6578 = vpack.c.b16 %v6410, %v6406
    %v6579 = vpack.c.b16 %v6411, %v6407
    %v6580 = vpack.c.b16 %v6416, %v6412
    %v6581 = vpack.c.b16 %v6417, %v6413
    %v6582 = vpack.c.b16 %v6418, %v6414
    %v6583 = vpack.c.b16 %v6419, %v6415
    %v6584 = vpack.c.b16 %v6424, %v6420
    %v6585 = vpack.c.b16 %v6425, %v6421
    %v6586 = vpack.c.b16 %v6426, %v6422
    %v6587 = vpack.c.b16 %v6427, %v6423
    %v6588 = vpack.c.b16 %v6432, %v6428
    %v6589 = vpack.c.b16 %v6433, %v6429
    %v6590 = vpack.c.b16 %v6434, %v6430
    %v6591 = vpack.c.b16 %v6435, %v6431
    %v6592 = vpack.c.b16 %v6440, %v6436
    %v6593 = vpack.c.b16 %v6441, %v6437
    %v6594 = vpack.c.b16 %v6442, %v6438
    %v6595 = vpack.c.b16 %v6443, %v6439
    %v6596 = vpack.c.b16 %v6448, %v6444
    %v6597 = vpack.c.b16 %v6449, %v6445
    %v6598 = vpack.c.b16 %v6450, %v6446
    %v6599 = vpack.c.b16 %v6451, %v6447
    %v6600 = vpack.c.b16 %v6456, %v6452
    %v6601 = vpack.c.b16 %v6457, %v6453
    %v6602 = vpack.c.b16 %v6458, %v6454
    %v6603 = vpack.c.b16 %v6459, %v6455
    %v6604 = vpack.c.b16 %v6464, %v6460
    %v6605 = vpack.c.b16 %v6465, %v6461
    %v6606 = vpack.c.b16 %v6466, %v6462
    %v6607 = vpack.c.b16 %v6467, %v6463
    %v6608 = vpack.c.b16 %v6472, %v6468
    %v6609 = vpack.c.b16 %v6473, %v6469
    %v6610 = vpack.c.b16 %v6474, %v6470
    %v6611 = vpack.c.b16 %v6475, %v6471
    %v6612 = vpack.c.b16 %v6480, %v6476
    %v6613 = vpack.c.b16 %v6481, %v6477
    %v6614 = vpack.c.b16 %v6482, %v6478
    %v6615 = vpack.c.b16 %v6483, %v6479
    %v6616 = vpack.c.b16 %v6488, %v6484
    %v6617 = vpack.c.b16 %v6489, %v6485
    %v6618 = vpack.c.b16 %v6490, %v6486
    %v6619 = vpack.c.b16 %v6491, %v6487
    %6748 = vmatprep.subr.bf16.mxu0 %v6493
    %6749 = vmatpush1.bf16.msra.mxu0 %v6492
    %6750 = vmatprep.subr.bf16.mxu0 %v6497
    %6751 = vmatpush1.bf16.msra.mxu0 %v6496
    %6752 = vmatprep.subr.bf16.mxu0 %v6501
    %6753 = vmatpush1.bf16.msra.mxu0 %v6500
    %6754 = vmatprep.subr.bf16.mxu0 %v6505
    %6755 = vmatpush1.bf16.msra.mxu0 %v6504
    %6756 = vmatprep.subr.bf16.mxu0 %v6509
    %6757 = vmatpush1.bf16.msra.mxu0 %v6508
    %6758 = vmatprep.subr.bf16.mxu0 %v6513
    %6759 = vmatpush1.bf16.msra.mxu0 %v6512
    %6760 = vmatprep.subr.bf16.mxu0 %v6517
    %6761 = vmatpush1.bf16.msra.mxu0 %v6516
    %6762 = vmatprep.subr.bf16.mxu0 %v6521
    %6763 = vmatpush1.bf16.msra.mxu0 %v6520
    %6764 = vmatprep.subr.bf16.mxu0 %v6525
    %6765 = vmatpush1.bf16.msra.mxu0 %v6524
    %6766 = vmatprep.subr.bf16.mxu0 %v6529
    %6767 = vmatpush1.bf16.msra.mxu0 %v6528
    %6768 = vmatprep.subr.bf16.mxu0 %v6533
    %6769 = vmatpush1.bf16.msra.mxu0 %v6532
    %6770 = vmatprep.subr.bf16.mxu0 %v6537
    %6771 = vmatpush1.bf16.msra.mxu0 %v6536
    %6772 = vmatprep.subr.bf16.mxu0 %v6541
    %6773 = vmatpush1.bf16.msra.mxu0 %v6540
    %6774 = vmatprep.subr.bf16.mxu0 %v6545
    %6775 = vmatpush1.bf16.msra.mxu0 %v6544
    %6776 = vmatprep.subr.bf16.mxu0 %v6549
    %6777 = vmatpush1.bf16.msra.mxu0 %v6548
    %6778 = vmatprep.subr.bf16.mxu0 %v6553
    %6779 = vmatpush1.bf16.msra.mxu0 %v6552
    %6780 = vmatprep.mubr.bf16.mxu0 %v6084
    %6781 = vmatmul.mubr.bf16.gmra.mrb[0].mxu0 %v6083
    %v6782 = vpop.f32.mrb[0].mxu0
    %v6783 = vadd.f32 %v6091, %v6782
    %v6784 = vpop.f32.mrb[0].mxu0
    %v6785 = vadd.f32 %v6095, %v6784
    %v6786 = vpop.f32.mrb[0].mxu0
    %v6787 = vadd.f32 %v6091, %v6786
    %v6788 = vpop.f32.mrb[0].mxu0
    %v6789 = vadd.f32 %v6095, %v6788
    %6790 = vdwg.mxu0
    %6791 = vmatprep.subr.bf16.mxu0 %v6557
    %6792 = vmatpush1.bf16.msra.mxu0 %v6556
    %6793 = vmatprep.subr.bf16.mxu0 %v6561
    %6794 = vmatpush1.bf16.msra.mxu0 %v6560
    %6795 = vmatprep.subr.bf16.mxu0 %v6565
    %6796 = vmatpush1.bf16.msra.mxu0 %v6564
    %6797 = vmatprep.subr.bf16.mxu0 %v6569
    %6798 = vmatpush1.bf16.msra.mxu0 %v6568
    %6799 = vmatprep.subr.bf16.mxu0 %v6573
    %6800 = vmatpush1.bf16.msra.mxu0 %v6572
    %6801 = vmatprep.subr.bf16.mxu0 %v6577
    %6802 = vmatpush1.bf16.msra.mxu0 %v6576
    %6803 = vmatprep.subr.bf16.mxu0 %v6581
    %6804 = vmatpush1.bf16.msra.mxu0 %v6580
    %6805 = vmatprep.subr.bf16.mxu0 %v6585
    %6806 = vmatpush1.bf16.msra.mxu0 %v6584
    %6807 = vmatprep.subr.bf16.mxu0 %v6589
    %6808 = vmatpush1.bf16.msra.mxu0 %v6588
    %6809 = vmatprep.subr.bf16.mxu0 %v6593
    %6810 = vmatpush1.bf16.msra.mxu0 %v6592
    %6811 = vmatprep.subr.bf16.mxu0 %v6597
    %6812 = vmatpush1.bf16.msra.mxu0 %v6596
    %6813 = vmatprep.subr.bf16.mxu0 %v6601
    %6814 = vmatpush1.bf16.msra.mxu0 %v6600
    %6815 = vmatprep.subr.bf16.mxu0 %v6605
    %6816 = vmatpush1.bf16.msra.mxu0 %v6604
    %6817 = vmatprep.subr.bf16.mxu0 %v6609
    %6818 = vmatpush1.bf16.msra.mxu0 %v6608
    %6819 = vmatprep.subr.bf16.mxu0 %v6613
    %6820 = vmatpush1.bf16.msra.mxu0 %v6612
    %6821 = vmatprep.subr.bf16.mxu0 %v6617
    %6822 = vmatpush1.bf16.msra.mxu0 %v6616
    %6823 = vmatprep.mubr.bf16.mxu0 %v6086
    %6824 = vmatmul.mubr.bf16.gmra.mrb[0].mxu0 %v6085
    %v6825 = vpop.f32.mrb[0].mxu0
    %v6826 = vadd.f32 %v6783, %v6825
    %v6827 = vpop.f32.mrb[0].mxu0
    %v6828 = vadd.f32 %v6785, %v6827
    %v6829 = vpop.f32.mrb[0].mxu0
    %v6830 = vadd.f32 %v6787, %v6829
    %v6831 = vpop.f32.mrb[0].mxu0
    %v6832 = vadd.f32 %v6789, %v6831
    %6833 = vdwg.mxu0
    %6834 = vmatprep.subr.bf16.mxu0 %v6495
    %6835 = vmatpush1.bf16.msra.mxu0 %v6494
    %6836 = vmatprep.subr.bf16.mxu0 %v6499
    %6837 = vmatpush1.bf16.msra.mxu0 %v6498
    %6838 = vmatprep.subr.bf16.mxu0 %v6503
    %6839 = vmatpush1.bf16.msra.mxu0 %v6502
    %6840 = vmatprep.subr.bf16.mxu0 %v6507
    %6841 = vmatpush1.bf16.msra.mxu0 %v6506
    %6842 = vmatprep.subr.bf16.mxu0 %v6511
    %6843 = vmatpush1.bf16.msra.mxu0 %v6510
    %6844 = vmatprep.subr.bf16.mxu0 %v6515
    %6845 = vmatpush1.bf16.msra.mxu0 %v6514
    %6846 = vmatprep.subr.bf16.mxu0 %v6519
    %6847 = vmatpush1.bf16.msra.mxu0 %v6518
    %6848 = vmatprep.subr.bf16.mxu0 %v6523
    %6849 = vmatpush1.bf16.msra.mxu0 %v6522
    %6850 = vmatprep.subr.bf16.mxu0 %v6527
    %6851 = vmatpush1.bf16.msra.mxu0 %v6526
    %6852 = vmatprep.subr.bf16.mxu0 %v6531
    %6853 = vmatpush1.bf16.msra.mxu0 %v6530
    %6854 = vmatprep.subr.bf16.mxu0 %v6535
    %6855 = vmatpush1.bf16.msra.mxu0 %v6534
    %6856 = vmatprep.subr.bf16.mxu0 %v6539
    %6857 = vmatpush1.bf16.msra.mxu0 %v6538
    %6858 = vmatprep.subr.bf16.mxu0 %v6543
    %6859 = vmatpush1.bf16.msra.mxu0 %v6542
    %6860 = vmatprep.subr.bf16.mxu0 %v6547
    %6861 = vmatpush1.bf16.msra.mxu0 %v6546
    %6862 = vmatprep.subr.bf16.mxu0 %v6551
    %6863 = vmatpush1.bf16.msra.mxu0 %v6550
    %6864 = vmatprep.subr.bf16.mxu0 %v6555
    %6865 = vmatpush1.bf16.msra.mxu0 %v6554
    %6866 = vmatprep.mubr.bf16.mxu0 %v6084
    %6867 = vmatmul.mubr.bf16.gmra.mrb[0].mxu0 %v6083
    %v6868 = vpop.f32.mrb[0].mxu0
    %v6869 = vadd.f32 %v6099, %v6868
    %v6870 = vpop.f32.mrb[0].mxu0
    %v6871 = vadd.f32 %v6103, %v6870
    %v6872 = vpop.f32.mrb[0].mxu0
    %v6873 = vadd.f32 %v6099, %v6872
    %v6874 = vpop.f32.mrb[0].mxu0
    %v6875 = vadd.f32 %v6103, %v6874
    %6876 = vdwg.mxu0
    %6877 = vmatprep.subr.bf16.mxu0 %v6559
    %6878 = vmatpush1.bf16.msra.mxu0 %v6558
    %6879 = vmatprep.subr.bf16.mxu0 %v6563
    %6880 = vmatpush1.bf16.msra.mxu0 %v6562
    %6881 = vmatprep.subr.bf16.mxu0 %v6567
    %6882 = vmatpush1.bf16.msra.mxu0 %v6566
    %6883 = vmatprep.subr.bf16.mxu0 %v6571
    %6884 = vmatpush1.bf16.msra.mxu0 %v6570
    %6885 = vmatprep.subr.bf16.mxu0 %v6575
    %6886 = vmatpush1.bf16.msra.mxu0 %v6574
    %6887 = vmatprep.subr.bf16.mxu0 %v6579
    %6888 = vmatpush1.bf16.msra.mxu0 %v6578
    %6889 = vmatprep.subr.bf16.mxu0 %v6583
    %6890 = vmatpush1.bf16.msra.mxu0 %v6582
    %6891 = vmatprep.subr.bf16.mxu0 %v6587
    %6892 = vmatpush1.bf16.msra.mxu0 %v6586
    %6893 = vmatprep.subr.bf16.mxu0 %v6591
    %6894 = vmatpush1.bf16.msra.mxu0 %v6590
    %6895 = vmatprep.subr.bf16.mxu0 %v6595
    %6896 = vmatpush1.bf16.msra.mxu0 %v6594
    %6897 = vmatprep.subr.bf16.mxu0 %v6599
    %6898 = vmatpush1.bf16.msra.mxu0 %v6598
    %6899 = vmatprep.subr.bf16.mxu0 %v6603
    %6900 = vmatpush1.bf16.msra.mxu0 %v6602
    %6901 = vmatprep.subr.bf16.mxu0 %v6607
    %6902 = vmatpush1.bf16.msra.mxu0 %v6606
    %6903 = vmatprep.subr.bf16.mxu0 %v6611
    %6904 = vmatpush1.bf16.msra.mxu0 %v6610
    %6905 = vmatprep.subr.bf16.mxu0 %v6615
    %6906 = vmatpush1.bf16.msra.mxu0 %v6614
    %6907 = vmatprep.subr.bf16.mxu0 %v6619
    %6908 = vmatpush1.bf16.msra.mxu0 %v6618
    %6909 = vmatprep.mubr.bf16.mxu0 %v6086
    %6910 = vmatmul.mubr.bf16.gmra.mrb[0].mxu0 %v6085
    %v6911 = vpop.f32.mrb[0].mxu0
    %v6912 = vadd.f32 %v6869, %v6911
    %v6913 = vpop.f32.mrb[0].mxu0
    %v6914 = vadd.f32 %v6871, %v6913
    %v6915 = vpop.f32.mrb[0].mxu0
    %v6916 = vadd.f32 %v6873, %v6915
    %v6917 = vpop.f32.mrb[0].mxu0
    %v6918 = vadd.f32 %v6875, %v6917
    %6919 = vdwg.mxu0
    %v6920 = vmax.f32 %v6826, 0.0
    %v6921 = vmax.f32 %v6828, 0.0
    %v6922 = vmax.f32 %v6912, 0.0
    %v6923 = vmax.f32 %v6914, 0.0
    %v6924 = vmax.f32 %v6830, 0.0
    %v6925 = vmax.f32 %v6832, 0.0
    %v6926 = vmax.f32 %v6916, 0.0
    %v6927 = vmax.f32 %v6918, 0.0
    %s6928 = scalar_lea.vmem [#allocation6], 256
    %v6929 = vld [vmem:[%s6928] sm:$0xf]
    %v6930 = vld [vmem:[%s6928 + $0x4] sm:$0xf]
    %v6931 = vld [vmem:[%s6928 + $0x8] sm:$0xf]
    %v6932 = vld [vmem:[%s6928 + $0xc] sm:$0xf]
    %v6933 = vld [vmem:[%s6928 + $0x10] sm:$0xf]
    %v6934 = vld [vmem:[%s6928 + $0x14] sm:$0xf]
    %v6935 = vld [vmem:[%s6928 + $0x18] sm:$0xf]
    %v6936 = vld [vmem:[%s6928 + $0x1c] sm:$0xf]
    %v6937 = vld [vmem:[%s6928 + $0x20] sm:$0xf]
    %v6938 = vld [vmem:[%s6928 + $0x24] sm:$0xf]
    %v6939 = vld [vmem:[%s6928 + $0x28] sm:$0xf]
    %v6940 = vld [vmem:[%s6928 + $0x2c] sm:$0xf]
    %v6941 = vld [vmem:[%s6928 + $0x30] sm:$0xf]
    %v6942 = vld [vmem:[%s6928 + $0x34] sm:$0xf]
    %v6943 = vld [vmem:[%s6928 + $0x38] sm:$0xf]
    %v6944 = vld [vmem:[%s6928 + $0x3c] sm:$0xf]
    %v6945 = vld [vmem:[%s6928 + $0x40] sm:$0xf]
    %v6946 = vld [vmem:[%s6928 + $0x44] sm:$0xf]
    %v6947 = vld [vmem:[%s6928 + $0x48] sm:$0xf]
    %v6948 = vld [vmem:[%s6928 + $0x4c] sm:$0xf]
    %v6949 = vld [vmem:[%s6928 + $0x50] sm:$0xf]
    %v6950 = vld [vmem:[%s6928 + $0x54] sm:$0xf]
    %v6951 = vld [vmem:[%s6928 + $0x58] sm:$0xf]
    %v6952 = vld [vmem:[%s6928 + $0x5c] sm:$0xf]
    %v6953 = vld [vmem:[%s6928 + $0x60] sm:$0xf]
    %v6954 = vld [vmem:[%s6928 + $0x64] sm:$0xf]
    %v6955 = vld [vmem:[%s6928 + $0x68] sm:$0xf]
    %v6956 = vld [vmem:[%s6928 + $0x6c] sm:$0xf]
    %v6957 = vld [vmem:[%s6928 + $0x70] sm:$0xf]
    %v6958 = vld [vmem:[%s6928 + $0x74] sm:$0xf]
    %v6959 = vld [vmem:[%s6928 + $0x78] sm:$0xf]
    %v6960 = vld [vmem:[%s6928 + $0x7c] sm:$0xf]
    %v6961 = vld [vmem:[%s6928 + $0x80] sm:$0xf]
    %v6962 = vld [vmem:[%s6928 + $0x84] sm:$0xf]
    %v6963 = vld [vmem:[%s6928 + $0x88] sm:$0xf]
    %v6964 = vld [vmem:[%s6928 + $0x8c] sm:$0xf]
    %v6965 = vld [vmem:[%s6928 + $0x90] sm:$0xf]
    %v6966 = vld [vmem:[%s6928 + $0x94] sm:$0xf]
    %v6967 = vld [vmem:[%s6928 + $0x98] sm:$0xf]
    %v6968 = vld [vmem:[%s6928 + $0x9c] sm:$0xf]
    %v6969 = vld [vmem:[%s6928 + $0xa0] sm:$0xf]
    %v6970 = vld [vmem:[%s6928 + $0xa4] sm:$0xf]
    %v6971 = vld [vmem:[%s6928 + $0xa8] sm:$0xf]
    %v6972 = vld [vmem:[%s6928 + $0xac] sm:$0xf]
    %v6973 = vld [vmem:[%s6928 + $0xb0] sm:$0xf]
    %v6974 = vld [vmem:[%s6928 + $0xb4] sm:$0xf]
    %v6975 = vld [vmem:[%s6928 + $0xb8] sm:$0xf]
    %v6976 = vld [vmem:[%s6928 + $0xbc] sm:$0xf]
    %v6977 = vld [vmem:[%s6928 + $0xc0] sm:$0xf]
    %v6978 = vld [vmem:[%s6928 + $0xc4] sm:$0xf]
    %v6979 = vld [vmem:[%s6928 + $0xc8] sm:$0xf]
    %v6980 = vld [vmem:[%s6928 + $0xcc] sm:$0xf]
    %v6981 = vld [vmem:[%s6928 + $0xd0] sm:$0xf]
    %v6982 = vld [vmem:[%s6928 + $0xd4] sm:$0xf]
    %v6983 = vld [vmem:[%s6928 + $0xd8] sm:$0xf]
    %v6984 = vld [vmem:[%s6928 + $0xdc] sm:$0xf]
    %v6985 = vld [vmem:[%s6928 + $0xe0] sm:$0xf]
    %v6986 = vld [vmem:[%s6928 + $0xe4] sm:$0xf]
    %v6987 = vld [vmem:[%s6928 + $0xe8] sm:$0xf]
    %v6988 = vld [vmem:[%s6928 + $0xec] sm:$0xf]
    %v6989 = vld [vmem:[%s6928 + $0xf0] sm:$0xf]
    %v6990 = vld [vmem:[%s6928 + $0xf4] sm:$0xf]
    %v6991 = vld [vmem:[%s6928 + $0xf8] sm:$0xf]
    %v6992 = vld [vmem:[%s6928 + $0xfc] sm:$0xf]
    %v6993 = vld [vmem:[#allocation7 + $0x21] ss:$0 sm:$0xff]
    %v6994 = vpack.c.bf16 %v6924, %v6920
    %v6995 = vpack.c.bf16 %v6925, %v6921
    %v6996 = vpack.c.bf16 %v6926, %v6922
    %v6997 = vpack.c.bf16 %v6927, %v6923
    %v7062 = vunpack.c.l.b16 %v6929
    %v7063 = vunpack.c.l.b16 %v6930
    %v7064 = vunpack.c.l.b16 %v6931
    %v7065 = vunpack.c.l.b16 %v6932
    %v7066 = vunpack.c.l.b16 %v6933
    %v7067 = vunpack.c.l.b16 %v6934
    %v7068 = vunpack.c.l.b16 %v6935
    %v7069 = vunpack.c.l.b16 %v6936
    %v7070 = vunpack.c.l.b16 %v6937
    %v7071 = vunpack.c.l.b16 %v6938
    %v7072 = vunpack.c.l.b16 %v6939
    %v7073 = vunpack.c.l.b16 %v6940
    %v7074 = vunpack.c.l.b16 %v6941
    %v7075 = vunpack.c.l.b16 %v6942
    %v7076 = vunpack.c.l.b16 %v6943
    %v7077 = vunpack.c.l.b16 %v6944
    %v7078 = vunpack.c.l.b16 %v6945
    %v7079 = vunpack.c.l.b16 %v6946
    %v7080 = vunpack.c.l.b16 %v6947
    %v7081 = vunpack.c.l.b16 %v6948
    %v7082 = vunpack.c.l.b16 %v6949
    %v7083 = vunpack.c.l.b16 %v6950
    %v7084 = vunpack.c.l.b16 %v6951
    %v7085 = vunpack.c.l.b16 %v6952
    %v7086 = vunpack.c.l.b16 %v6953
    %v7087 = vunpack.c.l.b16 %v6954
    %v7088 = vunpack.c.l.b16 %v6955
    %v7089 = vunpack.c.l.b16 %v6956
    %v7090 = vunpack.c.l.b16 %v6957
    %v7091 = vunpack.c.l.b16 %v6958
    %v7092 = vunpack.c.l.b16 %v6959
    %v7093 = vunpack.c.l.b16 %v6960
    %v7094 = vunpack.c.l.b16 %v6961
    %v7095 = vunpack.c.l.b16 %v6962
    %v7096 = vunpack.c.l.b16 %v6963
    %v7097 = vunpack.c.l.b16 %v6964
    %v7098 = vunpack.c.l.b16 %v6965
    %v7099 = vunpack.c.l.b16 %v6966
    %v7100 = vunpack.c.l.b16 %v6967
    %v7101 = vunpack.c.l.b16 %v6968
    %v7102 = vunpack.c.l.b16 %v6969
    %v7103 = vunpack.c.l.b16 %v6970
    %v7104 = vunpack.c.l.b16 %v6971
    %v7105 = vunpack.c.l.b16 %v6972
    %v7106 = vunpack.c.l.b16 %v6973
    %v7107 = vunpack.c.l.b16 %v6974
    %v7108 = vunpack.c.l.b16 %v6975
    %v7109 = vunpack.c.l.b16 %v6976
    %v7110 = vunpack.c.l.b16 %v6977
    %v7111 = vunpack.c.l.b16 %v6978
    %v7112 = vunpack.c.l.b16 %v6979
    %v7113 = vunpack.c.l.b16 %v6980
    %v7114 = vunpack.c.l.b16 %v6981
    %v7115 = vunpack.c.l.b16 %v6982
    %v7116 = vunpack.c.l.b16 %v6983
    %v7117 = vunpack.c.l.b16 %v6984
    %v7118 = vunpack.c.l.b16 %v6985
    %v7119 = vunpack.c.l.b16 %v6986
    %v7120 = vunpack.c.l.b16 %v6987
    %v7121 = vunpack.c.l.b16 %v6988
    %v7122 = vunpack.c.l.b16 %v6989
    %v7123 = vunpack.c.l.b16 %v6990
    %v7124 = vunpack.c.l.b16 %v6991
    %v7125 = vunpack.c.l.b16 %v6992
    %v7126 = vpack.c.b16 %v7063, %v7062
    %v7127 = vpack.c.b16 %v7065, %v7064
    %v7128 = vpack.c.b16 %v7067, %v7066
    %v7129 = vpack.c.b16 %v7069, %v7068
    %v7130 = vpack.c.b16 %v7071, %v7070
    %v7131 = vpack.c.b16 %v7073, %v7072
    %v7132 = vpack.c.b16 %v7075, %v7074
    %v7133 = vpack.c.b16 %v7077, %v7076
    %v7134 = vpack.c.b16 %v7079, %v7078
    %v7135 = vpack.c.b16 %v7081, %v7080
    %v7136 = vpack.c.b16 %v7083, %v7082
    %v7137 = vpack.c.b16 %v7085, %v7084
    %v7138 = vpack.c.b16 %v7087, %v7086
    %v7139 = vpack.c.b16 %v7089, %v7088
    %v7140 = vpack.c.b16 %v7091, %v7090
    %v7141 = vpack.c.b16 %v7093, %v7092
    %v7142 = vpack.c.b16 %v7095, %v7094
    %v7143 = vpack.c.b16 %v7097, %v7096
    %v7144 = vpack.c.b16 %v7099, %v7098
    %v7145 = vpack.c.b16 %v7101, %v7100
    %v7146 = vpack.c.b16 %v7103, %v7102
    %v7147 = vpack.c.b16 %v7105, %v7104
    %v7148 = vpack.c.b16 %v7107, %v7106
    %v7149 = vpack.c.b16 %v7109, %v7108
    %v7150 = vpack.c.b16 %v7111, %v7110
    %v7151 = vpack.c.b16 %v7113, %v7112
    %v7152 = vpack.c.b16 %v7115, %v7114
    %v7153 = vpack.c.b16 %v7117, %v7116
    %v7154 = vpack.c.b16 %v7119, %v7118
    %v7155 = vpack.c.b16 %v7121, %v7120
    %v7156 = vpack.c.b16 %v7123, %v7122
    %v7157 = vpack.c.b16 %v7125, %v7124
    %7190 = vmatprep.subr.bf16.mxu0 0
    %7191 = vmatpush1.bf16.msra.mxu0 %v7126
    %7192 = vmatprep.subr.bf16.mxu0 0
    %7193 = vmatpush1.bf16.msra.mxu0 %v7127
    %7194 = vmatprep.subr.bf16.mxu0 0
    %7195 = vmatpush1.bf16.msra.mxu0 %v7128
    %7196 = vmatprep.subr.bf16.mxu0 0
    %7197 = vmatpush1.bf16.msra.mxu0 %v7129
    %7198 = vmatprep.subr.bf16.mxu0 0
    %7199 = vmatpush1.bf16.msra.mxu0 %v7130
    %7200 = vmatprep.subr.bf16.mxu0 0
    %7201 = vmatpush1.bf16.msra.mxu0 %v7131
    %7202 = vmatprep.subr.bf16.mxu0 0
    %7203 = vmatpush1.bf16.msra.mxu0 %v7132
    %7204 = vmatprep.subr.bf16.mxu0 0
    %7205 = vmatpush1.bf16.msra.mxu0 %v7133
    %7206 = vmatprep.subr.bf16.mxu0 0
    %7207 = vmatpush1.bf16.msra.mxu0 %v7134
    %7208 = vmatprep.subr.bf16.mxu0 0
    %7209 = vmatpush1.bf16.msra.mxu0 %v7135
    %7210 = vmatprep.subr.bf16.mxu0 0
    %7211 = vmatpush1.bf16.msra.mxu0 %v7136
    %7212 = vmatprep.subr.bf16.mxu0 0
    %7213 = vmatpush1.bf16.msra.mxu0 %v7137
    %7214 = vmatprep.subr.bf16.mxu0 0
    %7215 = vmatpush1.bf16.msra.mxu0 %v7138
    %7216 = vmatprep.subr.bf16.mxu0 0
    %7217 = vmatpush1.bf16.msra.mxu0 %v7139
    %7218 = vmatprep.subr.bf16.mxu0 0
    %7219 = vmatpush1.bf16.msra.mxu0 %v7140
    %7220 = vmatprep.subr.bf16.mxu0 0
    %7221 = vmatpush1.bf16.msra.mxu0 %v7141
    %7222 = vmatprep.mubr.bf16.mxu0 %v6995
    %7223 = vmatmul.mubr.bf16.gmra.mrb[0].mxu0 %v6994
    %v7224 = vpop.f32.mrb[0].mxu0
    %v7225 = vadd.f32 %v6993, %v7224
    %v7226 = vpop.f32.mrb[0].mxu0
    %v7227 = vpop.f32.mrb[0].mxu0
    %v7228 = vadd.f32 %v6993, %v7227
    %v7229 = vpop.f32.mrb[0].mxu0
    %7230 = vdwg.mxu0
    %7231 = vmatprep.subr.bf16.mxu0 0
    %7232 = vmatpush1.bf16.msra.mxu0 %v7142
    %7233 = vmatprep.subr.bf16.mxu0 0
    %7234 = vmatpush1.bf16.msra.mxu0 %v7143
    %7235 = vmatprep.subr.bf16.mxu0 0
    %7236 = vmatpush1.bf16.msra.mxu0 %v7144
    %7237 = vmatprep.subr.bf16.mxu0 0
    %7238 = vmatpush1.bf16.msra.mxu0 %v7145
    %7239 = vmatprep.subr.bf16.mxu0 0
    %7240 = vmatpush1.bf16.msra.mxu0 %v7146
    %7241 = vmatprep.subr.bf16.mxu0 0
    %7242 = vmatpush1.bf16.msra.mxu0 %v7147
    %7243 = vmatprep.subr.bf16.mxu0 0
    %7244 = vmatpush1.bf16.msra.mxu0 %v7148
    %7245 = vmatprep.subr.bf16.mxu0 0
    %7246 = vmatpush1.bf16.msra.mxu0 %v7149
    %7247 = vmatprep.subr.bf16.mxu0 0
    %7248 = vmatpush1.bf16.msra.mxu0 %v7150
    %7249 = vmatprep.subr.bf16.mxu0 0
    %7250 = vmatpush1.bf16.msra.mxu0 %v7151
    %7251 = vmatprep.subr.bf16.mxu0 0
    %7252 = vmatpush1.bf16.msra.mxu0 %v7152
    %7253 = vmatprep.subr.bf16.mxu0 0
    %7254 = vmatpush1.bf16.msra.mxu0 %v7153
    %7255 = vmatprep.subr.bf16.mxu0 0
    %7256 = vmatpush1.bf16.msra.mxu0 %v7154
    %7257 = vmatprep.subr.bf16.mxu0 0
    %7258 = vmatpush1.bf16.msra.mxu0 %v7155
    %7259 = vmatprep.subr.bf16.mxu0 0
    %7260 = vmatpush1.bf16.msra.mxu0 %v7156
    %7261 = vmatprep.subr.bf16.mxu0 0
    %7262 = vmatpush1.bf16.msra.mxu0 %v7157
    %7263 = vmatprep.mubr.bf16.mxu0 %v6997
    %7264 = vmatmul.mubr.bf16.gmra.mrb[0].mxu0 %v6996
    %v7265 = vpop.f32.mrb[0].mxu0
    %v7266 = vadd.f32 %v7225, %v7265
    %v7267 = vpop.f32.mrb[0].mxu0
    %v7268 = vpop.f32.mrb[0].mxu0
    %v7269 = vadd.f32 %v7228, %v7268
    %v7270 = vpop.f32.mrb[0].mxu0
    %7271 = vdwg.mxu0
    %7272 = vst [vmem:[%s6] sm:$0xff] %v7266
    %7273 = vst [vmem:[%s6 + $0x10] sm:$0xff] %v7269
    %7274 = vst [vmem:[%s6 + $0x8] sm:$0xff] %v3659
    %7275 = vst [vmem:[%s6 + $0x18] sm:$0xff] %v3662
    // Predicated region
    $region42: #{vae_forward.1} parent=1 // pred_check
      _
    $region43: #{vae_forward.1} parent=1 // pred_check_branch
      %7277 = sbr.rel (0) target = $region45
    $region44: #{vae_forward.1} parent=1 // pred_region
      _
    $region45: #{vae_forward.1} parent=1 // pred_fallthru
      _
    // Predicated region
    $region46: #{vae_forward.1} parent=1 // pred_check
      _
    $region47: #{vae_forward.1} parent=1 // pred_check_branch
      %7279 = sbr.rel (0) target = $region49
    $region48: #{vae_forward.1} parent=1 // pred_region
      _
    $region49: #{vae_forward.1} parent=1 // pred_fallthru
      _
    %7280 = vsyncpa [#allocation3], 1
    %7281 = vsyncpa [#allocation5], 1
    %7282 = vsyncpa [#allocation8], 1

</llo_original>
